<compile_context>
chip_gen: v6e
topology: v6e:2x2x1
jax: 0.10.0
libtpu: 0.0.40
codegen_flags: <defaults>
</compile_context>

<pallas_src>
import functools

import jax
import jax.numpy as jnp
import numpy as np
from jax import lax
from jax.experimental import pallas as pl
from jax.experimental.pallas import tpu as pltpu


_NUM_ACC = 8   # independent layer-2 accumulators (review: 4-8)


def _tree_sum(xs):
    """Balanced pairwise sum (keeps the add chain log-depth)."""
    xs = list(xs)
    while len(xs) > 1:
        nxt = [xs[i] + xs[i + 1] for i in range(0, len(xs) - 1, 2)]
        if len(xs) % 2:
            nxt.append(xs[-1])
        xs = nxt
    return xs[0]


# ---------------------------------------------------------------------------
# Fused Pallas kernel: Conv(as matmul)+ReLU -> Flatten -> Linear+ReLU -> Linear
# ---------------------------------------------------------------------------
def _fused_forward_kernel(p_ref, w1_ref, b1_ref, w2r_ref, b2_ref, w3_ref,
                          b3_ref, o_ref):
    """Single-pallas_call forward.

    p_ref   : (P*N, Kd_pad) im2col patches, rows ordered (spatial p, batch n)
    w1_ref  : (Kd_pad, O1)  conv weight as matrix, zero-padded along Kd
    b1_ref  : (1, O1)
    w2r_ref : (P, O1, nF)   w2 with its flat-feature axis re-laid out as (p,o)
    b2_ref  : (1, nF)
    w3_ref  : (nF, out_dim)
    b3_ref  : (1, out_dim)
    o_ref   : (N, out_dim)
    """
    n = o_ref.shape[0]          # batch
    num_p = w2r_ref.shape[0]    # Ho*Wo spatial positions
    nf = b2_ref.shape[1]        # hidden width

    # layer 0: Conv2d as one MXU matmul (contraction dim padded to 128) + ReLU.
    # conv stays a value ((P*N, O1) = (72, 16) f32 ~ 9 vregs): no VMEM scratch,
    # no vst/vld round trip, no unaligned readbacks.
    conv = jnp.dot(p_ref[...], w1_ref[...], preferred_element_type=jnp.float32)
    conv = jnp.maximum(conv + b1_ref[...], 0.0)

    # layers 1+2: Flatten + Linear(flat, nF) + ReLU.  The flatten never
    # materializes: the (p, o) contraction is accumulated position-by-position
    # against the pre-permuted w2r blocks.  _NUM_ACC independent accumulators
    # break the serial VALU-add dependency chain; the 36 small MXU dots are
    # mutually independent and pipeline freely.
    accs = [jnp.zeros((n, nf), jnp.float32) for _ in range(_NUM_ACC)]
    for p in range(num_p):                        # static unroll, P = Ho*Wo
        cp = conv[p * n:(p + 1) * n, :]           # (N, O1) rows for position p
        accs[p % _NUM_ACC] = accs[p % _NUM_ACC] + jnp.dot(
            cp, w2r_ref[p], preferred_element_type=jnp.float32)
    h = jnp.maximum(_tree_sum(accs) + b2_ref[...], 0.0)

    # layer 3: Linear(nF, out_dim)
    o_ref[...] = jnp.dot(h, w3_ref[...],
                         preferred_element_type=jnp.float32) + b3_ref[...]


def _full_spec(shape):
    # single-program grid -> block == full array (satisfies the (8,128) rule).
    # NOTE: the index_map returns *block* indices and is only correct while
    # blocks equal full arrays; it must change if a real grid is introduced.
    return pl.BlockSpec(shape, lambda i: (0,) * len(shape))


def fused_forward(patches, w1p, b1r, w2r, b2r, w3t, b3r):
    M, Kd = patches.shape
    O1 = w1p.shape[1]
    P, _, nF = w2r.shape
    out_dim = w3t.shape[1]
    N = M // P
    return pl.pallas_call(
        _fused_forward_kernel,
        out_shape=jax.ShapeDtypeStruct((N, out_dim), jnp.float32),
        grid=(1,),
        in_specs=[
            _full_spec((M, Kd)),
            _full_spec((Kd, O1)),
            _full_spec((1, O1)),
            _full_spec((P, O1, nF)),
            _full_spec((1, nF)),
            _full_spec((nF, out_dim)),
            _full_spec((1, out_dim)),
        ],
        out_specs=_full_spec((N, out_dim)),
        compiler_params=pltpu.CompilerParams(
            dimension_semantics=("arbitrary",)),
    )(patches, w1p, b1r, w2r, b2r, w3t, b3r)


# ---------------------------------------------------------------------------
# Glue: im2col (gather + transpose + reshape + zero-pad, fuses in XLA)
# ---------------------------------------------------------------------------
def _im2col_pmajor(x, K, stride, kd_pad):
    N, C, H, W = x.shape
    Ho = (H - K) // stride + 1
    Wo = (W - K) // stride + 1
    ih = (jnp.arange(Ho) * stride)[:, None] + jnp.arange(K)[None, :]   # (Ho,K)
    iw = (jnp.arange(Wo) * stride)[:, None] + jnp.arange(K)[None, :]   # (Wo,K)
    xp = x[:, :, ih, :]              # (N, C, Ho, Kh, W)
    xp = xp[:, :, :, :, iw]          # (N, C, Ho, Kh, Wo, Kw)
    # reorder to (Ho, Wo, N, C, Kh, Kw) so the flatten gives rows = (p, n)
    xp = jnp.transpose(xp, (2, 4, 0, 1, 3, 5))
    patches = xp.reshape(Ho * Wo * N, C * K * K)
    ckk = C * K * K
    if kd_pad > ckk:
        patches = jnp.pad(patches, ((0, 0), (0, kd_pad - ckk)))
    return patches, Ho, Wo


# ---------------------------------------------------------------------------
# One-time parameter re-layout (outside the traced per-call path)
# ---------------------------------------------------------------------------
def prepare_params(params, inp_dim, stride=2, kd_pad=128):
    w1, b1, w2, b2, w3, b3 = params
    O1, C, K, _ = w1.shape
    _, H, W = inp_dim
    Ho = (H - K) // stride + 1
    Wo = (W - K) // stride + 1
    P = Ho * Wo
    ckk = C * K * K
    # conv weight -> (Kd_pad, O1) matrix, zero-padded (bit-identical results)
    w1_mat = w1.reshape(O1, ckk).T
    w1_pad = jnp.pad(w1_mat, ((0, kd_pad - ckk), (0, 0)))
    # w2: (nF, flat) with PyTorch channel-major flat order (o, ho, wo)
    #  -> (P, O1, nF) blocks so the in-kernel contraction needs no flatten.
    nF = w2.shape[0]
    w2r = (w2.reshape(nF, O1, Ho, Wo)
             .transpose(2, 3, 1, 0)
             .reshape(P, O1, nF))
    return (w1_pad, b1.reshape(1, O1), w2r, b2.reshape(1, nF),
            w3.T, b3.reshape(1, -1))


# ---------------------------------------------------------------------------
# Full forward pass of nnModel (one pallas_call per call)
# ---------------------------------------------------------------------------
@functools.partial(jax.jit, static_argnames=("conv_k", "conv_stride"))
def nn_model_forward(x, prep, conv_k=5, conv_stride=2):
    w1p, b1r, w2r, b2r, w3t, b3r = prep
    patches, _, _ = _im2col_pmajor(x, conv_k, conv_stride, w1p.shape[0])
    return fused_forward(patches, w1p, b1r, w2r, b2r, w3t, b3r)


# pure-JAX reference for validation
def reference_forward(x, params):
    w1, b1, w2, b2, w3, b3 = params
    y = lax.conv_general_dilated(
        x, w1, window_strides=(2, 2), padding="VALID",
        dimension_numbers=("NCHW", "OIHW", "NCHW"))
    y = jax.nn.relu(y + b1[None, :, None, None])
    y = y.reshape(x.shape[0], -1)
    y = jax.nn.relu(y @ w2.T + b2)
    return y @ w3.T + b3


def make_params(key, inp_dim=(4, 16, 16), nF=128, out_dim=3):
    C, H, W = inp_dim
    O1, K, stride = 16, 5, 2
    Ho = (H - K) // stride + 1
    Wo = (W - K) // stride + 1
    flat = O1 * Ho * Wo
    k1, k2, k3, k4 = jax.random.split(key, 4)
    bnd1 = 1.0 / np.sqrt(C * K * K)
    bnd2 = 1.0 / np.sqrt(flat)
    w1 = jax.random.uniform(k1, (O1, C, K, K), jnp.float32, -bnd1, bnd1)
    b1 = jax.random.uniform(k2, (O1,), jnp.float32, -bnd1, bnd1)
    w2 = jax.random.uniform(k3, (nF, flat), jnp.float32, -bnd2, bnd2)
    b2 = jax.random.uniform(k4, (nF,), jnp.float32, -bnd2, bnd2)
    # last layer zero-initialized, per nnModel.__init__
    w3 = jnp.zeros((out_dim, nF), jnp.float32)
    b3 = jnp.zeros((out_dim,), jnp.float32)
    return (w1, b1, w2, b2, w3, b3)


if __name__ == "__main__":
    key = jax.random.PRNGKey(0)
    kp, kx, kw3, kb3 = jax.random.split(key, 4)

    inp_dim = (4, 16, 16)          # (C, H, W)
    batch = 2
    params = make_params(kp, inp_dim=inp_dim, nF=128, out_dim=3)
    prep = prepare_params(params, inp_dim)          # one-time weight re-layout
    x = jax.random.normal(kx, (batch,) + inp_dim, jnp.float32)

    # real module: zero-init head -> output is all zeros
    out = jax.block_until_ready(nn_model_forward(x, prep))
    ref = reference_forward(x, params)
    np.testing.assert_allclose(np.asarray(out), np.asarray(ref),
                               atol=1e-5, rtol=1e-5)

    # meaningful numeric check of the full pipeline: non-zero head weights
    w1, b1, w2, b2, _, _ = params
    w3r = jax.random.normal(kw3, (3, 128), jnp.float32) * 0.05
    b3r = jax.random.normal(kb3, (3,), jnp.float32) * 0.05
    params_r = (w1, b1, w2, b2, w3r, b3r)
    prep_r = prepare_params(params_r, inp_dim)
    out_r = jax.block_until_ready(nn_model_forward(x, prep_r))
    ref_r = reference_forward(x, params_r)
    np.testing.assert_allclose(np.asarray(out_r), np.asarray(ref_r),
                               atol=2e-4, rtol=2e-4)

    print("KERNEL_OK")
</pallas_src>

<mosaic_0001>
module attributes {stable_mosaic.version = 11 : i64} {
  func.func @_fused_forward_kernel(%arg0: i32, %arg1: memref<72x128xf32, #tpu.memory_space<vmem>>, %arg2: memref<128x16xf32, #tpu.memory_space<vmem>>, %arg3: memref<1x16xf32, #tpu.memory_space<vmem>>, %arg4: memref<36x16x128xf32, #tpu.memory_space<vmem>>, %arg5: memref<1x128xf32, #tpu.memory_space<vmem>>, %arg6: memref<128x3xf32, #tpu.memory_space<vmem>>, %arg7: memref<1x3xf32, #tpu.memory_space<vmem>>, %arg8: memref<2x3xf32, #tpu.memory_space<vmem>>) attributes {dimension_semantics = [#tpu.dimension_semantics<arbitrary>], iteration_bounds = array<i64: 1>, scalar_prefetch = 0 : i64, scratch_operands = 0 : i64, tpu.core_type = #tpu.core_type<tc>, window_params = [{pipeline_mode = #tpu.pipeline_mode<synchronous>, transform_indices = @transform_0, window_bounds = array<i64: 72, 128>}, {pipeline_mode = #tpu.pipeline_mode<synchronous>, transform_indices = @transform_1, window_bounds = array<i64: 128, 16>}, {pipeline_mode = #tpu.pipeline_mode<synchronous>, transform_indices = @transform_2, window_bounds = array<i64: 1, 16>}, {pipeline_mode = #tpu.pipeline_mode<synchronous>, transform_indices = @transform_3, window_bounds = array<i64: 36, 16, 128>}, {pipeline_mode = #tpu.pipeline_mode<synchronous>, transform_indices = @transform_4, window_bounds = array<i64: 1, 128>}, {pipeline_mode = #tpu.pipeline_mode<synchronous>, transform_indices = @transform_5, window_bounds = array<i64: 128, 3>}, {pipeline_mode = #tpu.pipeline_mode<synchronous>, transform_indices = @transform_6, window_bounds = array<i64: 1, 3>}, {pipeline_mode = #tpu.pipeline_mode<synchronous>, transform_indices = @transform_7, window_bounds = array<i64: 2, 3>}]} {
    %c0 = arith.constant 0 : index
    %c0_0 = arith.constant 0 : index
    %0 = vector.load %arg1[%c0, %c0_0] : memref<72x128xf32, #tpu.memory_space<vmem>>, vector<72x128xf32>
    %c0_1 = arith.constant 0 : index
    %c0_2 = arith.constant 0 : index
    %1 = vector.load %arg2[%c0_1, %c0_2] : memref<128x16xf32, #tpu.memory_space<vmem>>, vector<128x16xf32>
    %cst = arith.constant dense<0.000000e+00> : vector<72x16xf32>
    %2 = tpu.matmul %0, %1, %cst {dimension_numbers = #tpu.dot_dimension_numbers<[1], [0], [0], [1], [0, 0, 1, 1], [], []>} : vector<72x128xf32>, vector<128x16xf32>, vector<72x16xf32> -> vector<72x16xf32>
    %c0_3 = arith.constant 0 : index
    %c0_4 = arith.constant 0 : index
    %3 = vector.load %arg3[%c0_3, %c0_4] : memref<1x16xf32, #tpu.memory_space<vmem>>, vector<1x16xf32>
    %4 = vector.broadcast %3 : vector<1x16xf32> to vector<72x16xf32>
    %5 = arith.addf %2, %4 : vector<72x16xf32>
    %cst_5 = arith.constant 0.000000e+00 : f32
    %6 = vector.broadcast %cst_5 : f32 to vector<72x16xf32>
    %7 = arith.maximumf %5, %6 : vector<72x16xf32>
    %cst_6 = arith.constant 0.000000e+00 : f32
    %8 = vector.broadcast %cst_6 : f32 to vector<2x128xf32>
    %cst_7 = arith.constant 0.000000e+00 : f32
    %9 = vector.broadcast %cst_7 : f32 to vector<2x128xf32>
    %cst_8 = arith.constant 0.000000e+00 : f32
    %10 = vector.broadcast %cst_8 : f32 to vector<2x128xf32>
    %cst_9 = arith.constant 0.000000e+00 : f32
    %11 = vector.broadcast %cst_9 : f32 to vector<2x128xf32>
    %cst_10 = arith.constant 0.000000e+00 : f32
    %12 = vector.broadcast %cst_10 : f32 to vector<2x128xf32>
    %cst_11 = arith.constant 0.000000e+00 : f32
    %13 = vector.broadcast %cst_11 : f32 to vector<2x128xf32>
    %cst_12 = arith.constant 0.000000e+00 : f32
    %14 = vector.broadcast %cst_12 : f32 to vector<2x128xf32>
    %cst_13 = arith.constant 0.000000e+00 : f32
    %15 = vector.broadcast %cst_13 : f32 to vector<2x128xf32>
    %16 = vector.extract_strided_slice %7 {offsets = [0, 0], sizes = [2, 16], strides = [1, 1]} : vector<72x16xf32> to vector<2x16xf32>
    %c0_14 = arith.constant 0 : index
    %c0_15 = arith.constant 0 : index
    %c0_16 = arith.constant 0 : index
    %17 = vector.load %arg4[%c0_14, %c0_15, %c0_16] : memref<36x16x128xf32, #tpu.memory_space<vmem>>, vector<1x16x128xf32>
    %18 = vector.shape_cast %17 : vector<1x16x128xf32> to vector<16x128xf32>
    %cst_17 = arith.constant dense<0.000000e+00> : vector<2x128xf32>
    %19 = tpu.matmul %16, %18, %cst_17 {dimension_numbers = #tpu.dot_dimension_numbers<[1], [0], [0], [1], [0, 0, 1, 1], [], []>} : vector<2x16xf32>, vector<16x128xf32>, vector<2x128xf32> -> vector<2x128xf32>
    %20 = arith.addf %8, %19 : vector<2x128xf32>
    %21 = vector.extract_strided_slice %7 {offsets = [2, 0], sizes = [2, 16], strides = [1, 1]} : vector<72x16xf32> to vector<2x16xf32>
    %c1 = arith.constant 1 : index
    %c0_18 = arith.constant 0 : index
    %c0_19 = arith.constant 0 : index
    %22 = vector.load %arg4[%c1, %c0_18, %c0_19] : memref<36x16x128xf32, #tpu.memory_space<vmem>>, vector<1x16x128xf32>
    %23 = vector.shape_cast %22 : vector<1x16x128xf32> to vector<16x128xf32>
    %cst_20 = arith.constant dense<0.000000e+00> : vector<2x128xf32>
    %24 = tpu.matmul %21, %23, %cst_20 {dimension_numbers = #tpu.dot_dimension_numbers<[1], [0], [0], [1], [0, 0, 1, 1], [], []>} : vector<2x16xf32>, vector<16x128xf32>, vector<2x128xf32> -> vector<2x128xf32>
    %25 = arith.addf %9, %24 : vector<2x128xf32>
    %26 = vector.extract_strided_slice %7 {offsets = [4, 0], sizes = [2, 16], strides = [1, 1]} : vector<72x16xf32> to vector<2x16xf32>
    %c2 = arith.constant 2 : index
    %c0_21 = arith.constant 0 : index
    %c0_22 = arith.constant 0 : index
    %27 = vector.load %arg4[%c2, %c0_21, %c0_22] : memref<36x16x128xf32, #tpu.memory_space<vmem>>, vector<1x16x128xf32>
    %28 = vector.shape_cast %27 : vector<1x16x128xf32> to vector<16x128xf32>
    %cst_23 = arith.constant dense<0.000000e+00> : vector<2x128xf32>
    %29 = tpu.matmul %26, %28, %cst_23 {dimension_numbers = #tpu.dot_dimension_numbers<[1], [0], [0], [1], [0, 0, 1, 1], [], []>} : vector<2x16xf32>, vector<16x128xf32>, vector<2x128xf32> -> vector<2x128xf32>
    %30 = arith.addf %10, %29 : vector<2x128xf32>
    %31 = vector.extract_strided_slice %7 {offsets = [6, 0], sizes = [2, 16], strides = [1, 1]} : vector<72x16xf32> to vector<2x16xf32>
    %c3 = arith.constant 3 : index
    %c0_24 = arith.constant 0 : index
    %c0_25 = arith.constant 0 : index
    %32 = vector.load %arg4[%c3, %c0_24, %c0_25] : memref<36x16x128xf32, #tpu.memory_space<vmem>>, vector<1x16x128xf32>
    %33 = vector.shape_cast %32 : vector<1x16x128xf32> to vector<16x128xf32>
    %cst_26 = arith.constant dense<0.000000e+00> : vector<2x128xf32>
    %34 = tpu.matmul %31, %33, %cst_26 {dimension_numbers = #tpu.dot_dimension_numbers<[1], [0], [0], [1], [0, 0, 1, 1], [], []>} : vector<2x16xf32>, vector<16x128xf32>, vector<2x128xf32> -> vector<2x128xf32>
    %35 = arith.addf %11, %34 : vector<2x128xf32>
    %36 = vector.extract_strided_slice %7 {offsets = [8, 0], sizes = [2, 16], strides = [1, 1]} : vector<72x16xf32> to vector<2x16xf32>
    %c4 = arith.constant 4 : index
    %c0_27 = arith.constant 0 : index
    %c0_28 = arith.constant 0 : index
    %37 = vector.load %arg4[%c4, %c0_27, %c0_28] : memref<36x16x128xf32, #tpu.memory_space<vmem>>, vector<1x16x128xf32>
    %38 = vector.shape_cast %37 : vector<1x16x128xf32> to vector<16x128xf32>
    %cst_29 = arith.constant dense<0.000000e+00> : vector<2x128xf32>
    %39 = tpu.matmul %36, %38, %cst_29 {dimension_numbers = #tpu.dot_dimension_numbers<[1], [0], [0], [1], [0, 0, 1, 1], [], []>} : vector<2x16xf32>, vector<16x128xf32>, vector<2x128xf32> -> vector<2x128xf32>
    %40 = arith.addf %12, %39 : vector<2x128xf32>
    %41 = vector.extract_strided_slice %7 {offsets = [10, 0], sizes = [2, 16], strides = [1, 1]} : vector<72x16xf32> to vector<2x16xf32>
    %c5 = arith.constant 5 : index
    %c0_30 = arith.constant 0 : index
    %c0_31 = arith.constant 0 : index
    %42 = vector.load %arg4[%c5, %c0_30, %c0_31] : memref<36x16x128xf32, #tpu.memory_space<vmem>>, vector<1x16x128xf32>
    %43 = vector.shape_cast %42 : vector<1x16x128xf32> to vector<16x128xf32>
    %cst_32 = arith.constant dense<0.000000e+00> : vector<2x128xf32>
    %44 = tpu.matmul %41, %43, %cst_32 {dimension_numbers = #tpu.dot_dimension_numbers<[1], [0], [0], [1], [0, 0, 1, 1], [], []>} : vector<2x16xf32>, vector<16x128xf32>, vector<2x128xf32> -> vector<2x128xf32>
    %45 = arith.addf %13, %44 : vector<2x128xf32>
    %46 = vector.extract_strided_slice %7 {offsets = [12, 0], sizes = [2, 16], strides = [1, 1]} : vector<72x16xf32> to vector<2x16xf32>
    %c6 = arith.constant 6 : index
    %c0_33 = arith.constant 0 : index
    %c0_34 = arith.constant 0 : index
    %47 = vector.load %arg4[%c6, %c0_33, %c0_34] : memref<36x16x128xf32, #tpu.memory_space<vmem>>, vector<1x16x128xf32>
    %48 = vector.shape_cast %47 : vector<1x16x128xf32> to vector<16x128xf32>
    %cst_35 = arith.constant dense<0.000000e+00> : vector<2x128xf32>
    %49 = tpu.matmul %46, %48, %cst_35 {dimension_numbers = #tpu.dot_dimension_numbers<[1], [0], [0], [1], [0, 0, 1, 1], [], []>} : vector<2x16xf32>, vector<16x128xf32>, vector<2x128xf32> -> vector<2x128xf32>
    %50 = arith.addf %14, %49 : vector<2x128xf32>
    %51 = vector.extract_strided_slice %7 {offsets = [14, 0], sizes = [2, 16], strides = [1, 1]} : vector<72x16xf32> to vector<2x16xf32>
    %c7 = arith.constant 7 : index
    %c0_36 = arith.constant 0 : index
    %c0_37 = arith.constant 0 : index
    %52 = vector.load %arg4[%c7, %c0_36, %c0_37] : memref<36x16x128xf32, #tpu.memory_space<vmem>>, vector<1x16x128xf32>
    %53 = vector.shape_cast %52 : vector<1x16x128xf32> to vector<16x128xf32>
    %cst_38 = arith.constant dense<0.000000e+00> : vector<2x128xf32>
    %54 = tpu.matmul %51, %53, %cst_38 {dimension_numbers = #tpu.dot_dimension_numbers<[1], [0], [0], [1], [0, 0, 1, 1], [], []>} : vector<2x16xf32>, vector<16x128xf32>, vector<2x128xf32> -> vector<2x128xf32>
    %55 = arith.addf %15, %54 : vector<2x128xf32>
    %56 = vector.extract_strided_slice %7 {offsets = [16, 0], sizes = [2, 16], strides = [1, 1]} : vector<72x16xf32> to vector<2x16xf32>
    %c8 = arith.constant 8 : index
    %c0_39 = arith.constant 0 : index
    %c0_40 = arith.constant 0 : index
    %57 = vector.load %arg4[%c8, %c0_39, %c0_40] : memref<36x16x128xf32, #tpu.memory_space<vmem>>, vector<1x16x128xf32>
    %58 = vector.shape_cast %57 : vector<1x16x128xf32> to vector<16x128xf32>
    %cst_41 = arith.constant dense<0.000000e+00> : vector<2x128xf32>
    %59 = tpu.matmul %56, %58, %cst_41 {dimension_numbers = #tpu.dot_dimension_numbers<[1], [0], [0], [1], [0, 0, 1, 1], [], []>} : vector<2x16xf32>, vector<16x128xf32>, vector<2x128xf32> -> vector<2x128xf32>
    %60 = arith.addf %20, %59 : vector<2x128xf32>
    %61 = vector.extract_strided_slice %7 {offsets = [18, 0], sizes = [2, 16], strides = [1, 1]} : vector<72x16xf32> to vector<2x16xf32>
    %c9 = arith.constant 9 : index
    %c0_42 = arith.constant 0 : index
    %c0_43 = arith.constant 0 : index
    %62 = vector.load %arg4[%c9, %c0_42, %c0_43] : memref<36x16x128xf32, #tpu.memory_space<vmem>>, vector<1x16x128xf32>
    %63 = vector.shape_cast %62 : vector<1x16x128xf32> to vector<16x128xf32>
    %cst_44 = arith.constant dense<0.000000e+00> : vector<2x128xf32>
    %64 = tpu.matmul %61, %63, %cst_44 {dimension_numbers = #tpu.dot_dimension_numbers<[1], [0], [0], [1], [0, 0, 1, 1], [], []>} : vector<2x16xf32>, vector<16x128xf32>, vector<2x128xf32> -> vector<2x128xf32>
    %65 = arith.addf %25, %64 : vector<2x128xf32>
    %66 = vector.extract_strided_slice %7 {offsets = [20, 0], sizes = [2, 16], strides = [1, 1]} : vector<72x16xf32> to vector<2x16xf32>
    %c10 = arith.constant 10 : index
    %c0_45 = arith.constant 0 : index
    %c0_46 = arith.constant 0 : index
    %67 = vector.load %arg4[%c10, %c0_45, %c0_46] : memref<36x16x128xf32, #tpu.memory_space<vmem>>, vector<1x16x128xf32>
    %68 = vector.shape_cast %67 : vector<1x16x128xf32> to vector<16x128xf32>
    %cst_47 = arith.constant dense<0.000000e+00> : vector<2x128xf32>
    %69 = tpu.matmul %66, %68, %cst_47 {dimension_numbers = #tpu.dot_dimension_numbers<[1], [0], [0], [1], [0, 0, 1, 1], [], []>} : vector<2x16xf32>, vector<16x128xf32>, vector<2x128xf32> -> vector<2x128xf32>
    %70 = arith.addf %30, %69 : vector<2x128xf32>
    %71 = vector.extract_strided_slice %7 {offsets = [22, 0], sizes = [2, 16], strides = [1, 1]} : vector<72x16xf32> to vector<2x16xf32>
    %c11 = arith.constant 11 : index
    %c0_48 = arith.constant 0 : index
    %c0_49 = arith.constant 0 : index
    %72 = vector.load %arg4[%c11, %c0_48, %c0_49] : memref<36x16x128xf32, #tpu.memory_space<vmem>>, vector<1x16x128xf32>
    %73 = vector.shape_cast %72 : vector<1x16x128xf32> to vector<16x128xf32>
    %cst_50 = arith.constant dense<0.000000e+00> : vector<2x128xf32>
    %74 = tpu.matmul %71, %73, %cst_50 {dimension_numbers = #tpu.dot_dimension_numbers<[1], [0], [0], [1], [0, 0, 1, 1], [], []>} : vector<2x16xf32>, vector<16x128xf32>, vector<2x128xf32> -> vector<2x128xf32>
    %75 = arith.addf %35, %74 : vector<2x128xf32>
    %76 = vector.extract_strided_slice %7 {offsets = [24, 0], sizes = [2, 16], strides = [1, 1]} : vector<72x16xf32> to vector<2x16xf32>
    %c12 = arith.constant 12 : index
    %c0_51 = arith.constant 0 : index
    %c0_52 = arith.constant 0 : index
    %77 = vector.load %arg4[%c12, %c0_51, %c0_52] : memref<36x16x128xf32, #tpu.memory_space<vmem>>, vector<1x16x128xf32>
    %78 = vector.shape_cast %77 : vector<1x16x128xf32> to vector<16x128xf32>
    %cst_53 = arith.constant dense<0.000000e+00> : vector<2x128xf32>
    %79 = tpu.matmul %76, %78, %cst_53 {dimension_numbers = #tpu.dot_dimension_numbers<[1], [0], [0], [1], [0, 0, 1, 1], [], []>} : vector<2x16xf32>, vector<16x128xf32>, vector<2x128xf32> -> vector<2x128xf32>
    %80 = arith.addf %40, %79 : vector<2x128xf32>
    %81 = vector.extract_strided_slice %7 {offsets = [26, 0], sizes = [2, 16], strides = [1, 1]} : vector<72x16xf32> to vector<2x16xf32>
    %c13 = arith.constant 13 : index
    %c0_54 = arith.constant 0 : index
    %c0_55 = arith.constant 0 : index
    %82 = vector.load %arg4[%c13, %c0_54, %c0_55] : memref<36x16x128xf32, #tpu.memory_space<vmem>>, vector<1x16x128xf32>
    %83 = vector.shape_cast %82 : vector<1x16x128xf32> to vector<16x128xf32>
    %cst_56 = arith.constant dense<0.000000e+00> : vector<2x128xf32>
    %84 = tpu.matmul %81, %83, %cst_56 {dimension_numbers = #tpu.dot_dimension_numbers<[1], [0], [0], [1], [0, 0, 1, 1], [], []>} : vector<2x16xf32>, vector<16x128xf32>, vector<2x128xf32> -> vector<2x128xf32>
    %85 = arith.addf %45, %84 : vector<2x128xf32>
    %86 = vector.extract_strided_slice %7 {offsets = [28, 0], sizes = [2, 16], strides = [1, 1]} : vector<72x16xf32> to vector<2x16xf32>
    %c14 = arith.constant 14 : index
    %c0_57 = arith.constant 0 : index
    %c0_58 = arith.constant 0 : index
    %87 = vector.load %arg4[%c14, %c0_57, %c0_58] : memref<36x16x128xf32, #tpu.memory_space<vmem>>, vector<1x16x128xf32>
    %88 = vector.shape_cast %87 : vector<1x16x128xf32> to vector<16x128xf32>
    %cst_59 = arith.constant dense<0.000000e+00> : vector<2x128xf32>
    %89 = tpu.matmul %86, %88, %cst_59 {dimension_numbers = #tpu.dot_dimension_numbers<[1], [0], [0], [1], [0, 0, 1, 1], [], []>} : vector<2x16xf32>, vector<16x128xf32>, vector<2x128xf32> -> vector<2x128xf32>
    %90 = arith.addf %50, %89 : vector<2x128xf32>
    %91 = vector.extract_strided_slice %7 {offsets = [30, 0], sizes = [2, 16], strides = [1, 1]} : vector<72x16xf32> to vector<2x16xf32>
    %c15 = arith.constant 15 : index
    %c0_60 = arith.constant 0 : index
    %c0_61 = arith.constant 0 : index
    %92 = vector.load %arg4[%c15, %c0_60, %c0_61] : memref<36x16x128xf32, #tpu.memory_space<vmem>>, vector<1x16x128xf32>
    %93 = vector.shape_cast %92 : vector<1x16x128xf32> to vector<16x128xf32>
    %cst_62 = arith.constant dense<0.000000e+00> : vector<2x128xf32>
    %94 = tpu.matmul %91, %93, %cst_62 {dimension_numbers = #tpu.dot_dimension_numbers<[1], [0], [0], [1], [0, 0, 1, 1], [], []>} : vector<2x16xf32>, vector<16x128xf32>, vector<2x128xf32> -> vector<2x128xf32>
    %95 = arith.addf %55, %94 : vector<2x128xf32>
    %96 = vector.extract_strided_slice %7 {offsets = [32, 0], sizes = [2, 16], strides = [1, 1]} : vector<72x16xf32> to vector<2x16xf32>
    %c16 = arith.constant 16 : index
    %c0_63 = arith.constant 0 : index
    %c0_64 = arith.constant 0 : index
    %97 = vector.load %arg4[%c16, %c0_63, %c0_64] : memref<36x16x128xf32, #tpu.memory_space<vmem>>, vector<1x16x128xf32>
    %98 = vector.shape_cast %97 : vector<1x16x128xf32> to vector<16x128xf32>
    %cst_65 = arith.constant dense<0.000000e+00> : vector<2x128xf32>
    %99 = tpu.matmul %96, %98, %cst_65 {dimension_numbers = #tpu.dot_dimension_numbers<[1], [0], [0], [1], [0, 0, 1, 1], [], []>} : vector<2x16xf32>, vector<16x128xf32>, vector<2x128xf32> -> vector<2x128xf32>
    %100 = arith.addf %60, %99 : vector<2x128xf32>
    %101 = vector.extract_strided_slice %7 {offsets = [34, 0], sizes = [2, 16], strides = [1, 1]} : vector<72x16xf32> to vector<2x16xf32>
    %c17 = arith.constant 17 : index
    %c0_66 = arith.constant 0 : index
    %c0_67 = arith.constant 0 : index
    %102 = vector.load %arg4[%c17, %c0_66, %c0_67] : memref<36x16x128xf32, #tpu.memory_space<vmem>>, vector<1x16x128xf32>
    %103 = vector.shape_cast %102 : vector<1x16x128xf32> to vector<16x128xf32>
    %cst_68 = arith.constant dense<0.000000e+00> : vector<2x128xf32>
    %104 = tpu.matmul %101, %103, %cst_68 {dimension_numbers = #tpu.dot_dimension_numbers<[1], [0], [0], [1], [0, 0, 1, 1], [], []>} : vector<2x16xf32>, vector<16x128xf32>, vector<2x128xf32> -> vector<2x128xf32>
    %105 = arith.addf %65, %104 : vector<2x128xf32>
    %106 = vector.extract_strided_slice %7 {offsets = [36, 0], sizes = [2, 16], strides = [1, 1]} : vector<72x16xf32> to vector<2x16xf32>
    %c18 = arith.constant 18 : index
    %c0_69 = arith.constant 0 : index
    %c0_70 = arith.constant 0 : index
    %107 = vector.load %arg4[%c18, %c0_69, %c0_70] : memref<36x16x128xf32, #tpu.memory_space<vmem>>, vector<1x16x128xf32>
    %108 = vector.shape_cast %107 : vector<1x16x128xf32> to vector<16x128xf32>
    %cst_71 = arith.constant dense<0.000000e+00> : vector<2x128xf32>
    %109 = tpu.matmul %106, %108, %cst_71 {dimension_numbers = #tpu.dot_dimension_numbers<[1], [0], [0], [1], [0, 0, 1, 1], [], []>} : vector<2x16xf32>, vector<16x128xf32>, vector<2x128xf32> -> vector<2x128xf32>
    %110 = arith.addf %70, %109 : vector<2x128xf32>
    %111 = vector.extract_strided_slice %7 {offsets = [38, 0], sizes = [2, 16], strides = [1, 1]} : vector<72x16xf32> to vector<2x16xf32>
    %c19 = arith.constant 19 : index
    %c0_72 = arith.constant 0 : index
    %c0_73 = arith.constant 0 : index
    %112 = vector.load %arg4[%c19, %c0_72, %c0_73] : memref<36x16x128xf32, #tpu.memory_space<vmem>>, vector<1x16x128xf32>
    %113 = vector.shape_cast %112 : vector<1x16x128xf32> to vector<16x128xf32>
    %cst_74 = arith.constant dense<0.000000e+00> : vector<2x128xf32>
    %114 = tpu.matmul %111, %113, %cst_74 {dimension_numbers = #tpu.dot_dimension_numbers<[1], [0], [0], [1], [0, 0, 1, 1], [], []>} : vector<2x16xf32>, vector<16x128xf32>, vector<2x128xf32> -> vector<2x128xf32>
    %115 = arith.addf %75, %114 : vector<2x128xf32>
    %116 = vector.extract_strided_slice %7 {offsets = [40, 0], sizes = [2, 16], strides = [1, 1]} : vector<72x16xf32> to vector<2x16xf32>
    %c20 = arith.constant 20 : index
    %c0_75 = arith.constant 0 : index
    %c0_76 = arith.constant 0 : index
    %117 = vector.load %arg4[%c20, %c0_75, %c0_76] : memref<36x16x128xf32, #tpu.memory_space<vmem>>, vector<1x16x128xf32>
    %118 = vector.shape_cast %117 : vector<1x16x128xf32> to vector<16x128xf32>
    %cst_77 = arith.constant dense<0.000000e+00> : vector<2x128xf32>
    %119 = tpu.matmul %116, %118, %cst_77 {dimension_numbers = #tpu.dot_dimension_numbers<[1], [0], [0], [1], [0, 0, 1, 1], [], []>} : vector<2x16xf32>, vector<16x128xf32>, vector<2x128xf32> -> vector<2x128xf32>
    %120 = arith.addf %80, %119 : vector<2x128xf32>
    %121 = vector.extract_strided_slice %7 {offsets = [42, 0], sizes = [2, 16], strides = [1, 1]} : vector<72x16xf32> to vector<2x16xf32>
    %c21 = arith.constant 21 : index
    %c0_78 = arith.constant 0 : index
    %c0_79 = arith.constant 0 : index
    %122 = vector.load %arg4[%c21, %c0_78, %c0_79] : memref<36x16x128xf32, #tpu.memory_space<vmem>>, vector<1x16x128xf32>
    %123 = vector.shape_cast %122 : vector<1x16x128xf32> to vector<16x128xf32>
    %cst_80 = arith.constant dense<0.000000e+00> : vector<2x128xf32>
    %124 = tpu.matmul %121, %123, %cst_80 {dimension_numbers = #tpu.dot_dimension_numbers<[1], [0], [0], [1], [0, 0, 1, 1], [], []>} : vector<2x16xf32>, vector<16x128xf32>, vector<2x128xf32> -> vector<2x128xf32>
    %125 = arith.addf %85, %124 : vector<2x128xf32>
    %126 = vector.extract_strided_slice %7 {offsets = [44, 0], sizes = [2, 16], strides = [1, 1]} : vector<72x16xf32> to vector<2x16xf32>
    %c22 = arith.constant 22 : index
    %c0_81 = arith.constant 0 : index
    %c0_82 = arith.constant 0 : index
    %127 = vector.load %arg4[%c22, %c0_81, %c0_82] : memref<36x16x128xf32, #tpu.memory_space<vmem>>, vector<1x16x128xf32>
    %128 = vector.shape_cast %127 : vector<1x16x128xf32> to vector<16x128xf32>
    %cst_83 = arith.constant dense<0.000000e+00> : vector<2x128xf32>
    %129 = tpu.matmul %126, %128, %cst_83 {dimension_numbers = #tpu.dot_dimension_numbers<[1], [0], [0], [1], [0, 0, 1, 1], [], []>} : vector<2x16xf32>, vector<16x128xf32>, vector<2x128xf32> -> vector<2x128xf32>
    %130 = arith.addf %90, %129 : vector<2x128xf32>
    %131 = vector.extract_strided_slice %7 {offsets = [46, 0], sizes = [2, 16], strides = [1, 1]} : vector<72x16xf32> to vector<2x16xf32>
    %c23 = arith.constant 23 : index
    %c0_84 = arith.constant 0 : index
    %c0_85 = arith.constant 0 : index
    %132 = vector.load %arg4[%c23, %c0_84, %c0_85] : memref<36x16x128xf32, #tpu.memory_space<vmem>>, vector<1x16x128xf32>
    %133 = vector.shape_cast %132 : vector<1x16x128xf32> to vector<16x128xf32>
    %cst_86 = arith.constant dense<0.000000e+00> : vector<2x128xf32>
    %134 = tpu.matmul %131, %133, %cst_86 {dimension_numbers = #tpu.dot_dimension_numbers<[1], [0], [0], [1], [0, 0, 1, 1], [], []>} : vector<2x16xf32>, vector<16x128xf32>, vector<2x128xf32> -> vector<2x128xf32>
    %135 = arith.addf %95, %134 : vector<2x128xf32>
    %136 = vector.extract_strided_slice %7 {offsets = [48, 0], sizes = [2, 16], strides = [1, 1]} : vector<72x16xf32> to vector<2x16xf32>
    %c24 = arith.constant 24 : index
    %c0_87 = arith.constant 0 : index
    %c0_88 = arith.constant 0 : index
    %137 = vector.load %arg4[%c24, %c0_87, %c0_88] : memref<36x16x128xf32, #tpu.memory_space<vmem>>, vector<1x16x128xf32>
    %138 = vector.shape_cast %137 : vector<1x16x128xf32> to vector<16x128xf32>
    %cst_89 = arith.constant dense<0.000000e+00> : vector<2x128xf32>
    %139 = tpu.matmul %136, %138, %cst_89 {dimension_numbers = #tpu.dot_dimension_numbers<[1], [0], [0], [1], [0, 0, 1, 1], [], []>} : vector<2x16xf32>, vector<16x128xf32>, vector<2x128xf32> -> vector<2x128xf32>
    %140 = arith.addf %100, %139 : vector<2x128xf32>
    %141 = vector.extract_strided_slice %7 {offsets = [50, 0], sizes = [2, 16], strides = [1, 1]} : vector<72x16xf32> to vector<2x16xf32>
    %c25 = arith.constant 25 : index
    %c0_90 = arith.constant 0 : index
    %c0_91 = arith.constant 0 : index
    %142 = vector.load %arg4[%c25, %c0_90, %c0_91] : memref<36x16x128xf32, #tpu.memory_space<vmem>>, vector<1x16x128xf32>
    %143 = vector.shape_cast %142 : vector<1x16x128xf32> to vector<16x128xf32>
    %cst_92 = arith.constant dense<0.000000e+00> : vector<2x128xf32>
    %144 = tpu.matmul %141, %143, %cst_92 {dimension_numbers = #tpu.dot_dimension_numbers<[1], [0], [0], [1], [0, 0, 1, 1], [], []>} : vector<2x16xf32>, vector<16x128xf32>, vector<2x128xf32> -> vector<2x128xf32>
    %145 = arith.addf %105, %144 : vector<2x128xf32>
    %146 = vector.extract_strided_slice %7 {offsets = [52, 0], sizes = [2, 16], strides = [1, 1]} : vector<72x16xf32> to vector<2x16xf32>
    %c26 = arith.constant 26 : index
    %c0_93 = arith.constant 0 : index
    %c0_94 = arith.constant 0 : index
    %147 = vector.load %arg4[%c26, %c0_93, %c0_94] : memref<36x16x128xf32, #tpu.memory_space<vmem>>, vector<1x16x128xf32>
    %148 = vector.shape_cast %147 : vector<1x16x128xf32> to vector<16x128xf32>
    %cst_95 = arith.constant dense<0.000000e+00> : vector<2x128xf32>
    %149 = tpu.matmul %146, %148, %cst_95 {dimension_numbers = #tpu.dot_dimension_numbers<[1], [0], [0], [1], [0, 0, 1, 1], [], []>} : vector<2x16xf32>, vector<16x128xf32>, vector<2x128xf32> -> vector<2x128xf32>
    %150 = arith.addf %110, %149 : vector<2x128xf32>
    %151 = vector.extract_strided_slice %7 {offsets = [54, 0], sizes = [2, 16], strides = [1, 1]} : vector<72x16xf32> to vector<2x16xf32>
    %c27 = arith.constant 27 : index
    %c0_96 = arith.constant 0 : index
    %c0_97 = arith.constant 0 : index
    %152 = vector.load %arg4[%c27, %c0_96, %c0_97] : memref<36x16x128xf32, #tpu.memory_space<vmem>>, vector<1x16x128xf32>
    %153 = vector.shape_cast %152 : vector<1x16x128xf32> to vector<16x128xf32>
    %cst_98 = arith.constant dense<0.000000e+00> : vector<2x128xf32>
    %154 = tpu.matmul %151, %153, %cst_98 {dimension_numbers = #tpu.dot_dimension_numbers<[1], [0], [0], [1], [0, 0, 1, 1], [], []>} : vector<2x16xf32>, vector<16x128xf32>, vector<2x128xf32> -> vector<2x128xf32>
    %155 = arith.addf %115, %154 : vector<2x128xf32>
    %156 = vector.extract_strided_slice %7 {offsets = [56, 0], sizes = [2, 16], strides = [1, 1]} : vector<72x16xf32> to vector<2x16xf32>
    %c28 = arith.constant 28 : index
    %c0_99 = arith.constant 0 : index
    %c0_100 = arith.constant 0 : index
    %157 = vector.load %arg4[%c28, %c0_99, %c0_100] : memref<36x16x128xf32, #tpu.memory_space<vmem>>, vector<1x16x128xf32>
    %158 = vector.shape_cast %157 : vector<1x16x128xf32> to vector<16x128xf32>
    %cst_101 = arith.constant dense<0.000000e+00> : vector<2x128xf32>
    %159 = tpu.matmul %156, %158, %cst_101 {dimension_numbers = #tpu.dot_dimension_numbers<[1], [0], [0], [1], [0, 0, 1, 1], [], []>} : vector<2x16xf32>, vector<16x128xf32>, vector<2x128xf32> -> vector<2x128xf32>
    %160 = arith.addf %120, %159 : vector<2x128xf32>
    %161 = vector.extract_strided_slice %7 {offsets = [58, 0], sizes = [2, 16], strides = [1, 1]} : vector<72x16xf32> to vector<2x16xf32>
    %c29 = arith.constant 29 : index
    %c0_102 = arith.constant 0 : index
    %c0_103 = arith.constant 0 : index
    %162 = vector.load %arg4[%c29, %c0_102, %c0_103] : memref<36x16x128xf32, #tpu.memory_space<vmem>>, vector<1x16x128xf32>
    %163 = vector.shape_cast %162 : vector<1x16x128xf32> to vector<16x128xf32>
    %cst_104 = arith.constant dense<0.000000e+00> : vector<2x128xf32>
    %164 = tpu.matmul %161, %163, %cst_104 {dimension_numbers = #tpu.dot_dimension_numbers<[1], [0], [0], [1], [0, 0, 1, 1], [], []>} : vector<2x16xf32>, vector<16x128xf32>, vector<2x128xf32> -> vector<2x128xf32>
    %165 = arith.addf %125, %164 : vector<2x128xf32>
    %166 = vector.extract_strided_slice %7 {offsets = [60, 0], sizes = [2, 16], strides = [1, 1]} : vector<72x16xf32> to vector<2x16xf32>
    %c30 = arith.constant 30 : index
    %c0_105 = arith.constant 0 : index
    %c0_106 = arith.constant 0 : index
    %167 = vector.load %arg4[%c30, %c0_105, %c0_106] : memref<36x16x128xf32, #tpu.memory_space<vmem>>, vector<1x16x128xf32>
    %168 = vector.shape_cast %167 : vector<1x16x128xf32> to vector<16x128xf32>
    %cst_107 = arith.constant dense<0.000000e+00> : vector<2x128xf32>
    %169 = tpu.matmul %166, %168, %cst_107 {dimension_numbers = #tpu.dot_dimension_numbers<[1], [0], [0], [1], [0, 0, 1, 1], [], []>} : vector<2x16xf32>, vector<16x128xf32>, vector<2x128xf32> -> vector<2x128xf32>
    %170 = arith.addf %130, %169 : vector<2x128xf32>
    %171 = vector.extract_strided_slice %7 {offsets = [62, 0], sizes = [2, 16], strides = [1, 1]} : vector<72x16xf32> to vector<2x16xf32>
    %c31 = arith.constant 31 : index
    %c0_108 = arith.constant 0 : index
    %c0_109 = arith.constant 0 : index
    %172 = vector.load %arg4[%c31, %c0_108, %c0_109] : memref<36x16x128xf32, #tpu.memory_space<vmem>>, vector<1x16x128xf32>
    %173 = vector.shape_cast %172 : vector<1x16x128xf32> to vector<16x128xf32>
    %cst_110 = arith.constant dense<0.000000e+00> : vector<2x128xf32>
    %174 = tpu.matmul %171, %173, %cst_110 {dimension_numbers = #tpu.dot_dimension_numbers<[1], [0], [0], [1], [0, 0, 1, 1], [], []>} : vector<2x16xf32>, vector<16x128xf32>, vector<2x128xf32> -> vector<2x128xf32>
    %175 = arith.addf %135, %174 : vector<2x128xf32>
    %176 = vector.extract_strided_slice %7 {offsets = [64, 0], sizes = [2, 16], strides = [1, 1]} : vector<72x16xf32> to vector<2x16xf32>
    %c32 = arith.constant 32 : index
    %c0_111 = arith.constant 0 : index
    %c0_112 = arith.constant 0 : index
    %177 = vector.load %arg4[%c32, %c0_111, %c0_112] : memref<36x16x128xf32, #tpu.memory_space<vmem>>, vector<1x16x128xf32>
    %178 = vector.shape_cast %177 : vector<1x16x128xf32> to vector<16x128xf32>
    %cst_113 = arith.constant dense<0.000000e+00> : vector<2x128xf32>
    %179 = tpu.matmul %176, %178, %cst_113 {dimension_numbers = #tpu.dot_dimension_numbers<[1], [0], [0], [1], [0, 0, 1, 1], [], []>} : vector<2x16xf32>, vector<16x128xf32>, vector<2x128xf32> -> vector<2x128xf32>
    %180 = arith.addf %140, %179 : vector<2x128xf32>
    %181 = vector.extract_strided_slice %7 {offsets = [66, 0], sizes = [2, 16], strides = [1, 1]} : vector<72x16xf32> to vector<2x16xf32>
    %c33 = arith.constant 33 : index
    %c0_114 = arith.constant 0 : index
    %c0_115 = arith.constant 0 : index
    %182 = vector.load %arg4[%c33, %c0_114, %c0_115] : memref<36x16x128xf32, #tpu.memory_space<vmem>>, vector<1x16x128xf32>
    %183 = vector.shape_cast %182 : vector<1x16x128xf32> to vector<16x128xf32>
    %cst_116 = arith.constant dense<0.000000e+00> : vector<2x128xf32>
    %184 = tpu.matmul %181, %183, %cst_116 {dimension_numbers = #tpu.dot_dimension_numbers<[1], [0], [0], [1], [0, 0, 1, 1], [], []>} : vector<2x16xf32>, vector<16x128xf32>, vector<2x128xf32> -> vector<2x128xf32>
    %185 = arith.addf %145, %184 : vector<2x128xf32>
    %186 = vector.extract_strided_slice %7 {offsets = [68, 0], sizes = [2, 16], strides = [1, 1]} : vector<72x16xf32> to vector<2x16xf32>
    %c34 = arith.constant 34 : index
    %c0_117 = arith.constant 0 : index
    %c0_118 = arith.constant 0 : index
    %187 = vector.load %arg4[%c34, %c0_117, %c0_118] : memref<36x16x128xf32, #tpu.memory_space<vmem>>, vector<1x16x128xf32>
    %188 = vector.shape_cast %187 : vector<1x16x128xf32> to vector<16x128xf32>
    %cst_119 = arith.constant dense<0.000000e+00> : vector<2x128xf32>
    %189 = tpu.matmul %186, %188, %cst_119 {dimension_numbers = #tpu.dot_dimension_numbers<[1], [0], [0], [1], [0, 0, 1, 1], [], []>} : vector<2x16xf32>, vector<16x128xf32>, vector<2x128xf32> -> vector<2x128xf32>
    %190 = arith.addf %150, %189 : vector<2x128xf32>
    %191 = vector.extract_strided_slice %7 {offsets = [70, 0], sizes = [2, 16], strides = [1, 1]} : vector<72x16xf32> to vector<2x16xf32>
    %c35 = arith.constant 35 : index
    %c0_120 = arith.constant 0 : index
    %c0_121 = arith.constant 0 : index
    %192 = vector.load %arg4[%c35, %c0_120, %c0_121] : memref<36x16x128xf32, #tpu.memory_space<vmem>>, vector<1x16x128xf32>
    %193 = vector.shape_cast %192 : vector<1x16x128xf32> to vector<16x128xf32>
    %cst_122 = arith.constant dense<0.000000e+00> : vector<2x128xf32>
    %194 = tpu.matmul %191, %193, %cst_122 {dimension_numbers = #tpu.dot_dimension_numbers<[1], [0], [0], [1], [0, 0, 1, 1], [], []>} : vector<2x16xf32>, vector<16x128xf32>, vector<2x128xf32> -> vector<2x128xf32>
    %195 = arith.addf %155, %194 : vector<2x128xf32>
    %196 = arith.addf %180, %185 : vector<2x128xf32>
    %197 = arith.addf %190, %195 : vector<2x128xf32>
    %198 = arith.addf %160, %165 : vector<2x128xf32>
    %199 = arith.addf %170, %175 : vector<2x128xf32>
    %200 = arith.addf %196, %197 : vector<2x128xf32>
    %201 = arith.addf %198, %199 : vector<2x128xf32>
    %202 = arith.addf %200, %201 : vector<2x128xf32>
    %c0_123 = arith.constant 0 : index
    %c0_124 = arith.constant 0 : index
    %203 = vector.load %arg5[%c0_123, %c0_124] : memref<1x128xf32, #tpu.memory_space<vmem>>, vector<1x128xf32>
    %204 = vector.broadcast %203 : vector<1x128xf32> to vector<2x128xf32>
    %205 = arith.addf %202, %204 : vector<2x128xf32>
    %cst_125 = arith.constant 0.000000e+00 : f32
    %206 = vector.broadcast %cst_125 : f32 to vector<2x128xf32>
    %207 = arith.maximumf %205, %206 : vector<2x128xf32>
    %c0_126 = arith.constant 0 : index
    %c0_127 = arith.constant 0 : index
    %208 = vector.load %arg6[%c0_126, %c0_127] : memref<128x3xf32, #tpu.memory_space<vmem>>, vector<128x3xf32>
    %cst_128 = arith.constant dense<0.000000e+00> : vector<2x3xf32>
    %209 = tpu.matmul %207, %208, %cst_128 {dimension_numbers = #tpu.dot_dimension_numbers<[1], [0], [0], [1], [0, 0, 1, 1], [], []>} : vector<2x128xf32>, vector<128x3xf32>, vector<2x3xf32> -> vector<2x3xf32>
    %c0_129 = arith.constant 0 : index
    %c0_130 = arith.constant 0 : index
    %210 = vector.load %arg7[%c0_129, %c0_130] : memref<1x3xf32, #tpu.memory_space<vmem>>, vector<1x3xf32>
    %211 = vector.broadcast %210 : vector<1x3xf32> to vector<2x3xf32>
    %212 = arith.addf %209, %211 : vector<2x3xf32>
    %c0_131 = arith.constant 0 : index
    %c0_132 = arith.constant 0 : index
    %213 = vector.load %arg8[%c0_131, %c0_132] : memref<2x3xf32, #tpu.memory_space<vmem>>, vector<2x3xf32>
    tpu.vector_store %arg8[%c0_131, %c0_132], %212 {strides = array<i32>} : memref<2x3xf32, #tpu.memory_space<vmem>>, vector<2x3xf32>,
    return
  }
  func.func @transform_0(%arg0: i32) -> (i32, i32) {
    %c0_i32 = arith.constant 0 : i32
    %c0_i32_0 = arith.constant 0 : i32
    %c0_i32_1 = arith.constant 0 : i32
    return %c0_i32, %c0_i32_0 : i32, i32
  }
  func.func @transform_1(%arg0: i32) -> (i32, i32) {
    %c0_i32 = arith.constant 0 : i32
    %c0_i32_0 = arith.constant 0 : i32
    %c0_i32_1 = arith.constant 0 : i32
    return %c0_i32, %c0_i32_0 : i32, i32
  }
  func.func @transform_2(%arg0: i32) -> (i32, i32) {
    %c0_i32 = arith.constant 0 : i32
    %c0_i32_0 = arith.constant 0 : i32
    %c0_i32_1 = arith.constant 0 : i32
    return %c0_i32, %c0_i32_0 : i32, i32
  }
  func.func @transform_3(%arg0: i32) -> (i32, i32, i32) {
    %c0_i32 = arith.constant 0 : i32
    %c0_i32_0 = arith.constant 0 : i32
    %c0_i32_1 = arith.constant 0 : i32
    %c0_i32_2 = arith.constant 0 : i32
    return %c0_i32, %c0_i32_0, %c0_i32_1 : i32, i32, i32
  }
  func.func @transform_4(%arg0: i32) -> (i32, i32) {
    %c0_i32 = arith.constant 0 : i32
    %c0_i32_0 = arith.constant 0 : i32
    %c0_i32_1 = arith.constant 0 : i32
    return %c0_i32, %c0_i32_0 : i32, i32
  }
  func.func @transform_5(%arg0: i32) -> (i32, i32) {
    %c0_i32 = arith.constant 0 : i32
    %c0_i32_0 = arith.constant 0 : i32
    %c0_i32_1 = arith.constant 0 : i32
    return %c0_i32, %c0_i32_0 : i32, i32
  }
  func.func @transform_6(%arg0: i32) -> (i32, i32) {
    %c0_i32 = arith.constant 0 : i32
    %c0_i32_0 = arith.constant 0 : i32
    %c0_i32_1 = arith.constant 0 : i32
    return %c0_i32, %c0_i32_0 : i32, i32
  }
  func.func @transform_7(%arg0: i32) -> (i32, i32) {
    %c0_i32 = arith.constant 0 : i32
    %c0_i32_0 = arith.constant 0 : i32
    %c0_i32_1 = arith.constant 0 : i32
    return %c0_i32, %c0_i32_0 : i32, i32
  }
}

</mosaic_0001>

<llo_original>
// kernel: nn_model_forward.1
$region0: #{nn_model_forward.1}
  #allocation0 [shape = 'u32[]', space=smem, size = 0x4, offset = 0x4, fixed_abs, tag = 'smem constant byte address 0x4 - core index']
  #allocation1 [shape = 'u32[144,128]{1,0:T(1,128)}', space=vmem, size = 0x12000, scoped, tag = 'internal scratch']
  %s0 = inlined_call_operand.vmem [shape: f32[72,128], index: 0, kind: input, shape index: {}]
  %s1 = inlined_call_operand.vmem [shape: f32[128,16], index: 1, kind: input, shape index: {}]
  %s2 = inlined_call_operand.vmem [shape: f32[1,16], index: 2, kind: input, shape index: {}]
  %s3 = inlined_call_operand.vmem [shape: f32[36,16,128], index: 3, kind: input, shape index: {}]
  %s4 = inlined_call_operand.vmem [shape: f32[1,128], index: 4, kind: input, shape index: {}]
  %s5 = inlined_call_operand.vmem [shape: f32[128,3], index: 5, kind: input, shape index: {}]
  %s6 = inlined_call_operand.vmem [shape: f32[1,3], index: 6, kind: input, shape index: {}]
  %s7 = inlined_call_operand.hbm [shape: f32[2,3], index: 7, kind: output, shape index: {}]
  %s8 = sld [smem:[#allocation0]]
  $region38: #{nn_model_forward.1} parent=0
    _
  %s10 = ssub.s32 1, %s8
  %s11 = scalar_select 0, %s10, %s8
  $region1: #{nn_model_forward.1} parent=0
    #allocation2 [shape = 'u8[1024]{0}', space=vmem, size = 0x400, scoped, tag = 'output window, operand 0, single buffered']
    #allocation3 [shape = 's32[1]{0}', space=sflag, size = 0x4, scoped, tag = 'scoped memory for nn_model_forward.1']
    %12 = vsyncpa [#allocation3], 0
    // Predicated region
    $region2: #{nn_model_forward.1} parent=1 // pred_check
      _
    $region3: #{nn_model_forward.1} parent=1 // pred_check_branch
      %14 = sbr.rel (0) target = $region5
    $region4: #{nn_model_forward.1} parent=1 // pred_region
      _
    $region5: #{nn_model_forward.1} parent=1 // pred_fallthru
      _
    // Predicated region
    $region6: #{nn_model_forward.1} parent=1 // pred_check
      _
    $region7: #{nn_model_forward.1} parent=1 // pred_check_branch
      %16 = sbr.rel (0) target = $region9
    $region8: #{nn_model_forward.1} parent=1 // pred_region
      _
    $region9: #{nn_model_forward.1} parent=1 // pred_fallthru
      _
    // Predicated region
    $region10: #{nn_model_forward.1} parent=1 // pred_check
      _
    $region11: #{nn_model_forward.1} parent=1 // pred_check_branch
      %18 = sbr.rel (0) target = $region13
    $region12: #{nn_model_forward.1} parent=1 // pred_region
      _
    $region13: #{nn_model_forward.1} parent=1 // pred_fallthru
      _
    // Predicated region
    $region14: #{nn_model_forward.1} parent=1 // pred_check
      _
    $region15: #{nn_model_forward.1} parent=1 // pred_check_branch
      %20 = sbr.rel (0) target = $region17
    $region16: #{nn_model_forward.1} parent=1 // pred_region
      _
    $region17: #{nn_model_forward.1} parent=1 // pred_fallthru
      _
    // Predicated region
    $region18: #{nn_model_forward.1} parent=1 // pred_check
      _
    $region19: #{nn_model_forward.1} parent=1 // pred_check_branch
      %22 = sbr.rel (0) target = $region21
    $region20: #{nn_model_forward.1} parent=1 // pred_region
      _
    $region21: #{nn_model_forward.1} parent=1 // pred_fallthru
      _
    // Predicated region
    $region22: #{nn_model_forward.1} parent=1 // pred_check
      _
    $region23: #{nn_model_forward.1} parent=1 // pred_check_branch
      %24 = sbr.rel (0) target = $region25
    $region24: #{nn_model_forward.1} parent=1 // pred_region
      _
    $region25: #{nn_model_forward.1} parent=1 // pred_fallthru
      _
    // Predicated region
    $region26: #{nn_model_forward.1} parent=1 // pred_check
      _
    $region27: #{nn_model_forward.1} parent=1 // pred_check_branch
      %26 = sbr.rel (0) target = $region29
    $region28: #{nn_model_forward.1} parent=1 // pred_region
      _
    $region29: #{nn_model_forward.1} parent=1 // pred_fallthru
      _
    %v27 = vld [vmem:[%s0] sm:$0xff]
    %v28 = vld [vmem:[%s0 + $0x8] sm:$0xff]
    %v29 = vld [vmem:[%s0 + $0x10] sm:$0xff]
    %v30 = vld [vmem:[%s0 + $0x18] sm:$0xff]
    %v31 = vld [vmem:[%s0 + $0x20] sm:$0xff]
    %v32 = vld [vmem:[%s0 + $0x28] sm:$0xff]
    %v33 = vld [vmem:[%s0 + $0x30] sm:$0xff]
    %v34 = vld [vmem:[%s0 + $0x38] sm:$0xff]
    %v35 = vld [vmem:[%s0 + $0x40] sm:$0xff]
    %v36 = vld [vmem:[%s1] sm:$0xff]
    %v37 = vld [vmem:[%s1 + $0x8] sm:$0xff]
    %v38 = vld [vmem:[%s1 + $0x10] sm:$0xff]
    %v39 = vld [vmem:[%s1 + $0x18] sm:$0xff]
    %v40 = vld [vmem:[%s1 + $0x20] sm:$0xff]
    %v41 = vld [vmem:[%s1 + $0x28] sm:$0xff]
    %v42 = vld [vmem:[%s1 + $0x30] sm:$0xff]
    %v43 = vld [vmem:[%s1 + $0x38] sm:$0xff]
    %v44 = vld [vmem:[%s1 + $0x40] sm:$0xff]
    %v45 = vld [vmem:[%s1 + $0x48] sm:$0xff]
    %v46 = vld [vmem:[%s1 + $0x50] sm:$0xff]
    %v47 = vld [vmem:[%s1 + $0x58] sm:$0xff]
    %v48 = vld [vmem:[%s1 + $0x60] sm:$0xff]
    %v49 = vld [vmem:[%s1 + $0x68] sm:$0xff]
    %v50 = vld [vmem:[%s1 + $0x70] sm:$0xff]
    %v51 = vld [vmem:[%s1 + $0x78] sm:$0xff]
    %v52 = vld [vmem:[%s2] sm:$0x1]
    %v54 = vlaneseq
    %v55 = vshrl.u32 %v54, 7
    %v56 = vsub.s32 0, %v55
    %v57 = vrot.slane %v52, %v56
    %59 = vmatprep.subr.mxu0 0.0
    %60 = vmatpush1.msra.mxu0 %v51
    %61 = vmatprep.subr.mxu0 0.0
    %62 = vmatpush1.msra.mxu0 %v50
    %63 = vmatprep.subr.mxu0 0.0
    %64 = vmatpush1.msra.mxu0 %v49
    %65 = vmatprep.subr.mxu0 0.0
    %66 = vmatpush1.msra.mxu0 %v48
    %67 = vmatprep.subr.mxu0 0.0
    %68 = vmatpush1.msra.mxu0 %v47
    %69 = vmatprep.subr.mxu0 0.0
    %70 = vmatpush1.msra.mxu0 %v46
    %71 = vmatprep.subr.mxu0 0.0
    %72 = vmatpush1.msra.mxu0 %v45
    %73 = vmatprep.subr.mxu0 0.0
    %74 = vmatpush1.msra.mxu0 %v44
    %75 = vmatprep.subr.mxu0 0.0
    %76 = vmatpush1.msra.mxu0 %v43
    %77 = vmatprep.subr.mxu0 0.0
    %78 = vmatpush1.msra.mxu0 %v42
    %79 = vmatprep.subr.mxu0 0.0
    %80 = vmatpush1.msra.mxu0 %v41
    %81 = vmatprep.subr.mxu0 0.0
    %82 = vmatpush1.msra.mxu0 %v40
    %83 = vmatprep.subr.mxu0 0.0
    %84 = vmatpush1.msra.mxu0 %v39
    %85 = vmatprep.subr.mxu0 0.0
    %86 = vmatpush1.msra.mxu0 %v38
    %87 = vmatprep.subr.mxu0 0.0
    %88 = vmatpush1.msra.mxu0 %v37
    %89 = vmatprep.subr.mxu0 0.0
    %90 = vmatpush1.msra.mxu0 %v36
    %91 = vmatprep.subr.mxu0 0.0
    %92 = vmatpush2.msra.mxu0 0.0
    %93 = vmatprep.subr.mxu0 0.0
    %94 = vmatpush2.msra.mxu0 0.0
    %95 = vmatprep.subr.mxu0 0.0
    %96 = vmatpush2.msra.mxu0 0.0
    %97 = vmatprep.subr.mxu0 0.0
    %98 = vmatpush2.msra.mxu0 0.0
    %99 = vmatprep.subr.mxu0 0.0
    %100 = vmatpush2.msra.mxu0 0.0
    %101 = vmatprep.subr.mxu0 0.0
    %102 = vmatpush2.msra.mxu0 0.0
    %103 = vmatprep.subr.mxu0 0.0
    %104 = vmatpush2.msra.mxu0 0.0
    %105 = vmatprep.subr.mxu0 0.0
    %106 = vmatpush2.msra.mxu0 0.0
    %107 = vmatprep.subr.mxu0 0.0
    %108 = vmatpush2.msra.mxu0 0.0
    %109 = vmatprep.subr.mxu0 0.0
    %110 = vmatpush2.msra.mxu0 0.0
    %111 = vmatprep.subr.mxu0 0.0
    %112 = vmatpush2.msra.mxu0 0.0
    %113 = vmatprep.subr.mxu0 0.0
    %114 = vmatpush2.msra.mxu0 0.0
    %115 = vmatprep.subr.mxu0 0.0
    %116 = vmatpush2.msra.mxu0 0.0
    %117 = vmatprep.subr.mxu0 0.0
    %118 = vmatpush2.msra.mxu0 0.0
    %119 = vmatprep.subr.mxu0 0.0
    %120 = vmatpush2.msra.mxu0 0.0
    %121 = vmatprep.subr.mxu0 0.0
    %122 = vmatpush2.msra.mxu0 0.0
    %123 = vmatprep.mubr.f32.mxu0 0.0
    %124 = vmatmul.mubr.f32.gmra.mxu0 %v27
    %v125 = vpop.f32.mrf.mxu0
    %v126 = vadd.f32 %v57, %v125
    %v127 = vpop.f32.mrf.mxu0
    %128 = vmatprep.mubr.f32.mxu0 0.0
    %129 = vmatmul.mubr.f32.gmra.mxu0 %v28
    %v130 = vpop.f32.mrf.mxu0
    %v131 = vadd.f32 %v57, %v130
    %v132 = vpop.f32.mrf.mxu0
    %133 = vmatprep.mubr.f32.mxu0 0.0
    %134 = vmatmul.mubr.f32.gmra.mxu0 %v29
    %v135 = vpop.f32.mrf.mxu0
    %v136 = vadd.f32 %v57, %v135
    %v137 = vpop.f32.mrf.mxu0
    %138 = vmatprep.mubr.f32.mxu0 0.0
    %139 = vmatmul.mubr.f32.gmra.mxu0 %v30
    %v140 = vpop.f32.mrf.mxu0
    %v141 = vadd.f32 %v57, %v140
    %v142 = vpop.f32.mrf.mxu0
    %143 = vmatprep.mubr.f32.mxu0 0.0
    %144 = vmatmul.mubr.f32.gmra.mxu0 %v31
    %v145 = vpop.f32.mrf.mxu0
    %v146 = vadd.f32 %v57, %v145
    %v147 = vpop.f32.mrf.mxu0
    %148 = vmatprep.mubr.f32.mxu0 0.0
    %149 = vmatmul.mubr.f32.gmra.mxu0 %v32
    %v150 = vpop.f32.mrf.mxu0
    %v151 = vadd.f32 %v57, %v150
    %v152 = vpop.f32.mrf.mxu0
    %153 = vmatprep.mubr.f32.mxu0 0.0
    %154 = vmatmul.mubr.f32.gmra.mxu0 %v33
    %v155 = vpop.f32.mrf.mxu0
    %v156 = vadd.f32 %v57, %v155
    %v157 = vpop.f32.mrf.mxu0
    %158 = vmatprep.mubr.f32.mxu0 0.0
    %159 = vmatmul.mubr.f32.gmra.mxu0 %v34
    %v160 = vpop.f32.mrf.mxu0
    %v161 = vadd.f32 %v57, %v160
    %v162 = vpop.f32.mrf.mxu0
    %163 = vmatprep.mubr.f32.mxu0 0.0
    %164 = vmatmul.mubr.f32.gmra.mxu0 %v35
    %v165 = vpop.f32.mrf.mxu0
    %v166 = vadd.f32 %v57, %v165
    %v167 = vpop.f32.mrf.mxu0
    %168 = vdwg.mxu0
    %v169 = vmax.f32 %v126, 0.0
    %v170 = vmax.f32 %v131, 0.0
    %v171 = vmax.f32 %v136, 0.0
    %v172 = vmax.f32 %v141, 0.0
    %v173 = vmax.f32 %v146, 0.0
    %v174 = vmax.f32 %v151, 0.0
    %v175 = vmax.f32 %v156, 0.0
    %v176 = vmax.f32 %v161, 0.0
    %v177 = vmax.f32 %v166, 0.0
    %v178 = vld [vmem:[%s3] sm:$0xff]
    %v179 = vld [vmem:[%s3 + $0x8] sm:$0xff]
    %s180 = scalar_lea.vmem %s3, 16
    %v181 = vld [vmem:[%s180] sm:$0xff]
    %v182 = vld [vmem:[%s180 + $0x8] sm:$0xff]
    %s183 = scalar_lea.vmem %s3, 32
    %v184 = vld [vmem:[%s183] sm:$0xff]
    %v185 = vld [vmem:[%s183 + $0x8] sm:$0xff]
    %s186 = scalar_lea.vmem %s3, 48
    %v187 = vld [vmem:[%s186] sm:$0xff]
    %v188 = vld [vmem:[%s186 + $0x8] sm:$0xff]
    %s189 = scalar_lea.vmem %s3, 64
    %v190 = vld [vmem:[%s189] sm:$0xff]
    %v191 = vld [vmem:[%s189 + $0x8] sm:$0xff]
    %s192 = scalar_lea.vmem %s3, 80
    %v193 = vld [vmem:[%s192] sm:$0xff]
    %v194 = vld [vmem:[%s192 + $0x8] sm:$0xff]
    %s195 = scalar_lea.vmem %s3, 96
    %v196 = vld [vmem:[%s195] sm:$0xff]
    %v197 = vld [vmem:[%s195 + $0x8] sm:$0xff]
    %s198 = scalar_lea.vmem %s3, 112
    %v199 = vld [vmem:[%s198] sm:$0xff]
    %v200 = vld [vmem:[%s198 + $0x8] sm:$0xff]
    %s201 = scalar_lea.vmem %s3, 128
    %v202 = vld [vmem:[%s201] sm:$0xff]
    %v203 = vld [vmem:[%s201 + $0x8] sm:$0xff]
    %vm204 = vcmask 130048
    %v206 = vsel %vm204, %v171, 0
    %208 = vmatprep.subr.mxu0 0.0
    %209 = vmatpush1.msra.mxu0 0.0
    %210 = vmatprep.subr.mxu0 0.0
    %211 = vmatpush1.msra.mxu0 0.0
    %212 = vmatprep.subr.mxu0 0.0
    %213 = vmatpush1.msra.mxu0 0.0
    %214 = vmatprep.subr.mxu0 0.0
    %215 = vmatpush1.msra.mxu0 0.0
    %216 = vmatprep.subr.mxu0 0.0
    %217 = vmatpush1.msra.mxu0 0.0
    %218 = vmatprep.subr.mxu0 0.0
    %219 = vmatpush1.msra.mxu0 0.0
    %220 = vmatprep.subr.mxu0 0.0
    %221 = vmatpush1.msra.mxu0 0.0
    %222 = vmatprep.subr.mxu0 0.0
    %223 = vmatpush1.msra.mxu0 0.0
    %224 = vmatprep.subr.mxu0 0.0
    %225 = vmatpush1.msra.mxu0 0.0
    %226 = vmatprep.subr.mxu0 0.0
    %227 = vmatpush1.msra.mxu0 0.0
    %228 = vmatprep.subr.mxu0 0.0
    %229 = vmatpush1.msra.mxu0 0.0
    %230 = vmatprep.subr.mxu0 0.0
    %231 = vmatpush1.msra.mxu0 0.0
    %232 = vmatprep.subr.mxu0 0.0
    %233 = vmatpush1.msra.mxu0 0.0
    %234 = vmatprep.subr.mxu0 0.0
    %235 = vmatpush1.msra.mxu0 0.0
    %236 = vmatprep.subr.mxu0 0.0
    %237 = vmatpush1.msra.mxu0 %v203
    %238 = vmatprep.subr.mxu0 0.0
    %239 = vmatpush1.msra.mxu0 %v202
    %240 = vmatprep.subr.mxu0 0.0
    %241 = vmatpush2.msra.mxu0 0.0
    %242 = vmatprep.subr.mxu0 0.0
    %243 = vmatpush2.msra.mxu0 0.0
    %244 = vmatprep.subr.mxu0 0.0
    %245 = vmatpush2.msra.mxu0 0.0
    %246 = vmatprep.subr.mxu0 0.0
    %247 = vmatpush2.msra.mxu0 0.0
    %248 = vmatprep.subr.mxu0 0.0
    %249 = vmatpush2.msra.mxu0 0.0
    %250 = vmatprep.subr.mxu0 0.0
    %251 = vmatpush2.msra.mxu0 0.0
    %252 = vmatprep.subr.mxu0 0.0
    %253 = vmatpush2.msra.mxu0 0.0
    %254 = vmatprep.subr.mxu0 0.0
    %255 = vmatpush2.msra.mxu0 0.0
    %256 = vmatprep.subr.mxu0 0.0
    %257 = vmatpush2.msra.mxu0 0.0
    %258 = vmatprep.subr.mxu0 0.0
    %259 = vmatpush2.msra.mxu0 0.0
    %260 = vmatprep.subr.mxu0 0.0
    %261 = vmatpush2.msra.mxu0 0.0
    %262 = vmatprep.subr.mxu0 0.0
    %263 = vmatpush2.msra.mxu0 0.0
    %264 = vmatprep.subr.mxu0 0.0
    %265 = vmatpush2.msra.mxu0 0.0
    %266 = vmatprep.subr.mxu0 0.0
    %267 = vmatpush2.msra.mxu0 0.0
    %268 = vmatprep.subr.mxu0 0.0
    %269 = vmatpush2.msra.mxu0 0.0
    %270 = vmatprep.subr.mxu0 0.0
    %271 = vmatpush2.msra.mxu0 0.0
    %272 = vmatprep.mubr.f32.mxu0 0.0
    %273 = vmatmul.mubr.f32.gmra.mxu0 %v206
    %v274 = vpop.f32.mrf.mxu0
    %v275 = vadd.f32 0.0, %v274
    %v276 = vpop.f32.mrf.mxu0
    %277 = vdwg.mxu0
    %v279 = vsel %vm204, %v169, 0
    %281 = vmatprep.subr.mxu0 0.0
    %282 = vmatpush1.msra.mxu0 0.0
    %283 = vmatprep.subr.mxu0 0.0
    %284 = vmatpush1.msra.mxu0 0.0
    %285 = vmatprep.subr.mxu0 0.0
    %286 = vmatpush1.msra.mxu0 0.0
    %287 = vmatprep.subr.mxu0 0.0
    %288 = vmatpush1.msra.mxu0 0.0
    %289 = vmatprep.subr.mxu0 0.0
    %290 = vmatpush1.msra.mxu0 0.0
    %291 = vmatprep.subr.mxu0 0.0
    %292 = vmatpush1.msra.mxu0 0.0
    %293 = vmatprep.subr.mxu0 0.0
    %294 = vmatpush1.msra.mxu0 0.0
    %295 = vmatprep.subr.mxu0 0.0
    %296 = vmatpush1.msra.mxu0 0.0
    %297 = vmatprep.subr.mxu0 0.0
    %298 = vmatpush1.msra.mxu0 0.0
    %299 = vmatprep.subr.mxu0 0.0
    %300 = vmatpush1.msra.mxu0 0.0
    %301 = vmatprep.subr.mxu0 0.0
    %302 = vmatpush1.msra.mxu0 0.0
    %303 = vmatprep.subr.mxu0 0.0
    %304 = vmatpush1.msra.mxu0 0.0
    %305 = vmatprep.subr.mxu0 0.0
    %306 = vmatpush1.msra.mxu0 0.0
    %307 = vmatprep.subr.mxu0 0.0
    %308 = vmatpush1.msra.mxu0 0.0
    %309 = vmatprep.subr.mxu0 0.0
    %310 = vmatpush1.msra.mxu0 %v179
    %311 = vmatprep.subr.mxu0 0.0
    %312 = vmatpush1.msra.mxu0 %v178
    %313 = vmatprep.subr.mxu0 0.0
    %314 = vmatpush2.msra.mxu0 0.0
    %315 = vmatprep.subr.mxu0 0.0
    %316 = vmatpush2.msra.mxu0 0.0
    %317 = vmatprep.subr.mxu0 0.0
    %318 = vmatpush2.msra.mxu0 0.0
    %319 = vmatprep.subr.mxu0 0.0
    %320 = vmatpush2.msra.mxu0 0.0
    %321 = vmatprep.subr.mxu0 0.0
    %322 = vmatpush2.msra.mxu0 0.0
    %323 = vmatprep.subr.mxu0 0.0
    %324 = vmatpush2.msra.mxu0 0.0
    %325 = vmatprep.subr.mxu0 0.0
    %326 = vmatpush2.msra.mxu0 0.0
    %327 = vmatprep.subr.mxu0 0.0
    %328 = vmatpush2.msra.mxu0 0.0
    %329 = vmatprep.subr.mxu0 0.0
    %330 = vmatpush2.msra.mxu0 0.0
    %331 = vmatprep.subr.mxu0 0.0
    %332 = vmatpush2.msra.mxu0 0.0
    %333 = vmatprep.subr.mxu0 0.0
    %334 = vmatpush2.msra.mxu0 0.0
    %335 = vmatprep.subr.mxu0 0.0
    %336 = vmatpush2.msra.mxu0 0.0
    %337 = vmatprep.subr.mxu0 0.0
    %338 = vmatpush2.msra.mxu0 0.0
    %339 = vmatprep.subr.mxu0 0.0
    %340 = vmatpush2.msra.mxu0 0.0
    %341 = vmatprep.subr.mxu0 0.0
    %342 = vmatpush2.msra.mxu0 0.0
    %343 = vmatprep.subr.mxu0 0.0
    %344 = vmatpush2.msra.mxu0 0.0
    %345 = vmatprep.mubr.f32.mxu0 0.0
    %346 = vmatmul.mubr.f32.gmra.mxu0 %v279
    %v347 = vpop.f32.mrf.mxu0
    %v348 = vadd.f32 %v275, %v347
    %v349 = vpop.f32.mrf.mxu0
    %350 = vdwg.mxu0
    %s351 = scalar_lea.vmem %s3, 144
    %v352 = vld [vmem:[%s351] sm:$0xff]
    %v353 = vld [vmem:[%s351 + $0x8] sm:$0xff]
    %v354 = vrot.slane %v171, 2
    %v355 = vsel %vm204, %v354, 0
    %357 = vmatprep.subr.mxu0 0.0
    %358 = vmatpush1.msra.mxu0 0.0
    %359 = vmatprep.subr.mxu0 0.0
    %360 = vmatpush1.msra.mxu0 0.0
    %361 = vmatprep.subr.mxu0 0.0
    %362 = vmatpush1.msra.mxu0 0.0
    %363 = vmatprep.subr.mxu0 0.0
    %364 = vmatpush1.msra.mxu0 0.0
    %365 = vmatprep.subr.mxu0 0.0
    %366 = vmatpush1.msra.mxu0 0.0
    %367 = vmatprep.subr.mxu0 0.0
    %368 = vmatpush1.msra.mxu0 0.0
    %369 = vmatprep.subr.mxu0 0.0
    %370 = vmatpush1.msra.mxu0 0.0
    %371 = vmatprep.subr.mxu0 0.0
    %372 = vmatpush1.msra.mxu0 0.0
    %373 = vmatprep.subr.mxu0 0.0
    %374 = vmatpush1.msra.mxu0 0.0
    %375 = vmatprep.subr.mxu0 0.0
    %376 = vmatpush1.msra.mxu0 0.0
    %377 = vmatprep.subr.mxu0 0.0
    %378 = vmatpush1.msra.mxu0 0.0
    %379 = vmatprep.subr.mxu0 0.0
    %380 = vmatpush1.msra.mxu0 0.0
    %381 = vmatprep.subr.mxu0 0.0
    %382 = vmatpush1.msra.mxu0 0.0
    %383 = vmatprep.subr.mxu0 0.0
    %384 = vmatpush1.msra.mxu0 0.0
    %385 = vmatprep.subr.mxu0 0.0
    %386 = vmatpush1.msra.mxu0 %v353
    %387 = vmatprep.subr.mxu0 0.0
    %388 = vmatpush1.msra.mxu0 %v352
    %389 = vmatprep.subr.mxu0 0.0
    %390 = vmatpush2.msra.mxu0 0.0
    %391 = vmatprep.subr.mxu0 0.0
    %392 = vmatpush2.msra.mxu0 0.0
    %393 = vmatprep.subr.mxu0 0.0
    %394 = vmatpush2.msra.mxu0 0.0
    %395 = vmatprep.subr.mxu0 0.0
    %396 = vmatpush2.msra.mxu0 0.0
    %397 = vmatprep.subr.mxu0 0.0
    %398 = vmatpush2.msra.mxu0 0.0
    %399 = vmatprep.subr.mxu0 0.0
    %400 = vmatpush2.msra.mxu0 0.0
    %401 = vmatprep.subr.mxu0 0.0
    %402 = vmatpush2.msra.mxu0 0.0
    %403 = vmatprep.subr.mxu0 0.0
    %404 = vmatpush2.msra.mxu0 0.0
    %405 = vmatprep.subr.mxu0 0.0
    %406 = vmatpush2.msra.mxu0 0.0
    %407 = vmatprep.subr.mxu0 0.0
    %408 = vmatpush2.msra.mxu0 0.0
    %409 = vmatprep.subr.mxu0 0.0
    %410 = vmatpush2.msra.mxu0 0.0
    %411 = vmatprep.subr.mxu0 0.0
    %412 = vmatpush2.msra.mxu0 0.0
    %413 = vmatprep.subr.mxu0 0.0
    %414 = vmatpush2.msra.mxu0 0.0
    %415 = vmatprep.subr.mxu0 0.0
    %416 = vmatpush2.msra.mxu0 0.0
    %417 = vmatprep.subr.mxu0 0.0
    %418 = vmatpush2.msra.mxu0 0.0
    %419 = vmatprep.subr.mxu0 0.0
    %420 = vmatpush2.msra.mxu0 0.0
    %421 = vmatprep.mubr.f32.mxu0 0.0
    %422 = vmatmul.mubr.f32.gmra.mxu0 %v355
    %v423 = vpop.f32.mrf.mxu0
    %v424 = vadd.f32 0.0, %v423
    %v425 = vpop.f32.mrf.mxu0
    %426 = vdwg.mxu0
    %v427 = vrot.slane %v169, 2
    %v428 = vsel %vm204, %v427, 0
    %430 = vmatprep.subr.mxu0 0.0
    %431 = vmatpush1.msra.mxu0 0.0
    %432 = vmatprep.subr.mxu0 0.0
    %433 = vmatpush1.msra.mxu0 0.0
    %434 = vmatprep.subr.mxu0 0.0
    %435 = vmatpush1.msra.mxu0 0.0
    %436 = vmatprep.subr.mxu0 0.0
    %437 = vmatpush1.msra.mxu0 0.0
    %438 = vmatprep.subr.mxu0 0.0
    %439 = vmatpush1.msra.mxu0 0.0
    %440 = vmatprep.subr.mxu0 0.0
    %441 = vmatpush1.msra.mxu0 0.0
    %442 = vmatprep.subr.mxu0 0.0
    %443 = vmatpush1.msra.mxu0 0.0
    %444 = vmatprep.subr.mxu0 0.0
    %445 = vmatpush1.msra.mxu0 0.0
    %446 = vmatprep.subr.mxu0 0.0
    %447 = vmatpush1.msra.mxu0 0.0
    %448 = vmatprep.subr.mxu0 0.0
    %449 = vmatpush1.msra.mxu0 0.0
    %450 = vmatprep.subr.mxu0 0.0
    %451 = vmatpush1.msra.mxu0 0.0
    %452 = vmatprep.subr.mxu0 0.0
    %453 = vmatpush1.msra.mxu0 0.0
    %454 = vmatprep.subr.mxu0 0.0
    %455 = vmatpush1.msra.mxu0 0.0
    %456 = vmatprep.subr.mxu0 0.0
    %457 = vmatpush1.msra.mxu0 0.0
    %458 = vmatprep.subr.mxu0 0.0
    %459 = vmatpush1.msra.mxu0 %v182
    %460 = vmatprep.subr.mxu0 0.0
    %461 = vmatpush1.msra.mxu0 %v181
    %462 = vmatprep.subr.mxu0 0.0
    %463 = vmatpush2.msra.mxu0 0.0
    %464 = vmatprep.subr.mxu0 0.0
    %465 = vmatpush2.msra.mxu0 0.0
    %466 = vmatprep.subr.mxu0 0.0
    %467 = vmatpush2.msra.mxu0 0.0
    %468 = vmatprep.subr.mxu0 0.0
    %469 = vmatpush2.msra.mxu0 0.0
    %470 = vmatprep.subr.mxu0 0.0
    %471 = vmatpush2.msra.mxu0 0.0
    %472 = vmatprep.subr.mxu0 0.0
    %473 = vmatpush2.msra.mxu0 0.0
    %474 = vmatprep.subr.mxu0 0.0
    %475 = vmatpush2.msra.mxu0 0.0
    %476 = vmatprep.subr.mxu0 0.0
    %477 = vmatpush2.msra.mxu0 0.0
    %478 = vmatprep.subr.mxu0 0.0
    %479 = vmatpush2.msra.mxu0 0.0
    %480 = vmatprep.subr.mxu0 0.0
    %481 = vmatpush2.msra.mxu0 0.0
    %482 = vmatprep.subr.mxu0 0.0
    %483 = vmatpush2.msra.mxu0 0.0
    %484 = vmatprep.subr.mxu0 0.0
    %485 = vmatpush2.msra.mxu0 0.0
    %486 = vmatprep.subr.mxu0 0.0
    %487 = vmatpush2.msra.mxu0 0.0
    %488 = vmatprep.subr.mxu0 0.0
    %489 = vmatpush2.msra.mxu0 0.0
    %490 = vmatprep.subr.mxu0 0.0
    %491 = vmatpush2.msra.mxu0 0.0
    %492 = vmatprep.subr.mxu0 0.0
    %493 = vmatpush2.msra.mxu0 0.0
    %494 = vmatprep.mubr.f32.mxu0 0.0
    %495 = vmatmul.mubr.f32.gmra.mxu0 %v428
    %v496 = vpop.f32.mrf.mxu0
    %v497 = vadd.f32 %v424, %v496
    %v498 = vpop.f32.mrf.mxu0
    %499 = vdwg.mxu0
    %s500 = scalar_lea.vmem %s3, 160
    %v501 = vld [vmem:[%s500] sm:$0xff]
    %v502 = vld [vmem:[%s500 + $0x8] sm:$0xff]
    %v503 = vrot.slane %v171, 4
    %v504 = vsel %vm204, %v503, 0
    %506 = vmatprep.subr.mxu0 0.0
    %507 = vmatpush1.msra.mxu0 0.0
    %508 = vmatprep.subr.mxu0 0.0
    %509 = vmatpush1.msra.mxu0 0.0
    %510 = vmatprep.subr.mxu0 0.0
    %511 = vmatpush1.msra.mxu0 0.0
    %512 = vmatprep.subr.mxu0 0.0
    %513 = vmatpush1.msra.mxu0 0.0
    %514 = vmatprep.subr.mxu0 0.0
    %515 = vmatpush1.msra.mxu0 0.0
    %516 = vmatprep.subr.mxu0 0.0
    %517 = vmatpush1.msra.mxu0 0.0
    %518 = vmatprep.subr.mxu0 0.0
    %519 = vmatpush1.msra.mxu0 0.0
    %520 = vmatprep.subr.mxu0 0.0
    %521 = vmatpush1.msra.mxu0 0.0
    %522 = vmatprep.subr.mxu0 0.0
    %523 = vmatpush1.msra.mxu0 0.0
    %524 = vmatprep.subr.mxu0 0.0
    %525 = vmatpush1.msra.mxu0 0.0
    %526 = vmatprep.subr.mxu0 0.0
    %527 = vmatpush1.msra.mxu0 0.0
    %528 = vmatprep.subr.mxu0 0.0
    %529 = vmatpush1.msra.mxu0 0.0
    %530 = vmatprep.subr.mxu0 0.0
    %531 = vmatpush1.msra.mxu0 0.0
    %532 = vmatprep.subr.mxu0 0.0
    %533 = vmatpush1.msra.mxu0 0.0
    %534 = vmatprep.subr.mxu0 0.0
    %535 = vmatpush1.msra.mxu0 %v502
    %536 = vmatprep.subr.mxu0 0.0
    %537 = vmatpush1.msra.mxu0 %v501
    %538 = vmatprep.subr.mxu0 0.0
    %539 = vmatpush2.msra.mxu0 0.0
    %540 = vmatprep.subr.mxu0 0.0
    %541 = vmatpush2.msra.mxu0 0.0
    %542 = vmatprep.subr.mxu0 0.0
    %543 = vmatpush2.msra.mxu0 0.0
    %544 = vmatprep.subr.mxu0 0.0
    %545 = vmatpush2.msra.mxu0 0.0
    %546 = vmatprep.subr.mxu0 0.0
    %547 = vmatpush2.msra.mxu0 0.0
    %548 = vmatprep.subr.mxu0 0.0
    %549 = vmatpush2.msra.mxu0 0.0
    %550 = vmatprep.subr.mxu0 0.0
    %551 = vmatpush2.msra.mxu0 0.0
    %552 = vmatprep.subr.mxu0 0.0
    %553 = vmatpush2.msra.mxu0 0.0
    %554 = vmatprep.subr.mxu0 0.0
    %555 = vmatpush2.msra.mxu0 0.0
    %556 = vmatprep.subr.mxu0 0.0
    %557 = vmatpush2.msra.mxu0 0.0
    %558 = vmatprep.subr.mxu0 0.0
    %559 = vmatpush2.msra.mxu0 0.0
    %560 = vmatprep.subr.mxu0 0.0
    %561 = vmatpush2.msra.mxu0 0.0
    %562 = vmatprep.subr.mxu0 0.0
    %563 = vmatpush2.msra.mxu0 0.0
    %564 = vmatprep.subr.mxu0 0.0
    %565 = vmatpush2.msra.mxu0 0.0
    %566 = vmatprep.subr.mxu0 0.0
    %567 = vmatpush2.msra.mxu0 0.0
    %568 = vmatprep.subr.mxu0 0.0
    %569 = vmatpush2.msra.mxu0 0.0
    %570 = vmatprep.mubr.f32.mxu0 0.0
    %571 = vmatmul.mubr.f32.gmra.mxu0 %v504
    %v572 = vpop.f32.mrf.mxu0
    %v573 = vadd.f32 0.0, %v572
    %v574 = vpop.f32.mrf.mxu0
    %575 = vdwg.mxu0
    %v576 = vrot.slane %v169, 4
    %v577 = vsel %vm204, %v576, 0
    %579 = vmatprep.subr.mxu0 0.0
    %580 = vmatpush1.msra.mxu0 0.0
    %581 = vmatprep.subr.mxu0 0.0
    %582 = vmatpush1.msra.mxu0 0.0
    %583 = vmatprep.subr.mxu0 0.0
    %584 = vmatpush1.msra.mxu0 0.0
    %585 = vmatprep.subr.mxu0 0.0
    %586 = vmatpush1.msra.mxu0 0.0
    %587 = vmatprep.subr.mxu0 0.0
    %588 = vmatpush1.msra.mxu0 0.0
    %589 = vmatprep.subr.mxu0 0.0
    %590 = vmatpush1.msra.mxu0 0.0
    %591 = vmatprep.subr.mxu0 0.0
    %592 = vmatpush1.msra.mxu0 0.0
    %593 = vmatprep.subr.mxu0 0.0
    %594 = vmatpush1.msra.mxu0 0.0
    %595 = vmatprep.subr.mxu0 0.0
    %596 = vmatpush1.msra.mxu0 0.0
    %597 = vmatprep.subr.mxu0 0.0
    %598 = vmatpush1.msra.mxu0 0.0
    %599 = vmatprep.subr.mxu0 0.0
    %600 = vmatpush1.msra.mxu0 0.0
    %601 = vmatprep.subr.mxu0 0.0
    %602 = vmatpush1.msra.mxu0 0.0
    %603 = vmatprep.subr.mxu0 0.0
    %604 = vmatpush1.msra.mxu0 0.0
    %605 = vmatprep.subr.mxu0 0.0
    %606 = vmatpush1.msra.mxu0 0.0
    %607 = vmatprep.subr.mxu0 0.0
    %608 = vmatpush1.msra.mxu0 %v185
    %609 = vmatprep.subr.mxu0 0.0
    %610 = vmatpush1.msra.mxu0 %v184
    %611 = vmatprep.subr.mxu0 0.0
    %612 = vmatpush2.msra.mxu0 0.0
    %613 = vmatprep.subr.mxu0 0.0
    %614 = vmatpush2.msra.mxu0 0.0
    %615 = vmatprep.subr.mxu0 0.0
    %616 = vmatpush2.msra.mxu0 0.0
    %617 = vmatprep.subr.mxu0 0.0
    %618 = vmatpush2.msra.mxu0 0.0
    %619 = vmatprep.subr.mxu0 0.0
    %620 = vmatpush2.msra.mxu0 0.0
    %621 = vmatprep.subr.mxu0 0.0
    %622 = vmatpush2.msra.mxu0 0.0
    %623 = vmatprep.subr.mxu0 0.0
    %624 = vmatpush2.msra.mxu0 0.0
    %625 = vmatprep.subr.mxu0 0.0
    %626 = vmatpush2.msra.mxu0 0.0
    %627 = vmatprep.subr.mxu0 0.0
    %628 = vmatpush2.msra.mxu0 0.0
    %629 = vmatprep.subr.mxu0 0.0
    %630 = vmatpush2.msra.mxu0 0.0
    %631 = vmatprep.subr.mxu0 0.0
    %632 = vmatpush2.msra.mxu0 0.0
    %633 = vmatprep.subr.mxu0 0.0
    %634 = vmatpush2.msra.mxu0 0.0
    %635 = vmatprep.subr.mxu0 0.0
    %636 = vmatpush2.msra.mxu0 0.0
    %637 = vmatprep.subr.mxu0 0.0
    %638 = vmatpush2.msra.mxu0 0.0
    %639 = vmatprep.subr.mxu0 0.0
    %640 = vmatpush2.msra.mxu0 0.0
    %641 = vmatprep.subr.mxu0 0.0
    %642 = vmatpush2.msra.mxu0 0.0
    %643 = vmatprep.mubr.f32.mxu0 0.0
    %644 = vmatmul.mubr.f32.gmra.mxu0 %v577
    %v645 = vpop.f32.mrf.mxu0
    %v646 = vadd.f32 %v573, %v645
    %v647 = vpop.f32.mrf.mxu0
    %648 = vdwg.mxu0
    %s649 = scalar_lea.vmem %s3, 176
    %v650 = vld [vmem:[%s649] sm:$0xff]
    %v651 = vld [vmem:[%s649 + $0x8] sm:$0xff]
    %v652 = vrot.slane %v171, 6
    %v653 = vsel %vm204, %v652, 0
    %655 = vmatprep.subr.mxu0 0.0
    %656 = vmatpush1.msra.mxu0 0.0
    %657 = vmatprep.subr.mxu0 0.0
    %658 = vmatpush1.msra.mxu0 0.0
    %659 = vmatprep.subr.mxu0 0.0
    %660 = vmatpush1.msra.mxu0 0.0
    %661 = vmatprep.subr.mxu0 0.0
    %662 = vmatpush1.msra.mxu0 0.0
    %663 = vmatprep.subr.mxu0 0.0
    %664 = vmatpush1.msra.mxu0 0.0
    %665 = vmatprep.subr.mxu0 0.0
    %666 = vmatpush1.msra.mxu0 0.0
    %667 = vmatprep.subr.mxu0 0.0
    %668 = vmatpush1.msra.mxu0 0.0
    %669 = vmatprep.subr.mxu0 0.0
    %670 = vmatpush1.msra.mxu0 0.0
    %671 = vmatprep.subr.mxu0 0.0
    %672 = vmatpush1.msra.mxu0 0.0
    %673 = vmatprep.subr.mxu0 0.0
    %674 = vmatpush1.msra.mxu0 0.0
    %675 = vmatprep.subr.mxu0 0.0
    %676 = vmatpush1.msra.mxu0 0.0
    %677 = vmatprep.subr.mxu0 0.0
    %678 = vmatpush1.msra.mxu0 0.0
    %679 = vmatprep.subr.mxu0 0.0
    %680 = vmatpush1.msra.mxu0 0.0
    %681 = vmatprep.subr.mxu0 0.0
    %682 = vmatpush1.msra.mxu0 0.0
    %683 = vmatprep.subr.mxu0 0.0
    %684 = vmatpush1.msra.mxu0 %v651
    %685 = vmatprep.subr.mxu0 0.0
    %686 = vmatpush1.msra.mxu0 %v650
    %687 = vmatprep.subr.mxu0 0.0
    %688 = vmatpush2.msra.mxu0 0.0
    %689 = vmatprep.subr.mxu0 0.0
    %690 = vmatpush2.msra.mxu0 0.0
    %691 = vmatprep.subr.mxu0 0.0
    %692 = vmatpush2.msra.mxu0 0.0
    %693 = vmatprep.subr.mxu0 0.0
    %694 = vmatpush2.msra.mxu0 0.0
    %695 = vmatprep.subr.mxu0 0.0
    %696 = vmatpush2.msra.mxu0 0.0
    %697 = vmatprep.subr.mxu0 0.0
    %698 = vmatpush2.msra.mxu0 0.0
    %699 = vmatprep.subr.mxu0 0.0
    %700 = vmatpush2.msra.mxu0 0.0
    %701 = vmatprep.subr.mxu0 0.0
    %702 = vmatpush2.msra.mxu0 0.0
    %703 = vmatprep.subr.mxu0 0.0
    %704 = vmatpush2.msra.mxu0 0.0
    %705 = vmatprep.subr.mxu0 0.0
    %706 = vmatpush2.msra.mxu0 0.0
    %707 = vmatprep.subr.mxu0 0.0
    %708 = vmatpush2.msra.mxu0 0.0
    %709 = vmatprep.subr.mxu0 0.0
    %710 = vmatpush2.msra.mxu0 0.0
    %711 = vmatprep.subr.mxu0 0.0
    %712 = vmatpush2.msra.mxu0 0.0
    %713 = vmatprep.subr.mxu0 0.0
    %714 = vmatpush2.msra.mxu0 0.0
    %715 = vmatprep.subr.mxu0 0.0
    %716 = vmatpush2.msra.mxu0 0.0
    %717 = vmatprep.subr.mxu0 0.0
    %718 = vmatpush2.msra.mxu0 0.0
    %719 = vmatprep.mubr.f32.mxu0 0.0
    %720 = vmatmul.mubr.f32.gmra.mxu0 %v653
    %v721 = vpop.f32.mrf.mxu0
    %v722 = vadd.f32 0.0, %v721
    %v723 = vpop.f32.mrf.mxu0
    %724 = vdwg.mxu0
    %v725 = vrot.slane %v169, 6
    %v726 = vsel %vm204, %v725, 0
    %728 = vmatprep.subr.mxu0 0.0
    %729 = vmatpush1.msra.mxu0 0.0
    %730 = vmatprep.subr.mxu0 0.0
    %731 = vmatpush1.msra.mxu0 0.0
    %732 = vmatprep.subr.mxu0 0.0
    %733 = vmatpush1.msra.mxu0 0.0
    %734 = vmatprep.subr.mxu0 0.0
    %735 = vmatpush1.msra.mxu0 0.0
    %736 = vmatprep.subr.mxu0 0.0
    %737 = vmatpush1.msra.mxu0 0.0
    %738 = vmatprep.subr.mxu0 0.0
    %739 = vmatpush1.msra.mxu0 0.0
    %740 = vmatprep.subr.mxu0 0.0
    %741 = vmatpush1.msra.mxu0 0.0
    %742 = vmatprep.subr.mxu0 0.0
    %743 = vmatpush1.msra.mxu0 0.0
    %744 = vmatprep.subr.mxu0 0.0
    %745 = vmatpush1.msra.mxu0 0.0
    %746 = vmatprep.subr.mxu0 0.0
    %747 = vmatpush1.msra.mxu0 0.0
    %748 = vmatprep.subr.mxu0 0.0
    %749 = vmatpush1.msra.mxu0 0.0
    %750 = vmatprep.subr.mxu0 0.0
    %751 = vmatpush1.msra.mxu0 0.0
    %752 = vmatprep.subr.mxu0 0.0
    %753 = vmatpush1.msra.mxu0 0.0
    %754 = vmatprep.subr.mxu0 0.0
    %755 = vmatpush1.msra.mxu0 0.0
    %756 = vmatprep.subr.mxu0 0.0
    %757 = vmatpush1.msra.mxu0 %v188
    %758 = vmatprep.subr.mxu0 0.0
    %759 = vmatpush1.msra.mxu0 %v187
    %760 = vmatprep.subr.mxu0 0.0
    %761 = vmatpush2.msra.mxu0 0.0
    %762 = vmatprep.subr.mxu0 0.0
    %763 = vmatpush2.msra.mxu0 0.0
    %764 = vmatprep.subr.mxu0 0.0
    %765 = vmatpush2.msra.mxu0 0.0
    %766 = vmatprep.subr.mxu0 0.0
    %767 = vmatpush2.msra.mxu0 0.0
    %768 = vmatprep.subr.mxu0 0.0
    %769 = vmatpush2.msra.mxu0 0.0
    %770 = vmatprep.subr.mxu0 0.0
    %771 = vmatpush2.msra.mxu0 0.0
    %772 = vmatprep.subr.mxu0 0.0
    %773 = vmatpush2.msra.mxu0 0.0
    %774 = vmatprep.subr.mxu0 0.0
    %775 = vmatpush2.msra.mxu0 0.0
    %776 = vmatprep.subr.mxu0 0.0
    %777 = vmatpush2.msra.mxu0 0.0
    %778 = vmatprep.subr.mxu0 0.0
    %779 = vmatpush2.msra.mxu0 0.0
    %780 = vmatprep.subr.mxu0 0.0
    %781 = vmatpush2.msra.mxu0 0.0
    %782 = vmatprep.subr.mxu0 0.0
    %783 = vmatpush2.msra.mxu0 0.0
    %784 = vmatprep.subr.mxu0 0.0
    %785 = vmatpush2.msra.mxu0 0.0
    %786 = vmatprep.subr.mxu0 0.0
    %787 = vmatpush2.msra.mxu0 0.0
    %788 = vmatprep.subr.mxu0 0.0
    %789 = vmatpush2.msra.mxu0 0.0
    %790 = vmatprep.subr.mxu0 0.0
    %791 = vmatpush2.msra.mxu0 0.0
    %792 = vmatprep.mubr.f32.mxu0 0.0
    %793 = vmatmul.mubr.f32.gmra.mxu0 %v726
    %v794 = vpop.f32.mrf.mxu0
    %v795 = vadd.f32 %v722, %v794
    %v796 = vpop.f32.mrf.mxu0
    %797 = vdwg.mxu0
    %s798 = scalar_lea.vmem %s3, 192
    %v799 = vld [vmem:[%s798] sm:$0xff]
    %v800 = vld [vmem:[%s798 + $0x8] sm:$0xff]
    %v802 = vsel %vm204, %v172, 0
    %804 = vmatprep.subr.mxu0 0.0
    %805 = vmatpush1.msra.mxu0 0.0
    %806 = vmatprep.subr.mxu0 0.0
    %807 = vmatpush1.msra.mxu0 0.0
    %808 = vmatprep.subr.mxu0 0.0
    %809 = vmatpush1.msra.mxu0 0.0
    %810 = vmatprep.subr.mxu0 0.0
    %811 = vmatpush1.msra.mxu0 0.0
    %812 = vmatprep.subr.mxu0 0.0
    %813 = vmatpush1.msra.mxu0 0.0
    %814 = vmatprep.subr.mxu0 0.0
    %815 = vmatpush1.msra.mxu0 0.0
    %816 = vmatprep.subr.mxu0 0.0
    %817 = vmatpush1.msra.mxu0 0.0
    %818 = vmatprep.subr.mxu0 0.0
    %819 = vmatpush1.msra.mxu0 0.0
    %820 = vmatprep.subr.mxu0 0.0
    %821 = vmatpush1.msra.mxu0 0.0
    %822 = vmatprep.subr.mxu0 0.0
    %823 = vmatpush1.msra.mxu0 0.0
    %824 = vmatprep.subr.mxu0 0.0
    %825 = vmatpush1.msra.mxu0 0.0
    %826 = vmatprep.subr.mxu0 0.0
    %827 = vmatpush1.msra.mxu0 0.0
    %828 = vmatprep.subr.mxu0 0.0
    %829 = vmatpush1.msra.mxu0 0.0
    %830 = vmatprep.subr.mxu0 0.0
    %831 = vmatpush1.msra.mxu0 0.0
    %832 = vmatprep.subr.mxu0 0.0
    %833 = vmatpush1.msra.mxu0 %v800
    %834 = vmatprep.subr.mxu0 0.0
    %835 = vmatpush1.msra.mxu0 %v799
    %836 = vmatprep.subr.mxu0 0.0
    %837 = vmatpush2.msra.mxu0 0.0
    %838 = vmatprep.subr.mxu0 0.0
    %839 = vmatpush2.msra.mxu0 0.0
    %840 = vmatprep.subr.mxu0 0.0
    %841 = vmatpush2.msra.mxu0 0.0
    %842 = vmatprep.subr.mxu0 0.0
    %843 = vmatpush2.msra.mxu0 0.0
    %844 = vmatprep.subr.mxu0 0.0
    %845 = vmatpush2.msra.mxu0 0.0
    %846 = vmatprep.subr.mxu0 0.0
    %847 = vmatpush2.msra.mxu0 0.0
    %848 = vmatprep.subr.mxu0 0.0
    %849 = vmatpush2.msra.mxu0 0.0
    %850 = vmatprep.subr.mxu0 0.0
    %851 = vmatpush2.msra.mxu0 0.0
    %852 = vmatprep.subr.mxu0 0.0
    %853 = vmatpush2.msra.mxu0 0.0
    %854 = vmatprep.subr.mxu0 0.0
    %855 = vmatpush2.msra.mxu0 0.0
    %856 = vmatprep.subr.mxu0 0.0
    %857 = vmatpush2.msra.mxu0 0.0
    %858 = vmatprep.subr.mxu0 0.0
    %859 = vmatpush2.msra.mxu0 0.0
    %860 = vmatprep.subr.mxu0 0.0
    %861 = vmatpush2.msra.mxu0 0.0
    %862 = vmatprep.subr.mxu0 0.0
    %863 = vmatpush2.msra.mxu0 0.0
    %864 = vmatprep.subr.mxu0 0.0
    %865 = vmatpush2.msra.mxu0 0.0
    %866 = vmatprep.subr.mxu0 0.0
    %867 = vmatpush2.msra.mxu0 0.0
    %868 = vmatprep.mubr.f32.mxu0 0.0
    %869 = vmatmul.mubr.f32.gmra.mxu0 %v802
    %v870 = vpop.f32.mrf.mxu0
    %v871 = vadd.f32 0.0, %v870
    %v872 = vpop.f32.mrf.mxu0
    %873 = vdwg.mxu0
    %v875 = vsel %vm204, %v170, 0
    %877 = vmatprep.subr.mxu0 0.0
    %878 = vmatpush1.msra.mxu0 0.0
    %879 = vmatprep.subr.mxu0 0.0
    %880 = vmatpush1.msra.mxu0 0.0
    %881 = vmatprep.subr.mxu0 0.0
    %882 = vmatpush1.msra.mxu0 0.0
    %883 = vmatprep.subr.mxu0 0.0
    %884 = vmatpush1.msra.mxu0 0.0
    %885 = vmatprep.subr.mxu0 0.0
    %886 = vmatpush1.msra.mxu0 0.0
    %887 = vmatprep.subr.mxu0 0.0
    %888 = vmatpush1.msra.mxu0 0.0
    %889 = vmatprep.subr.mxu0 0.0
    %890 = vmatpush1.msra.mxu0 0.0
    %891 = vmatprep.subr.mxu0 0.0
    %892 = vmatpush1.msra.mxu0 0.0
    %893 = vmatprep.subr.mxu0 0.0
    %894 = vmatpush1.msra.mxu0 0.0
    %895 = vmatprep.subr.mxu0 0.0
    %896 = vmatpush1.msra.mxu0 0.0
    %897 = vmatprep.subr.mxu0 0.0
    %898 = vmatpush1.msra.mxu0 0.0
    %899 = vmatprep.subr.mxu0 0.0
    %900 = vmatpush1.msra.mxu0 0.0
    %901 = vmatprep.subr.mxu0 0.0
    %902 = vmatpush1.msra.mxu0 0.0
    %903 = vmatprep.subr.mxu0 0.0
    %904 = vmatpush1.msra.mxu0 0.0
    %905 = vmatprep.subr.mxu0 0.0
    %906 = vmatpush1.msra.mxu0 %v191
    %907 = vmatprep.subr.mxu0 0.0
    %908 = vmatpush1.msra.mxu0 %v190
    %909 = vmatprep.subr.mxu0 0.0
    %910 = vmatpush2.msra.mxu0 0.0
    %911 = vmatprep.subr.mxu0 0.0
    %912 = vmatpush2.msra.mxu0 0.0
    %913 = vmatprep.subr.mxu0 0.0
    %914 = vmatpush2.msra.mxu0 0.0
    %915 = vmatprep.subr.mxu0 0.0
    %916 = vmatpush2.msra.mxu0 0.0
    %917 = vmatprep.subr.mxu0 0.0
    %918 = vmatpush2.msra.mxu0 0.0
    %919 = vmatprep.subr.mxu0 0.0
    %920 = vmatpush2.msra.mxu0 0.0
    %921 = vmatprep.subr.mxu0 0.0
    %922 = vmatpush2.msra.mxu0 0.0
    %923 = vmatprep.subr.mxu0 0.0
    %924 = vmatpush2.msra.mxu0 0.0
    %925 = vmatprep.subr.mxu0 0.0
    %926 = vmatpush2.msra.mxu0 0.0
    %927 = vmatprep.subr.mxu0 0.0
    %928 = vmatpush2.msra.mxu0 0.0
    %929 = vmatprep.subr.mxu0 0.0
    %930 = vmatpush2.msra.mxu0 0.0
    %931 = vmatprep.subr.mxu0 0.0
    %932 = vmatpush2.msra.mxu0 0.0
    %933 = vmatprep.subr.mxu0 0.0
    %934 = vmatpush2.msra.mxu0 0.0
    %935 = vmatprep.subr.mxu0 0.0
    %936 = vmatpush2.msra.mxu0 0.0
    %937 = vmatprep.subr.mxu0 0.0
    %938 = vmatpush2.msra.mxu0 0.0
    %939 = vmatprep.subr.mxu0 0.0
    %940 = vmatpush2.msra.mxu0 0.0
    %941 = vmatprep.mubr.f32.mxu0 0.0
    %942 = vmatmul.mubr.f32.gmra.mxu0 %v875
    %v943 = vpop.f32.mrf.mxu0
    %v944 = vadd.f32 %v871, %v943
    %v945 = vpop.f32.mrf.mxu0
    %946 = vdwg.mxu0
    %s947 = scalar_lea.vmem %s3, 208
    %v948 = vld [vmem:[%s947] sm:$0xff]
    %v949 = vld [vmem:[%s947 + $0x8] sm:$0xff]
    %v950 = vrot.slane %v172, 2
    %v951 = vsel %vm204, %v950, 0
    %953 = vmatprep.subr.mxu0 0.0
    %954 = vmatpush1.msra.mxu0 0.0
    %955 = vmatprep.subr.mxu0 0.0
    %956 = vmatpush1.msra.mxu0 0.0
    %957 = vmatprep.subr.mxu0 0.0
    %958 = vmatpush1.msra.mxu0 0.0
    %959 = vmatprep.subr.mxu0 0.0
    %960 = vmatpush1.msra.mxu0 0.0
    %961 = vmatprep.subr.mxu0 0.0
    %962 = vmatpush1.msra.mxu0 0.0
    %963 = vmatprep.subr.mxu0 0.0
    %964 = vmatpush1.msra.mxu0 0.0
    %965 = vmatprep.subr.mxu0 0.0
    %966 = vmatpush1.msra.mxu0 0.0
    %967 = vmatprep.subr.mxu0 0.0
    %968 = vmatpush1.msra.mxu0 0.0
    %969 = vmatprep.subr.mxu0 0.0
    %970 = vmatpush1.msra.mxu0 0.0
    %971 = vmatprep.subr.mxu0 0.0
    %972 = vmatpush1.msra.mxu0 0.0
    %973 = vmatprep.subr.mxu0 0.0
    %974 = vmatpush1.msra.mxu0 0.0
    %975 = vmatprep.subr.mxu0 0.0
    %976 = vmatpush1.msra.mxu0 0.0
    %977 = vmatprep.subr.mxu0 0.0
    %978 = vmatpush1.msra.mxu0 0.0
    %979 = vmatprep.subr.mxu0 0.0
    %980 = vmatpush1.msra.mxu0 0.0
    %981 = vmatprep.subr.mxu0 0.0
    %982 = vmatpush1.msra.mxu0 %v949
    %983 = vmatprep.subr.mxu0 0.0
    %984 = vmatpush1.msra.mxu0 %v948
    %985 = vmatprep.subr.mxu0 0.0
    %986 = vmatpush2.msra.mxu0 0.0
    %987 = vmatprep.subr.mxu0 0.0
    %988 = vmatpush2.msra.mxu0 0.0
    %989 = vmatprep.subr.mxu0 0.0
    %990 = vmatpush2.msra.mxu0 0.0
    %991 = vmatprep.subr.mxu0 0.0
    %992 = vmatpush2.msra.mxu0 0.0
    %993 = vmatprep.subr.mxu0 0.0
    %994 = vmatpush2.msra.mxu0 0.0
    %995 = vmatprep.subr.mxu0 0.0
    %996 = vmatpush2.msra.mxu0 0.0
    %997 = vmatprep.subr.mxu0 0.0
    %998 = vmatpush2.msra.mxu0 0.0
    %999 = vmatprep.subr.mxu0 0.0
    %1000 = vmatpush2.msra.mxu0 0.0
    %1001 = vmatprep.subr.mxu0 0.0
    %1002 = vmatpush2.msra.mxu0 0.0
    %1003 = vmatprep.subr.mxu0 0.0
    %1004 = vmatpush2.msra.mxu0 0.0
    %1005 = vmatprep.subr.mxu0 0.0
    %1006 = vmatpush2.msra.mxu0 0.0
    %1007 = vmatprep.subr.mxu0 0.0
    %1008 = vmatpush2.msra.mxu0 0.0
    %1009 = vmatprep.subr.mxu0 0.0
    %1010 = vmatpush2.msra.mxu0 0.0
    %1011 = vmatprep.subr.mxu0 0.0
    %1012 = vmatpush2.msra.mxu0 0.0
    %1013 = vmatprep.subr.mxu0 0.0
    %1014 = vmatpush2.msra.mxu0 0.0
    %1015 = vmatprep.subr.mxu0 0.0
    %1016 = vmatpush2.msra.mxu0 0.0
    %1017 = vmatprep.mubr.f32.mxu0 0.0
    %1018 = vmatmul.mubr.f32.gmra.mxu0 %v951
    %v1019 = vpop.f32.mrf.mxu0
    %v1020 = vadd.f32 0.0, %v1019
    %v1021 = vpop.f32.mrf.mxu0
    %1022 = vdwg.mxu0
    %v1023 = vrot.slane %v170, 2
    %v1024 = vsel %vm204, %v1023, 0
    %1026 = vmatprep.subr.mxu0 0.0
    %1027 = vmatpush1.msra.mxu0 0.0
    %1028 = vmatprep.subr.mxu0 0.0
    %1029 = vmatpush1.msra.mxu0 0.0
    %1030 = vmatprep.subr.mxu0 0.0
    %1031 = vmatpush1.msra.mxu0 0.0
    %1032 = vmatprep.subr.mxu0 0.0
    %1033 = vmatpush1.msra.mxu0 0.0
    %1034 = vmatprep.subr.mxu0 0.0
    %1035 = vmatpush1.msra.mxu0 0.0
    %1036 = vmatprep.subr.mxu0 0.0
    %1037 = vmatpush1.msra.mxu0 0.0
    %1038 = vmatprep.subr.mxu0 0.0
    %1039 = vmatpush1.msra.mxu0 0.0
    %1040 = vmatprep.subr.mxu0 0.0
    %1041 = vmatpush1.msra.mxu0 0.0
    %1042 = vmatprep.subr.mxu0 0.0
    %1043 = vmatpush1.msra.mxu0 0.0
    %1044 = vmatprep.subr.mxu0 0.0
    %1045 = vmatpush1.msra.mxu0 0.0
    %1046 = vmatprep.subr.mxu0 0.0
    %1047 = vmatpush1.msra.mxu0 0.0
    %1048 = vmatprep.subr.mxu0 0.0
    %1049 = vmatpush1.msra.mxu0 0.0
    %1050 = vmatprep.subr.mxu0 0.0
    %1051 = vmatpush1.msra.mxu0 0.0
    %1052 = vmatprep.subr.mxu0 0.0
    %1053 = vmatpush1.msra.mxu0 0.0
    %1054 = vmatprep.subr.mxu0 0.0
    %1055 = vmatpush1.msra.mxu0 %v194
    %1056 = vmatprep.subr.mxu0 0.0
    %1057 = vmatpush1.msra.mxu0 %v193
    %1058 = vmatprep.subr.mxu0 0.0
    %1059 = vmatpush2.msra.mxu0 0.0
    %1060 = vmatprep.subr.mxu0 0.0
    %1061 = vmatpush2.msra.mxu0 0.0
    %1062 = vmatprep.subr.mxu0 0.0
    %1063 = vmatpush2.msra.mxu0 0.0
    %1064 = vmatprep.subr.mxu0 0.0
    %1065 = vmatpush2.msra.mxu0 0.0
    %1066 = vmatprep.subr.mxu0 0.0
    %1067 = vmatpush2.msra.mxu0 0.0
    %1068 = vmatprep.subr.mxu0 0.0
    %1069 = vmatpush2.msra.mxu0 0.0
    %1070 = vmatprep.subr.mxu0 0.0
    %1071 = vmatpush2.msra.mxu0 0.0
    %1072 = vmatprep.subr.mxu0 0.0
    %1073 = vmatpush2.msra.mxu0 0.0
    %1074 = vmatprep.subr.mxu0 0.0
    %1075 = vmatpush2.msra.mxu0 0.0
    %1076 = vmatprep.subr.mxu0 0.0
    %1077 = vmatpush2.msra.mxu0 0.0
    %1078 = vmatprep.subr.mxu0 0.0
    %1079 = vmatpush2.msra.mxu0 0.0
    %1080 = vmatprep.subr.mxu0 0.0
    %1081 = vmatpush2.msra.mxu0 0.0
    %1082 = vmatprep.subr.mxu0 0.0
    %1083 = vmatpush2.msra.mxu0 0.0
    %1084 = vmatprep.subr.mxu0 0.0
    %1085 = vmatpush2.msra.mxu0 0.0
    %1086 = vmatprep.subr.mxu0 0.0
    %1087 = vmatpush2.msra.mxu0 0.0
    %1088 = vmatprep.subr.mxu0 0.0
    %1089 = vmatpush2.msra.mxu0 0.0
    %1090 = vmatprep.mubr.f32.mxu0 0.0
    %1091 = vmatmul.mubr.f32.gmra.mxu0 %v1024
    %v1092 = vpop.f32.mrf.mxu0
    %v1093 = vadd.f32 %v1020, %v1092
    %v1094 = vpop.f32.mrf.mxu0
    %1095 = vdwg.mxu0
    %s1096 = scalar_lea.vmem %s3, 224
    %v1097 = vld [vmem:[%s1096] sm:$0xff]
    %v1098 = vld [vmem:[%s1096 + $0x8] sm:$0xff]
    %v1099 = vrot.slane %v172, 4
    %v1100 = vsel %vm204, %v1099, 0
    %1102 = vmatprep.subr.mxu0 0.0
    %1103 = vmatpush1.msra.mxu0 0.0
    %1104 = vmatprep.subr.mxu0 0.0
    %1105 = vmatpush1.msra.mxu0 0.0
    %1106 = vmatprep.subr.mxu0 0.0
    %1107 = vmatpush1.msra.mxu0 0.0
    %1108 = vmatprep.subr.mxu0 0.0
    %1109 = vmatpush1.msra.mxu0 0.0
    %1110 = vmatprep.subr.mxu0 0.0
    %1111 = vmatpush1.msra.mxu0 0.0
    %1112 = vmatprep.subr.mxu0 0.0
    %1113 = vmatpush1.msra.mxu0 0.0
    %1114 = vmatprep.subr.mxu0 0.0
    %1115 = vmatpush1.msra.mxu0 0.0
    %1116 = vmatprep.subr.mxu0 0.0
    %1117 = vmatpush1.msra.mxu0 0.0
    %1118 = vmatprep.subr.mxu0 0.0
    %1119 = vmatpush1.msra.mxu0 0.0
    %1120 = vmatprep.subr.mxu0 0.0
    %1121 = vmatpush1.msra.mxu0 0.0
    %1122 = vmatprep.subr.mxu0 0.0
    %1123 = vmatpush1.msra.mxu0 0.0
    %1124 = vmatprep.subr.mxu0 0.0
    %1125 = vmatpush1.msra.mxu0 0.0
    %1126 = vmatprep.subr.mxu0 0.0
    %1127 = vmatpush1.msra.mxu0 0.0
    %1128 = vmatprep.subr.mxu0 0.0
    %1129 = vmatpush1.msra.mxu0 0.0
    %1130 = vmatprep.subr.mxu0 0.0
    %1131 = vmatpush1.msra.mxu0 %v1098
    %1132 = vmatprep.subr.mxu0 0.0
    %1133 = vmatpush1.msra.mxu0 %v1097
    %1134 = vmatprep.subr.mxu0 0.0
    %1135 = vmatpush2.msra.mxu0 0.0
    %1136 = vmatprep.subr.mxu0 0.0
    %1137 = vmatpush2.msra.mxu0 0.0
    %1138 = vmatprep.subr.mxu0 0.0
    %1139 = vmatpush2.msra.mxu0 0.0
    %1140 = vmatprep.subr.mxu0 0.0
    %1141 = vmatpush2.msra.mxu0 0.0
    %1142 = vmatprep.subr.mxu0 0.0
    %1143 = vmatpush2.msra.mxu0 0.0
    %1144 = vmatprep.subr.mxu0 0.0
    %1145 = vmatpush2.msra.mxu0 0.0
    %1146 = vmatprep.subr.mxu0 0.0
    %1147 = vmatpush2.msra.mxu0 0.0
    %1148 = vmatprep.subr.mxu0 0.0
    %1149 = vmatpush2.msra.mxu0 0.0
    %1150 = vmatprep.subr.mxu0 0.0
    %1151 = vmatpush2.msra.mxu0 0.0
    %1152 = vmatprep.subr.mxu0 0.0
    %1153 = vmatpush2.msra.mxu0 0.0
    %1154 = vmatprep.subr.mxu0 0.0
    %1155 = vmatpush2.msra.mxu0 0.0
    %1156 = vmatprep.subr.mxu0 0.0
    %1157 = vmatpush2.msra.mxu0 0.0
    %1158 = vmatprep.subr.mxu0 0.0
    %1159 = vmatpush2.msra.mxu0 0.0
    %1160 = vmatprep.subr.mxu0 0.0
    %1161 = vmatpush2.msra.mxu0 0.0
    %1162 = vmatprep.subr.mxu0 0.0
    %1163 = vmatpush2.msra.mxu0 0.0
    %1164 = vmatprep.subr.mxu0 0.0
    %1165 = vmatpush2.msra.mxu0 0.0
    %1166 = vmatprep.mubr.f32.mxu0 0.0
    %1167 = vmatmul.mubr.f32.gmra.mxu0 %v1100
    %v1168 = vpop.f32.mrf.mxu0
    %v1169 = vadd.f32 0.0, %v1168
    %v1170 = vpop.f32.mrf.mxu0
    %1171 = vdwg.mxu0
    %v1172 = vrot.slane %v170, 4
    %v1173 = vsel %vm204, %v1172, 0
    %1175 = vmatprep.subr.mxu0 0.0
    %1176 = vmatpush1.msra.mxu0 0.0
    %1177 = vmatprep.subr.mxu0 0.0
    %1178 = vmatpush1.msra.mxu0 0.0
    %1179 = vmatprep.subr.mxu0 0.0
    %1180 = vmatpush1.msra.mxu0 0.0
    %1181 = vmatprep.subr.mxu0 0.0
    %1182 = vmatpush1.msra.mxu0 0.0
    %1183 = vmatprep.subr.mxu0 0.0
    %1184 = vmatpush1.msra.mxu0 0.0
    %1185 = vmatprep.subr.mxu0 0.0
    %1186 = vmatpush1.msra.mxu0 0.0
    %1187 = vmatprep.subr.mxu0 0.0
    %1188 = vmatpush1.msra.mxu0 0.0
    %1189 = vmatprep.subr.mxu0 0.0
    %1190 = vmatpush1.msra.mxu0 0.0
    %1191 = vmatprep.subr.mxu0 0.0
    %1192 = vmatpush1.msra.mxu0 0.0
    %1193 = vmatprep.subr.mxu0 0.0
    %1194 = vmatpush1.msra.mxu0 0.0
    %1195 = vmatprep.subr.mxu0 0.0
    %1196 = vmatpush1.msra.mxu0 0.0
    %1197 = vmatprep.subr.mxu0 0.0
    %1198 = vmatpush1.msra.mxu0 0.0
    %1199 = vmatprep.subr.mxu0 0.0
    %1200 = vmatpush1.msra.mxu0 0.0
    %1201 = vmatprep.subr.mxu0 0.0
    %1202 = vmatpush1.msra.mxu0 0.0
    %1203 = vmatprep.subr.mxu0 0.0
    %1204 = vmatpush1.msra.mxu0 %v197
    %1205 = vmatprep.subr.mxu0 0.0
    %1206 = vmatpush1.msra.mxu0 %v196
    %1207 = vmatprep.subr.mxu0 0.0
    %1208 = vmatpush2.msra.mxu0 0.0
    %1209 = vmatprep.subr.mxu0 0.0
    %1210 = vmatpush2.msra.mxu0 0.0
    %1211 = vmatprep.subr.mxu0 0.0
    %1212 = vmatpush2.msra.mxu0 0.0
    %1213 = vmatprep.subr.mxu0 0.0
    %1214 = vmatpush2.msra.mxu0 0.0
    %1215 = vmatprep.subr.mxu0 0.0
    %1216 = vmatpush2.msra.mxu0 0.0
    %1217 = vmatprep.subr.mxu0 0.0
    %1218 = vmatpush2.msra.mxu0 0.0
    %1219 = vmatprep.subr.mxu0 0.0
    %1220 = vmatpush2.msra.mxu0 0.0
    %1221 = vmatprep.subr.mxu0 0.0
    %1222 = vmatpush2.msra.mxu0 0.0
    %1223 = vmatprep.subr.mxu0 0.0
    %1224 = vmatpush2.msra.mxu0 0.0
    %1225 = vmatprep.subr.mxu0 0.0
    %1226 = vmatpush2.msra.mxu0 0.0
    %1227 = vmatprep.subr.mxu0 0.0
    %1228 = vmatpush2.msra.mxu0 0.0
    %1229 = vmatprep.subr.mxu0 0.0
    %1230 = vmatpush2.msra.mxu0 0.0
    %1231 = vmatprep.subr.mxu0 0.0
    %1232 = vmatpush2.msra.mxu0 0.0
    %1233 = vmatprep.subr.mxu0 0.0
    %1234 = vmatpush2.msra.mxu0 0.0
    %1235 = vmatprep.subr.mxu0 0.0
    %1236 = vmatpush2.msra.mxu0 0.0
    %1237 = vmatprep.subr.mxu0 0.0
    %1238 = vmatpush2.msra.mxu0 0.0
    %1239 = vmatprep.mubr.f32.mxu0 0.0
    %1240 = vmatmul.mubr.f32.gmra.mxu0 %v1173
    %v1241 = vpop.f32.mrf.mxu0
    %v1242 = vadd.f32 %v1169, %v1241
    %v1243 = vpop.f32.mrf.mxu0
    %1244 = vdwg.mxu0
    %s1245 = scalar_lea.vmem %s3, 240
    %v1246 = vld [vmem:[%s1245] sm:$0xff]
    %v1247 = vld [vmem:[%s1245 + $0x8] sm:$0xff]
    %v1248 = vrot.slane %v172, 6
    %v1249 = vsel %vm204, %v1248, 0
    %1251 = vmatprep.subr.mxu0 0.0
    %1252 = vmatpush1.msra.mxu0 0.0
    %1253 = vmatprep.subr.mxu0 0.0
    %1254 = vmatpush1.msra.mxu0 0.0
    %1255 = vmatprep.subr.mxu0 0.0
    %1256 = vmatpush1.msra.mxu0 0.0
    %1257 = vmatprep.subr.mxu0 0.0
    %1258 = vmatpush1.msra.mxu0 0.0
    %1259 = vmatprep.subr.mxu0 0.0
    %1260 = vmatpush1.msra.mxu0 0.0
    %1261 = vmatprep.subr.mxu0 0.0
    %1262 = vmatpush1.msra.mxu0 0.0
    %1263 = vmatprep.subr.mxu0 0.0
    %1264 = vmatpush1.msra.mxu0 0.0
    %1265 = vmatprep.subr.mxu0 0.0
    %1266 = vmatpush1.msra.mxu0 0.0
    %1267 = vmatprep.subr.mxu0 0.0
    %1268 = vmatpush1.msra.mxu0 0.0
    %1269 = vmatprep.subr.mxu0 0.0
    %1270 = vmatpush1.msra.mxu0 0.0
    %1271 = vmatprep.subr.mxu0 0.0
    %1272 = vmatpush1.msra.mxu0 0.0
    %1273 = vmatprep.subr.mxu0 0.0
    %1274 = vmatpush1.msra.mxu0 0.0
    %1275 = vmatprep.subr.mxu0 0.0
    %1276 = vmatpush1.msra.mxu0 0.0
    %1277 = vmatprep.subr.mxu0 0.0
    %1278 = vmatpush1.msra.mxu0 0.0
    %1279 = vmatprep.subr.mxu0 0.0
    %1280 = vmatpush1.msra.mxu0 %v1247
    %1281 = vmatprep.subr.mxu0 0.0
    %1282 = vmatpush1.msra.mxu0 %v1246
    %1283 = vmatprep.subr.mxu0 0.0
    %1284 = vmatpush2.msra.mxu0 0.0
    %1285 = vmatprep.subr.mxu0 0.0
    %1286 = vmatpush2.msra.mxu0 0.0
    %1287 = vmatprep.subr.mxu0 0.0
    %1288 = vmatpush2.msra.mxu0 0.0
    %1289 = vmatprep.subr.mxu0 0.0
    %1290 = vmatpush2.msra.mxu0 0.0
    %1291 = vmatprep.subr.mxu0 0.0
    %1292 = vmatpush2.msra.mxu0 0.0
    %1293 = vmatprep.subr.mxu0 0.0
    %1294 = vmatpush2.msra.mxu0 0.0
    %1295 = vmatprep.subr.mxu0 0.0
    %1296 = vmatpush2.msra.mxu0 0.0
    %1297 = vmatprep.subr.mxu0 0.0
    %1298 = vmatpush2.msra.mxu0 0.0
    %1299 = vmatprep.subr.mxu0 0.0
    %1300 = vmatpush2.msra.mxu0 0.0
    %1301 = vmatprep.subr.mxu0 0.0
    %1302 = vmatpush2.msra.mxu0 0.0
    %1303 = vmatprep.subr.mxu0 0.0
    %1304 = vmatpush2.msra.mxu0 0.0
    %1305 = vmatprep.subr.mxu0 0.0
    %1306 = vmatpush2.msra.mxu0 0.0
    %1307 = vmatprep.subr.mxu0 0.0
    %1308 = vmatpush2.msra.mxu0 0.0
    %1309 = vmatprep.subr.mxu0 0.0
    %1310 = vmatpush2.msra.mxu0 0.0
    %1311 = vmatprep.subr.mxu0 0.0
    %1312 = vmatpush2.msra.mxu0 0.0
    %1313 = vmatprep.subr.mxu0 0.0
    %1314 = vmatpush2.msra.mxu0 0.0
    %1315 = vmatprep.mubr.f32.mxu0 0.0
    %1316 = vmatmul.mubr.f32.gmra.mxu0 %v1249
    %v1317 = vpop.f32.mrf.mxu0
    %v1318 = vadd.f32 0.0, %v1317
    %v1319 = vpop.f32.mrf.mxu0
    %1320 = vdwg.mxu0
    %v1321 = vrot.slane %v170, 6
    %v1322 = vsel %vm204, %v1321, 0
    %1324 = vmatprep.subr.mxu0 0.0
    %1325 = vmatpush1.msra.mxu0 0.0
    %1326 = vmatprep.subr.mxu0 0.0
    %1327 = vmatpush1.msra.mxu0 0.0
    %1328 = vmatprep.subr.mxu0 0.0
    %1329 = vmatpush1.msra.mxu0 0.0
    %1330 = vmatprep.subr.mxu0 0.0
    %1331 = vmatpush1.msra.mxu0 0.0
    %1332 = vmatprep.subr.mxu0 0.0
    %1333 = vmatpush1.msra.mxu0 0.0
    %1334 = vmatprep.subr.mxu0 0.0
    %1335 = vmatpush1.msra.mxu0 0.0
    %1336 = vmatprep.subr.mxu0 0.0
    %1337 = vmatpush1.msra.mxu0 0.0
    %1338 = vmatprep.subr.mxu0 0.0
    %1339 = vmatpush1.msra.mxu0 0.0
    %1340 = vmatprep.subr.mxu0 0.0
    %1341 = vmatpush1.msra.mxu0 0.0
    %1342 = vmatprep.subr.mxu0 0.0
    %1343 = vmatpush1.msra.mxu0 0.0
    %1344 = vmatprep.subr.mxu0 0.0
    %1345 = vmatpush1.msra.mxu0 0.0
    %1346 = vmatprep.subr.mxu0 0.0
    %1347 = vmatpush1.msra.mxu0 0.0
    %1348 = vmatprep.subr.mxu0 0.0
    %1349 = vmatpush1.msra.mxu0 0.0
    %1350 = vmatprep.subr.mxu0 0.0
    %1351 = vmatpush1.msra.mxu0 0.0
    %1352 = vmatprep.subr.mxu0 0.0
    %1353 = vmatpush1.msra.mxu0 %v200
    %1354 = vmatprep.subr.mxu0 0.0
    %1355 = vmatpush1.msra.mxu0 %v199
    %1356 = vmatprep.subr.mxu0 0.0
    %1357 = vmatpush2.msra.mxu0 0.0
    %1358 = vmatprep.subr.mxu0 0.0
    %1359 = vmatpush2.msra.mxu0 0.0
    %1360 = vmatprep.subr.mxu0 0.0
    %1361 = vmatpush2.msra.mxu0 0.0
    %1362 = vmatprep.subr.mxu0 0.0
    %1363 = vmatpush2.msra.mxu0 0.0
    %1364 = vmatprep.subr.mxu0 0.0
    %1365 = vmatpush2.msra.mxu0 0.0
    %1366 = vmatprep.subr.mxu0 0.0
    %1367 = vmatpush2.msra.mxu0 0.0
    %1368 = vmatprep.subr.mxu0 0.0
    %1369 = vmatpush2.msra.mxu0 0.0
    %1370 = vmatprep.subr.mxu0 0.0
    %1371 = vmatpush2.msra.mxu0 0.0
    %1372 = vmatprep.subr.mxu0 0.0
    %1373 = vmatpush2.msra.mxu0 0.0
    %1374 = vmatprep.subr.mxu0 0.0
    %1375 = vmatpush2.msra.mxu0 0.0
    %1376 = vmatprep.subr.mxu0 0.0
    %1377 = vmatpush2.msra.mxu0 0.0
    %1378 = vmatprep.subr.mxu0 0.0
    %1379 = vmatpush2.msra.mxu0 0.0
    %1380 = vmatprep.subr.mxu0 0.0
    %1381 = vmatpush2.msra.mxu0 0.0
    %1382 = vmatprep.subr.mxu0 0.0
    %1383 = vmatpush2.msra.mxu0 0.0
    %1384 = vmatprep.subr.mxu0 0.0
    %1385 = vmatpush2.msra.mxu0 0.0
    %1386 = vmatprep.subr.mxu0 0.0
    %1387 = vmatpush2.msra.mxu0 0.0
    %1388 = vmatprep.mubr.f32.mxu0 0.0
    %1389 = vmatmul.mubr.f32.gmra.mxu0 %v1322
    %v1390 = vpop.f32.mrf.mxu0
    %v1391 = vadd.f32 %v1318, %v1390
    %v1392 = vpop.f32.mrf.mxu0
    %1393 = vdwg.mxu0
    %s1394 = scalar_lea.vmem %s3, 256
    %v1395 = vld [vmem:[%s1394] sm:$0xff]
    %v1396 = vld [vmem:[%s1394 + $0x8] sm:$0xff]
    %v1398 = vsel %vm204, %v173, 0
    %1400 = vmatprep.subr.mxu0 0.0
    %1401 = vmatpush1.msra.mxu0 0.0
    %1402 = vmatprep.subr.mxu0 0.0
    %1403 = vmatpush1.msra.mxu0 0.0
    %1404 = vmatprep.subr.mxu0 0.0
    %1405 = vmatpush1.msra.mxu0 0.0
    %1406 = vmatprep.subr.mxu0 0.0
    %1407 = vmatpush1.msra.mxu0 0.0
    %1408 = vmatprep.subr.mxu0 0.0
    %1409 = vmatpush1.msra.mxu0 0.0
    %1410 = vmatprep.subr.mxu0 0.0
    %1411 = vmatpush1.msra.mxu0 0.0
    %1412 = vmatprep.subr.mxu0 0.0
    %1413 = vmatpush1.msra.mxu0 0.0
    %1414 = vmatprep.subr.mxu0 0.0
    %1415 = vmatpush1.msra.mxu0 0.0
    %1416 = vmatprep.subr.mxu0 0.0
    %1417 = vmatpush1.msra.mxu0 0.0
    %1418 = vmatprep.subr.mxu0 0.0
    %1419 = vmatpush1.msra.mxu0 0.0
    %1420 = vmatprep.subr.mxu0 0.0
    %1421 = vmatpush1.msra.mxu0 0.0
    %1422 = vmatprep.subr.mxu0 0.0
    %1423 = vmatpush1.msra.mxu0 0.0
    %1424 = vmatprep.subr.mxu0 0.0
    %1425 = vmatpush1.msra.mxu0 0.0
    %1426 = vmatprep.subr.mxu0 0.0
    %1427 = vmatpush1.msra.mxu0 0.0
    %1428 = vmatprep.subr.mxu0 0.0
    %1429 = vmatpush1.msra.mxu0 %v1396
    %1430 = vmatprep.subr.mxu0 0.0
    %1431 = vmatpush1.msra.mxu0 %v1395
    %1432 = vmatprep.subr.mxu0 0.0
    %1433 = vmatpush2.msra.mxu0 0.0
    %1434 = vmatprep.subr.mxu0 0.0
    %1435 = vmatpush2.msra.mxu0 0.0
    %1436 = vmatprep.subr.mxu0 0.0
    %1437 = vmatpush2.msra.mxu0 0.0
    %1438 = vmatprep.subr.mxu0 0.0
    %1439 = vmatpush2.msra.mxu0 0.0
    %1440 = vmatprep.subr.mxu0 0.0
    %1441 = vmatpush2.msra.mxu0 0.0
    %1442 = vmatprep.subr.mxu0 0.0
    %1443 = vmatpush2.msra.mxu0 0.0
    %1444 = vmatprep.subr.mxu0 0.0
    %1445 = vmatpush2.msra.mxu0 0.0
    %1446 = vmatprep.subr.mxu0 0.0
    %1447 = vmatpush2.msra.mxu0 0.0
    %1448 = vmatprep.subr.mxu0 0.0
    %1449 = vmatpush2.msra.mxu0 0.0
    %1450 = vmatprep.subr.mxu0 0.0
    %1451 = vmatpush2.msra.mxu0 0.0
    %1452 = vmatprep.subr.mxu0 0.0
    %1453 = vmatpush2.msra.mxu0 0.0
    %1454 = vmatprep.subr.mxu0 0.0
    %1455 = vmatpush2.msra.mxu0 0.0
    %1456 = vmatprep.subr.mxu0 0.0
    %1457 = vmatpush2.msra.mxu0 0.0
    %1458 = vmatprep.subr.mxu0 0.0
    %1459 = vmatpush2.msra.mxu0 0.0
    %1460 = vmatprep.subr.mxu0 0.0
    %1461 = vmatpush2.msra.mxu0 0.0
    %1462 = vmatprep.subr.mxu0 0.0
    %1463 = vmatpush2.msra.mxu0 0.0
    %1464 = vmatprep.mubr.f32.mxu0 0.0
    %1465 = vmatmul.mubr.f32.gmra.mxu0 %v1398
    %v1466 = vpop.f32.mrf.mxu0
    %v1467 = vadd.f32 0.0, %v1466
    %v1468 = vpop.f32.mrf.mxu0
    %1469 = vdwg.mxu0
    %v1470 = vadd.f32 %v348, %v1467
    %s1471 = scalar_lea.vmem %s3, 272
    %v1472 = vld [vmem:[%s1471] sm:$0xff]
    %v1473 = vld [vmem:[%s1471 + $0x8] sm:$0xff]
    %v1474 = vrot.slane %v173, 2
    %v1475 = vsel %vm204, %v1474, 0
    %1477 = vmatprep.subr.mxu0 0.0
    %1478 = vmatpush1.msra.mxu0 0.0
    %1479 = vmatprep.subr.mxu0 0.0
    %1480 = vmatpush1.msra.mxu0 0.0
    %1481 = vmatprep.subr.mxu0 0.0
    %1482 = vmatpush1.msra.mxu0 0.0
    %1483 = vmatprep.subr.mxu0 0.0
    %1484 = vmatpush1.msra.mxu0 0.0
    %1485 = vmatprep.subr.mxu0 0.0
    %1486 = vmatpush1.msra.mxu0 0.0
    %1487 = vmatprep.subr.mxu0 0.0
    %1488 = vmatpush1.msra.mxu0 0.0
    %1489 = vmatprep.subr.mxu0 0.0
    %1490 = vmatpush1.msra.mxu0 0.0
    %1491 = vmatprep.subr.mxu0 0.0
    %1492 = vmatpush1.msra.mxu0 0.0
    %1493 = vmatprep.subr.mxu0 0.0
    %1494 = vmatpush1.msra.mxu0 0.0
    %1495 = vmatprep.subr.mxu0 0.0
    %1496 = vmatpush1.msra.mxu0 0.0
    %1497 = vmatprep.subr.mxu0 0.0
    %1498 = vmatpush1.msra.mxu0 0.0
    %1499 = vmatprep.subr.mxu0 0.0
    %1500 = vmatpush1.msra.mxu0 0.0
    %1501 = vmatprep.subr.mxu0 0.0
    %1502 = vmatpush1.msra.mxu0 0.0
    %1503 = vmatprep.subr.mxu0 0.0
    %1504 = vmatpush1.msra.mxu0 0.0
    %1505 = vmatprep.subr.mxu0 0.0
    %1506 = vmatpush1.msra.mxu0 %v1473
    %1507 = vmatprep.subr.mxu0 0.0
    %1508 = vmatpush1.msra.mxu0 %v1472
    %1509 = vmatprep.subr.mxu0 0.0
    %1510 = vmatpush2.msra.mxu0 0.0
    %1511 = vmatprep.subr.mxu0 0.0
    %1512 = vmatpush2.msra.mxu0 0.0
    %1513 = vmatprep.subr.mxu0 0.0
    %1514 = vmatpush2.msra.mxu0 0.0
    %1515 = vmatprep.subr.mxu0 0.0
    %1516 = vmatpush2.msra.mxu0 0.0
    %1517 = vmatprep.subr.mxu0 0.0
    %1518 = vmatpush2.msra.mxu0 0.0
    %1519 = vmatprep.subr.mxu0 0.0
    %1520 = vmatpush2.msra.mxu0 0.0
    %1521 = vmatprep.subr.mxu0 0.0
    %1522 = vmatpush2.msra.mxu0 0.0
    %1523 = vmatprep.subr.mxu0 0.0
    %1524 = vmatpush2.msra.mxu0 0.0
    %1525 = vmatprep.subr.mxu0 0.0
    %1526 = vmatpush2.msra.mxu0 0.0
    %1527 = vmatprep.subr.mxu0 0.0
    %1528 = vmatpush2.msra.mxu0 0.0
    %1529 = vmatprep.subr.mxu0 0.0
    %1530 = vmatpush2.msra.mxu0 0.0
    %1531 = vmatprep.subr.mxu0 0.0
    %1532 = vmatpush2.msra.mxu0 0.0
    %1533 = vmatprep.subr.mxu0 0.0
    %1534 = vmatpush2.msra.mxu0 0.0
    %1535 = vmatprep.subr.mxu0 0.0
    %1536 = vmatpush2.msra.mxu0 0.0
    %1537 = vmatprep.subr.mxu0 0.0
    %1538 = vmatpush2.msra.mxu0 0.0
    %1539 = vmatprep.subr.mxu0 0.0
    %1540 = vmatpush2.msra.mxu0 0.0
    %1541 = vmatprep.mubr.f32.mxu0 0.0
    %1542 = vmatmul.mubr.f32.gmra.mxu0 %v1475
    %v1543 = vpop.f32.mrf.mxu0
    %v1544 = vadd.f32 0.0, %v1543
    %v1545 = vpop.f32.mrf.mxu0
    %1546 = vdwg.mxu0
    %v1547 = vadd.f32 %v497, %v1544
    %s1548 = scalar_lea.vmem %s3, 288
    %v1549 = vld [vmem:[%s1548] sm:$0xff]
    %v1550 = vld [vmem:[%s1548 + $0x8] sm:$0xff]
    %v1551 = vrot.slane %v173, 4
    %v1552 = vsel %vm204, %v1551, 0
    %1554 = vmatprep.subr.mxu0 0.0
    %1555 = vmatpush1.msra.mxu0 0.0
    %1556 = vmatprep.subr.mxu0 0.0
    %1557 = vmatpush1.msra.mxu0 0.0
    %1558 = vmatprep.subr.mxu0 0.0
    %1559 = vmatpush1.msra.mxu0 0.0
    %1560 = vmatprep.subr.mxu0 0.0
    %1561 = vmatpush1.msra.mxu0 0.0
    %1562 = vmatprep.subr.mxu0 0.0
    %1563 = vmatpush1.msra.mxu0 0.0
    %1564 = vmatprep.subr.mxu0 0.0
    %1565 = vmatpush1.msra.mxu0 0.0
    %1566 = vmatprep.subr.mxu0 0.0
    %1567 = vmatpush1.msra.mxu0 0.0
    %1568 = vmatprep.subr.mxu0 0.0
    %1569 = vmatpush1.msra.mxu0 0.0
    %1570 = vmatprep.subr.mxu0 0.0
    %1571 = vmatpush1.msra.mxu0 0.0
    %1572 = vmatprep.subr.mxu0 0.0
    %1573 = vmatpush1.msra.mxu0 0.0
    %1574 = vmatprep.subr.mxu0 0.0
    %1575 = vmatpush1.msra.mxu0 0.0
    %1576 = vmatprep.subr.mxu0 0.0
    %1577 = vmatpush1.msra.mxu0 0.0
    %1578 = vmatprep.subr.mxu0 0.0
    %1579 = vmatpush1.msra.mxu0 0.0
    %1580 = vmatprep.subr.mxu0 0.0
    %1581 = vmatpush1.msra.mxu0 0.0
    %1582 = vmatprep.subr.mxu0 0.0
    %1583 = vmatpush1.msra.mxu0 %v1550
    %1584 = vmatprep.subr.mxu0 0.0
    %1585 = vmatpush1.msra.mxu0 %v1549
    %1586 = vmatprep.subr.mxu0 0.0
    %1587 = vmatpush2.msra.mxu0 0.0
    %1588 = vmatprep.subr.mxu0 0.0
    %1589 = vmatpush2.msra.mxu0 0.0
    %1590 = vmatprep.subr.mxu0 0.0
    %1591 = vmatpush2.msra.mxu0 0.0
    %1592 = vmatprep.subr.mxu0 0.0
    %1593 = vmatpush2.msra.mxu0 0.0
    %1594 = vmatprep.subr.mxu0 0.0
    %1595 = vmatpush2.msra.mxu0 0.0
    %1596 = vmatprep.subr.mxu0 0.0
    %1597 = vmatpush2.msra.mxu0 0.0
    %1598 = vmatprep.subr.mxu0 0.0
    %1599 = vmatpush2.msra.mxu0 0.0
    %1600 = vmatprep.subr.mxu0 0.0
    %1601 = vmatpush2.msra.mxu0 0.0
    %1602 = vmatprep.subr.mxu0 0.0
    %1603 = vmatpush2.msra.mxu0 0.0
    %1604 = vmatprep.subr.mxu0 0.0
    %1605 = vmatpush2.msra.mxu0 0.0
    %1606 = vmatprep.subr.mxu0 0.0
    %1607 = vmatpush2.msra.mxu0 0.0
    %1608 = vmatprep.subr.mxu0 0.0
    %1609 = vmatpush2.msra.mxu0 0.0
    %1610 = vmatprep.subr.mxu0 0.0
    %1611 = vmatpush2.msra.mxu0 0.0
    %1612 = vmatprep.subr.mxu0 0.0
    %1613 = vmatpush2.msra.mxu0 0.0
    %1614 = vmatprep.subr.mxu0 0.0
    %1615 = vmatpush2.msra.mxu0 0.0
    %1616 = vmatprep.subr.mxu0 0.0
    %1617 = vmatpush2.msra.mxu0 0.0
    %1618 = vmatprep.mubr.f32.mxu0 0.0
    %1619 = vmatmul.mubr.f32.gmra.mxu0 %v1552
    %v1620 = vpop.f32.mrf.mxu0
    %v1621 = vadd.f32 0.0, %v1620
    %v1622 = vpop.f32.mrf.mxu0
    %1623 = vdwg.mxu0
    %v1624 = vadd.f32 %v646, %v1621
    %s1625 = scalar_lea.vmem %s3, 304
    %v1626 = vld [vmem:[%s1625] sm:$0xff]
    %v1627 = vld [vmem:[%s1625 + $0x8] sm:$0xff]
    %v1628 = vrot.slane %v173, 6
    %v1629 = vsel %vm204, %v1628, 0
    %1631 = vmatprep.subr.mxu0 0.0
    %1632 = vmatpush1.msra.mxu0 0.0
    %1633 = vmatprep.subr.mxu0 0.0
    %1634 = vmatpush1.msra.mxu0 0.0
    %1635 = vmatprep.subr.mxu0 0.0
    %1636 = vmatpush1.msra.mxu0 0.0
    %1637 = vmatprep.subr.mxu0 0.0
    %1638 = vmatpush1.msra.mxu0 0.0
    %1639 = vmatprep.subr.mxu0 0.0
    %1640 = vmatpush1.msra.mxu0 0.0
    %1641 = vmatprep.subr.mxu0 0.0
    %1642 = vmatpush1.msra.mxu0 0.0
    %1643 = vmatprep.subr.mxu0 0.0
    %1644 = vmatpush1.msra.mxu0 0.0
    %1645 = vmatprep.subr.mxu0 0.0
    %1646 = vmatpush1.msra.mxu0 0.0
    %1647 = vmatprep.subr.mxu0 0.0
    %1648 = vmatpush1.msra.mxu0 0.0
    %1649 = vmatprep.subr.mxu0 0.0
    %1650 = vmatpush1.msra.mxu0 0.0
    %1651 = vmatprep.subr.mxu0 0.0
    %1652 = vmatpush1.msra.mxu0 0.0
    %1653 = vmatprep.subr.mxu0 0.0
    %1654 = vmatpush1.msra.mxu0 0.0
    %1655 = vmatprep.subr.mxu0 0.0
    %1656 = vmatpush1.msra.mxu0 0.0
    %1657 = vmatprep.subr.mxu0 0.0
    %1658 = vmatpush1.msra.mxu0 0.0
    %1659 = vmatprep.subr.mxu0 0.0
    %1660 = vmatpush1.msra.mxu0 %v1627
    %1661 = vmatprep.subr.mxu0 0.0
    %1662 = vmatpush1.msra.mxu0 %v1626
    %1663 = vmatprep.subr.mxu0 0.0
    %1664 = vmatpush2.msra.mxu0 0.0
    %1665 = vmatprep.subr.mxu0 0.0
    %1666 = vmatpush2.msra.mxu0 0.0
    %1667 = vmatprep.subr.mxu0 0.0
    %1668 = vmatpush2.msra.mxu0 0.0
    %1669 = vmatprep.subr.mxu0 0.0
    %1670 = vmatpush2.msra.mxu0 0.0
    %1671 = vmatprep.subr.mxu0 0.0
    %1672 = vmatpush2.msra.mxu0 0.0
    %1673 = vmatprep.subr.mxu0 0.0
    %1674 = vmatpush2.msra.mxu0 0.0
    %1675 = vmatprep.subr.mxu0 0.0
    %1676 = vmatpush2.msra.mxu0 0.0
    %1677 = vmatprep.subr.mxu0 0.0
    %1678 = vmatpush2.msra.mxu0 0.0
    %1679 = vmatprep.subr.mxu0 0.0
    %1680 = vmatpush2.msra.mxu0 0.0
    %1681 = vmatprep.subr.mxu0 0.0
    %1682 = vmatpush2.msra.mxu0 0.0
    %1683 = vmatprep.subr.mxu0 0.0
    %1684 = vmatpush2.msra.mxu0 0.0
    %1685 = vmatprep.subr.mxu0 0.0
    %1686 = vmatpush2.msra.mxu0 0.0
    %1687 = vmatprep.subr.mxu0 0.0
    %1688 = vmatpush2.msra.mxu0 0.0
    %1689 = vmatprep.subr.mxu0 0.0
    %1690 = vmatpush2.msra.mxu0 0.0
    %1691 = vmatprep.subr.mxu0 0.0
    %1692 = vmatpush2.msra.mxu0 0.0
    %1693 = vmatprep.subr.mxu0 0.0
    %1694 = vmatpush2.msra.mxu0 0.0
    %1695 = vmatprep.mubr.f32.mxu0 0.0
    %1696 = vmatmul.mubr.f32.gmra.mxu0 %v1629
    %v1697 = vpop.f32.mrf.mxu0
    %v1698 = vadd.f32 0.0, %v1697
    %v1699 = vpop.f32.mrf.mxu0
    %1700 = vdwg.mxu0
    %v1701 = vadd.f32 %v795, %v1698
    %s1702 = scalar_lea.vmem %s3, 320
    %v1703 = vld [vmem:[%s1702] sm:$0xff]
    %v1704 = vld [vmem:[%s1702 + $0x8] sm:$0xff]
    %v1706 = vsel %vm204, %v174, 0
    %1708 = vmatprep.subr.mxu0 0.0
    %1709 = vmatpush1.msra.mxu0 0.0
    %1710 = vmatprep.subr.mxu0 0.0
    %1711 = vmatpush1.msra.mxu0 0.0
    %1712 = vmatprep.subr.mxu0 0.0
    %1713 = vmatpush1.msra.mxu0 0.0
    %1714 = vmatprep.subr.mxu0 0.0
    %1715 = vmatpush1.msra.mxu0 0.0
    %1716 = vmatprep.subr.mxu0 0.0
    %1717 = vmatpush1.msra.mxu0 0.0
    %1718 = vmatprep.subr.mxu0 0.0
    %1719 = vmatpush1.msra.mxu0 0.0
    %1720 = vmatprep.subr.mxu0 0.0
    %1721 = vmatpush1.msra.mxu0 0.0
    %1722 = vmatprep.subr.mxu0 0.0
    %1723 = vmatpush1.msra.mxu0 0.0
    %1724 = vmatprep.subr.mxu0 0.0
    %1725 = vmatpush1.msra.mxu0 0.0
    %1726 = vmatprep.subr.mxu0 0.0
    %1727 = vmatpush1.msra.mxu0 0.0
    %1728 = vmatprep.subr.mxu0 0.0
    %1729 = vmatpush1.msra.mxu0 0.0
    %1730 = vmatprep.subr.mxu0 0.0
    %1731 = vmatpush1.msra.mxu0 0.0
    %1732 = vmatprep.subr.mxu0 0.0
    %1733 = vmatpush1.msra.mxu0 0.0
    %1734 = vmatprep.subr.mxu0 0.0
    %1735 = vmatpush1.msra.mxu0 0.0
    %1736 = vmatprep.subr.mxu0 0.0
    %1737 = vmatpush1.msra.mxu0 %v1704
    %1738 = vmatprep.subr.mxu0 0.0
    %1739 = vmatpush1.msra.mxu0 %v1703
    %1740 = vmatprep.subr.mxu0 0.0
    %1741 = vmatpush2.msra.mxu0 0.0
    %1742 = vmatprep.subr.mxu0 0.0
    %1743 = vmatpush2.msra.mxu0 0.0
    %1744 = vmatprep.subr.mxu0 0.0
    %1745 = vmatpush2.msra.mxu0 0.0
    %1746 = vmatprep.subr.mxu0 0.0
    %1747 = vmatpush2.msra.mxu0 0.0
    %1748 = vmatprep.subr.mxu0 0.0
    %1749 = vmatpush2.msra.mxu0 0.0
    %1750 = vmatprep.subr.mxu0 0.0
    %1751 = vmatpush2.msra.mxu0 0.0
    %1752 = vmatprep.subr.mxu0 0.0
    %1753 = vmatpush2.msra.mxu0 0.0
    %1754 = vmatprep.subr.mxu0 0.0
    %1755 = vmatpush2.msra.mxu0 0.0
    %1756 = vmatprep.subr.mxu0 0.0
    %1757 = vmatpush2.msra.mxu0 0.0
    %1758 = vmatprep.subr.mxu0 0.0
    %1759 = vmatpush2.msra.mxu0 0.0
    %1760 = vmatprep.subr.mxu0 0.0
    %1761 = vmatpush2.msra.mxu0 0.0
    %1762 = vmatprep.subr.mxu0 0.0
    %1763 = vmatpush2.msra.mxu0 0.0
    %1764 = vmatprep.subr.mxu0 0.0
    %1765 = vmatpush2.msra.mxu0 0.0
    %1766 = vmatprep.subr.mxu0 0.0
    %1767 = vmatpush2.msra.mxu0 0.0
    %1768 = vmatprep.subr.mxu0 0.0
    %1769 = vmatpush2.msra.mxu0 0.0
    %1770 = vmatprep.subr.mxu0 0.0
    %1771 = vmatpush2.msra.mxu0 0.0
    %1772 = vmatprep.mubr.f32.mxu0 0.0
    %1773 = vmatmul.mubr.f32.gmra.mxu0 %v1706
    %v1774 = vpop.f32.mrf.mxu0
    %v1775 = vadd.f32 0.0, %v1774
    %v1776 = vpop.f32.mrf.mxu0
    %1777 = vdwg.mxu0
    %v1778 = vadd.f32 %v944, %v1775
    %s1779 = scalar_lea.vmem %s3, 336
    %v1780 = vld [vmem:[%s1779] sm:$0xff]
    %v1781 = vld [vmem:[%s1779 + $0x8] sm:$0xff]
    %v1782 = vrot.slane %v174, 2
    %v1783 = vsel %vm204, %v1782, 0
    %1785 = vmatprep.subr.mxu0 0.0
    %1786 = vmatpush1.msra.mxu0 0.0
    %1787 = vmatprep.subr.mxu0 0.0
    %1788 = vmatpush1.msra.mxu0 0.0
    %1789 = vmatprep.subr.mxu0 0.0
    %1790 = vmatpush1.msra.mxu0 0.0
    %1791 = vmatprep.subr.mxu0 0.0
    %1792 = vmatpush1.msra.mxu0 0.0
    %1793 = vmatprep.subr.mxu0 0.0
    %1794 = vmatpush1.msra.mxu0 0.0
    %1795 = vmatprep.subr.mxu0 0.0
    %1796 = vmatpush1.msra.mxu0 0.0
    %1797 = vmatprep.subr.mxu0 0.0
    %1798 = vmatpush1.msra.mxu0 0.0
    %1799 = vmatprep.subr.mxu0 0.0
    %1800 = vmatpush1.msra.mxu0 0.0
    %1801 = vmatprep.subr.mxu0 0.0
    %1802 = vmatpush1.msra.mxu0 0.0
    %1803 = vmatprep.subr.mxu0 0.0
    %1804 = vmatpush1.msra.mxu0 0.0
    %1805 = vmatprep.subr.mxu0 0.0
    %1806 = vmatpush1.msra.mxu0 0.0
    %1807 = vmatprep.subr.mxu0 0.0
    %1808 = vmatpush1.msra.mxu0 0.0
    %1809 = vmatprep.subr.mxu0 0.0
    %1810 = vmatpush1.msra.mxu0 0.0
    %1811 = vmatprep.subr.mxu0 0.0
    %1812 = vmatpush1.msra.mxu0 0.0
    %1813 = vmatprep.subr.mxu0 0.0
    %1814 = vmatpush1.msra.mxu0 %v1781
    %1815 = vmatprep.subr.mxu0 0.0
    %1816 = vmatpush1.msra.mxu0 %v1780
    %1817 = vmatprep.subr.mxu0 0.0
    %1818 = vmatpush2.msra.mxu0 0.0
    %1819 = vmatprep.subr.mxu0 0.0
    %1820 = vmatpush2.msra.mxu0 0.0
    %1821 = vmatprep.subr.mxu0 0.0
    %1822 = vmatpush2.msra.mxu0 0.0
    %1823 = vmatprep.subr.mxu0 0.0
    %1824 = vmatpush2.msra.mxu0 0.0
    %1825 = vmatprep.subr.mxu0 0.0
    %1826 = vmatpush2.msra.mxu0 0.0
    %1827 = vmatprep.subr.mxu0 0.0
    %1828 = vmatpush2.msra.mxu0 0.0
    %1829 = vmatprep.subr.mxu0 0.0
    %1830 = vmatpush2.msra.mxu0 0.0
    %1831 = vmatprep.subr.mxu0 0.0
    %1832 = vmatpush2.msra.mxu0 0.0
    %1833 = vmatprep.subr.mxu0 0.0
    %1834 = vmatpush2.msra.mxu0 0.0
    %1835 = vmatprep.subr.mxu0 0.0
    %1836 = vmatpush2.msra.mxu0 0.0
    %1837 = vmatprep.subr.mxu0 0.0
    %1838 = vmatpush2.msra.mxu0 0.0
    %1839 = vmatprep.subr.mxu0 0.0
    %1840 = vmatpush2.msra.mxu0 0.0
    %1841 = vmatprep.subr.mxu0 0.0
    %1842 = vmatpush2.msra.mxu0 0.0
    %1843 = vmatprep.subr.mxu0 0.0
    %1844 = vmatpush2.msra.mxu0 0.0
    %1845 = vmatprep.subr.mxu0 0.0
    %1846 = vmatpush2.msra.mxu0 0.0
    %1847 = vmatprep.subr.mxu0 0.0
    %1848 = vmatpush2.msra.mxu0 0.0
    %1849 = vmatprep.mubr.f32.mxu0 0.0
    %1850 = vmatmul.mubr.f32.gmra.mxu0 %v1783
    %v1851 = vpop.f32.mrf.mxu0
    %v1852 = vadd.f32 0.0, %v1851
    %v1853 = vpop.f32.mrf.mxu0
    %1854 = vdwg.mxu0
    %v1855 = vadd.f32 %v1093, %v1852
    %s1856 = scalar_lea.vmem %s3, 352
    %v1857 = vld [vmem:[%s1856] sm:$0xff]
    %v1858 = vld [vmem:[%s1856 + $0x8] sm:$0xff]
    %v1859 = vrot.slane %v174, 4
    %v1860 = vsel %vm204, %v1859, 0
    %1862 = vmatprep.subr.mxu0 0.0
    %1863 = vmatpush1.msra.mxu0 0.0
    %1864 = vmatprep.subr.mxu0 0.0
    %1865 = vmatpush1.msra.mxu0 0.0
    %1866 = vmatprep.subr.mxu0 0.0
    %1867 = vmatpush1.msra.mxu0 0.0
    %1868 = vmatprep.subr.mxu0 0.0
    %1869 = vmatpush1.msra.mxu0 0.0
    %1870 = vmatprep.subr.mxu0 0.0
    %1871 = vmatpush1.msra.mxu0 0.0
    %1872 = vmatprep.subr.mxu0 0.0
    %1873 = vmatpush1.msra.mxu0 0.0
    %1874 = vmatprep.subr.mxu0 0.0
    %1875 = vmatpush1.msra.mxu0 0.0
    %1876 = vmatprep.subr.mxu0 0.0
    %1877 = vmatpush1.msra.mxu0 0.0
    %1878 = vmatprep.subr.mxu0 0.0
    %1879 = vmatpush1.msra.mxu0 0.0
    %1880 = vmatprep.subr.mxu0 0.0
    %1881 = vmatpush1.msra.mxu0 0.0
    %1882 = vmatprep.subr.mxu0 0.0
    %1883 = vmatpush1.msra.mxu0 0.0
    %1884 = vmatprep.subr.mxu0 0.0
    %1885 = vmatpush1.msra.mxu0 0.0
    %1886 = vmatprep.subr.mxu0 0.0
    %1887 = vmatpush1.msra.mxu0 0.0
    %1888 = vmatprep.subr.mxu0 0.0
    %1889 = vmatpush1.msra.mxu0 0.0
    %1890 = vmatprep.subr.mxu0 0.0
    %1891 = vmatpush1.msra.mxu0 %v1858
    %1892 = vmatprep.subr.mxu0 0.0
    %1893 = vmatpush1.msra.mxu0 %v1857
    %1894 = vmatprep.subr.mxu0 0.0
    %1895 = vmatpush2.msra.mxu0 0.0
    %1896 = vmatprep.subr.mxu0 0.0
    %1897 = vmatpush2.msra.mxu0 0.0
    %1898 = vmatprep.subr.mxu0 0.0
    %1899 = vmatpush2.msra.mxu0 0.0
    %1900 = vmatprep.subr.mxu0 0.0
    %1901 = vmatpush2.msra.mxu0 0.0
    %1902 = vmatprep.subr.mxu0 0.0
    %1903 = vmatpush2.msra.mxu0 0.0
    %1904 = vmatprep.subr.mxu0 0.0
    %1905 = vmatpush2.msra.mxu0 0.0
    %1906 = vmatprep.subr.mxu0 0.0
    %1907 = vmatpush2.msra.mxu0 0.0
    %1908 = vmatprep.subr.mxu0 0.0
    %1909 = vmatpush2.msra.mxu0 0.0
    %1910 = vmatprep.subr.mxu0 0.0
    %1911 = vmatpush2.msra.mxu0 0.0
    %1912 = vmatprep.subr.mxu0 0.0
    %1913 = vmatpush2.msra.mxu0 0.0
    %1914 = vmatprep.subr.mxu0 0.0
    %1915 = vmatpush2.msra.mxu0 0.0
    %1916 = vmatprep.subr.mxu0 0.0
    %1917 = vmatpush2.msra.mxu0 0.0
    %1918 = vmatprep.subr.mxu0 0.0
    %1919 = vmatpush2.msra.mxu0 0.0
    %1920 = vmatprep.subr.mxu0 0.0
    %1921 = vmatpush2.msra.mxu0 0.0
    %1922 = vmatprep.subr.mxu0 0.0
    %1923 = vmatpush2.msra.mxu0 0.0
    %1924 = vmatprep.subr.mxu0 0.0
    %1925 = vmatpush2.msra.mxu0 0.0
    %1926 = vmatprep.mubr.f32.mxu0 0.0
    %1927 = vmatmul.mubr.f32.gmra.mxu0 %v1860
    %v1928 = vpop.f32.mrf.mxu0
    %v1929 = vadd.f32 0.0, %v1928
    %v1930 = vpop.f32.mrf.mxu0
    %1931 = vdwg.mxu0
    %v1932 = vadd.f32 %v1242, %v1929
    %s1933 = scalar_lea.vmem %s3, 368
    %v1934 = vld [vmem:[%s1933] sm:$0xff]
    %v1935 = vld [vmem:[%s1933 + $0x8] sm:$0xff]
    %v1936 = vrot.slane %v174, 6
    %v1937 = vsel %vm204, %v1936, 0
    %1939 = vmatprep.subr.mxu0 0.0
    %1940 = vmatpush1.msra.mxu0 0.0
    %1941 = vmatprep.subr.mxu0 0.0
    %1942 = vmatpush1.msra.mxu0 0.0
    %1943 = vmatprep.subr.mxu0 0.0
    %1944 = vmatpush1.msra.mxu0 0.0
    %1945 = vmatprep.subr.mxu0 0.0
    %1946 = vmatpush1.msra.mxu0 0.0
    %1947 = vmatprep.subr.mxu0 0.0
    %1948 = vmatpush1.msra.mxu0 0.0
    %1949 = vmatprep.subr.mxu0 0.0
    %1950 = vmatpush1.msra.mxu0 0.0
    %1951 = vmatprep.subr.mxu0 0.0
    %1952 = vmatpush1.msra.mxu0 0.0
    %1953 = vmatprep.subr.mxu0 0.0
    %1954 = vmatpush1.msra.mxu0 0.0
    %1955 = vmatprep.subr.mxu0 0.0
    %1956 = vmatpush1.msra.mxu0 0.0
    %1957 = vmatprep.subr.mxu0 0.0
    %1958 = vmatpush1.msra.mxu0 0.0
    %1959 = vmatprep.subr.mxu0 0.0
    %1960 = vmatpush1.msra.mxu0 0.0
    %1961 = vmatprep.subr.mxu0 0.0
    %1962 = vmatpush1.msra.mxu0 0.0
    %1963 = vmatprep.subr.mxu0 0.0
    %1964 = vmatpush1.msra.mxu0 0.0
    %1965 = vmatprep.subr.mxu0 0.0
    %1966 = vmatpush1.msra.mxu0 0.0
    %1967 = vmatprep.subr.mxu0 0.0
    %1968 = vmatpush1.msra.mxu0 %v1935
    %1969 = vmatprep.subr.mxu0 0.0
    %1970 = vmatpush1.msra.mxu0 %v1934
    %1971 = vmatprep.subr.mxu0 0.0
    %1972 = vmatpush2.msra.mxu0 0.0
    %1973 = vmatprep.subr.mxu0 0.0
    %1974 = vmatpush2.msra.mxu0 0.0
    %1975 = vmatprep.subr.mxu0 0.0
    %1976 = vmatpush2.msra.mxu0 0.0
    %1977 = vmatprep.subr.mxu0 0.0
    %1978 = vmatpush2.msra.mxu0 0.0
    %1979 = vmatprep.subr.mxu0 0.0
    %1980 = vmatpush2.msra.mxu0 0.0
    %1981 = vmatprep.subr.mxu0 0.0
    %1982 = vmatpush2.msra.mxu0 0.0
    %1983 = vmatprep.subr.mxu0 0.0
    %1984 = vmatpush2.msra.mxu0 0.0
    %1985 = vmatprep.subr.mxu0 0.0
    %1986 = vmatpush2.msra.mxu0 0.0
    %1987 = vmatprep.subr.mxu0 0.0
    %1988 = vmatpush2.msra.mxu0 0.0
    %1989 = vmatprep.subr.mxu0 0.0
    %1990 = vmatpush2.msra.mxu0 0.0
    %1991 = vmatprep.subr.mxu0 0.0
    %1992 = vmatpush2.msra.mxu0 0.0
    %1993 = vmatprep.subr.mxu0 0.0
    %1994 = vmatpush2.msra.mxu0 0.0
    %1995 = vmatprep.subr.mxu0 0.0
    %1996 = vmatpush2.msra.mxu0 0.0
    %1997 = vmatprep.subr.mxu0 0.0
    %1998 = vmatpush2.msra.mxu0 0.0
    %1999 = vmatprep.subr.mxu0 0.0
    %2000 = vmatpush2.msra.mxu0 0.0
    %2001 = vmatprep.subr.mxu0 0.0
    %2002 = vmatpush2.msra.mxu0 0.0
    %2003 = vmatprep.mubr.f32.mxu0 0.0
    %2004 = vmatmul.mubr.f32.gmra.mxu0 %v1937
    %v2005 = vpop.f32.mrf.mxu0
    %v2006 = vadd.f32 0.0, %v2005
    %v2007 = vpop.f32.mrf.mxu0
    %2008 = vdwg.mxu0
    %v2009 = vadd.f32 %v1391, %v2006
    %s2010 = scalar_lea.vmem %s3, 384
    %v2011 = vld [vmem:[%s2010] sm:$0xff]
    %v2012 = vld [vmem:[%s2010 + $0x8] sm:$0xff]
    %v2014 = vsel %vm204, %v175, 0
    %2016 = vmatprep.subr.mxu0 0.0
    %2017 = vmatpush1.msra.mxu0 0.0
    %2018 = vmatprep.subr.mxu0 0.0
    %2019 = vmatpush1.msra.mxu0 0.0
    %2020 = vmatprep.subr.mxu0 0.0
    %2021 = vmatpush1.msra.mxu0 0.0
    %2022 = vmatprep.subr.mxu0 0.0
    %2023 = vmatpush1.msra.mxu0 0.0
    %2024 = vmatprep.subr.mxu0 0.0
    %2025 = vmatpush1.msra.mxu0 0.0
    %2026 = vmatprep.subr.mxu0 0.0
    %2027 = vmatpush1.msra.mxu0 0.0
    %2028 = vmatprep.subr.mxu0 0.0
    %2029 = vmatpush1.msra.mxu0 0.0
    %2030 = vmatprep.subr.mxu0 0.0
    %2031 = vmatpush1.msra.mxu0 0.0
    %2032 = vmatprep.subr.mxu0 0.0
    %2033 = vmatpush1.msra.mxu0 0.0
    %2034 = vmatprep.subr.mxu0 0.0
    %2035 = vmatpush1.msra.mxu0 0.0
    %2036 = vmatprep.subr.mxu0 0.0
    %2037 = vmatpush1.msra.mxu0 0.0
    %2038 = vmatprep.subr.mxu0 0.0
    %2039 = vmatpush1.msra.mxu0 0.0
    %2040 = vmatprep.subr.mxu0 0.0
    %2041 = vmatpush1.msra.mxu0 0.0
    %2042 = vmatprep.subr.mxu0 0.0
    %2043 = vmatpush1.msra.mxu0 0.0
    %2044 = vmatprep.subr.mxu0 0.0
    %2045 = vmatpush1.msra.mxu0 %v2012
    %2046 = vmatprep.subr.mxu0 0.0
    %2047 = vmatpush1.msra.mxu0 %v2011
    %2048 = vmatprep.subr.mxu0 0.0
    %2049 = vmatpush2.msra.mxu0 0.0
    %2050 = vmatprep.subr.mxu0 0.0
    %2051 = vmatpush2.msra.mxu0 0.0
    %2052 = vmatprep.subr.mxu0 0.0
    %2053 = vmatpush2.msra.mxu0 0.0
    %2054 = vmatprep.subr.mxu0 0.0
    %2055 = vmatpush2.msra.mxu0 0.0
    %2056 = vmatprep.subr.mxu0 0.0
    %2057 = vmatpush2.msra.mxu0 0.0
    %2058 = vmatprep.subr.mxu0 0.0
    %2059 = vmatpush2.msra.mxu0 0.0
    %2060 = vmatprep.subr.mxu0 0.0
    %2061 = vmatpush2.msra.mxu0 0.0
    %2062 = vmatprep.subr.mxu0 0.0
    %2063 = vmatpush2.msra.mxu0 0.0
    %2064 = vmatprep.subr.mxu0 0.0
    %2065 = vmatpush2.msra.mxu0 0.0
    %2066 = vmatprep.subr.mxu0 0.0
    %2067 = vmatpush2.msra.mxu0 0.0
    %2068 = vmatprep.subr.mxu0 0.0
    %2069 = vmatpush2.msra.mxu0 0.0
    %2070 = vmatprep.subr.mxu0 0.0
    %2071 = vmatpush2.msra.mxu0 0.0
    %2072 = vmatprep.subr.mxu0 0.0
    %2073 = vmatpush2.msra.mxu0 0.0
    %2074 = vmatprep.subr.mxu0 0.0
    %2075 = vmatpush2.msra.mxu0 0.0
    %2076 = vmatprep.subr.mxu0 0.0
    %2077 = vmatpush2.msra.mxu0 0.0
    %2078 = vmatprep.subr.mxu0 0.0
    %2079 = vmatpush2.msra.mxu0 0.0
    %2080 = vmatprep.mubr.f32.mxu0 0.0
    %2081 = vmatmul.mubr.f32.gmra.mxu0 %v2014
    %v2082 = vpop.f32.mrf.mxu0
    %v2083 = vadd.f32 0.0, %v2082
    %v2084 = vpop.f32.mrf.mxu0
    %2085 = vdwg.mxu0
    %v2086 = vadd.f32 %v1470, %v2083
    %s2087 = scalar_lea.vmem %s3, 400
    %v2088 = vld [vmem:[%s2087] sm:$0xff]
    %v2089 = vld [vmem:[%s2087 + $0x8] sm:$0xff]
    %v2090 = vrot.slane %v175, 2
    %v2091 = vsel %vm204, %v2090, 0
    %2093 = vmatprep.subr.mxu0 0.0
    %2094 = vmatpush1.msra.mxu0 0.0
    %2095 = vmatprep.subr.mxu0 0.0
    %2096 = vmatpush1.msra.mxu0 0.0
    %2097 = vmatprep.subr.mxu0 0.0
    %2098 = vmatpush1.msra.mxu0 0.0
    %2099 = vmatprep.subr.mxu0 0.0
    %2100 = vmatpush1.msra.mxu0 0.0
    %2101 = vmatprep.subr.mxu0 0.0
    %2102 = vmatpush1.msra.mxu0 0.0
    %2103 = vmatprep.subr.mxu0 0.0
    %2104 = vmatpush1.msra.mxu0 0.0
    %2105 = vmatprep.subr.mxu0 0.0
    %2106 = vmatpush1.msra.mxu0 0.0
    %2107 = vmatprep.subr.mxu0 0.0
    %2108 = vmatpush1.msra.mxu0 0.0
    %2109 = vmatprep.subr.mxu0 0.0
    %2110 = vmatpush1.msra.mxu0 0.0
    %2111 = vmatprep.subr.mxu0 0.0
    %2112 = vmatpush1.msra.mxu0 0.0
    %2113 = vmatprep.subr.mxu0 0.0
    %2114 = vmatpush1.msra.mxu0 0.0
    %2115 = vmatprep.subr.mxu0 0.0
    %2116 = vmatpush1.msra.mxu0 0.0
    %2117 = vmatprep.subr.mxu0 0.0
    %2118 = vmatpush1.msra.mxu0 0.0
    %2119 = vmatprep.subr.mxu0 0.0
    %2120 = vmatpush1.msra.mxu0 0.0
    %2121 = vmatprep.subr.mxu0 0.0
    %2122 = vmatpush1.msra.mxu0 %v2089
    %2123 = vmatprep.subr.mxu0 0.0
    %2124 = vmatpush1.msra.mxu0 %v2088
    %2125 = vmatprep.subr.mxu0 0.0
    %2126 = vmatpush2.msra.mxu0 0.0
    %2127 = vmatprep.subr.mxu0 0.0
    %2128 = vmatpush2.msra.mxu0 0.0
    %2129 = vmatprep.subr.mxu0 0.0
    %2130 = vmatpush2.msra.mxu0 0.0
    %2131 = vmatprep.subr.mxu0 0.0
    %2132 = vmatpush2.msra.mxu0 0.0
    %2133 = vmatprep.subr.mxu0 0.0
    %2134 = vmatpush2.msra.mxu0 0.0
    %2135 = vmatprep.subr.mxu0 0.0
    %2136 = vmatpush2.msra.mxu0 0.0
    %2137 = vmatprep.subr.mxu0 0.0
    %2138 = vmatpush2.msra.mxu0 0.0
    %2139 = vmatprep.subr.mxu0 0.0
    %2140 = vmatpush2.msra.mxu0 0.0
    %2141 = vmatprep.subr.mxu0 0.0
    %2142 = vmatpush2.msra.mxu0 0.0
    %2143 = vmatprep.subr.mxu0 0.0
    %2144 = vmatpush2.msra.mxu0 0.0
    %2145 = vmatprep.subr.mxu0 0.0
    %2146 = vmatpush2.msra.mxu0 0.0
    %2147 = vmatprep.subr.mxu0 0.0
    %2148 = vmatpush2.msra.mxu0 0.0
    %2149 = vmatprep.subr.mxu0 0.0
    %2150 = vmatpush2.msra.mxu0 0.0
    %2151 = vmatprep.subr.mxu0 0.0
    %2152 = vmatpush2.msra.mxu0 0.0
    %2153 = vmatprep.subr.mxu0 0.0
    %2154 = vmatpush2.msra.mxu0 0.0
    %2155 = vmatprep.subr.mxu0 0.0
    %2156 = vmatpush2.msra.mxu0 0.0
    %2157 = vmatprep.mubr.f32.mxu0 0.0
    %2158 = vmatmul.mubr.f32.gmra.mxu0 %v2091
    %v2159 = vpop.f32.mrf.mxu0
    %v2160 = vadd.f32 0.0, %v2159
    %v2161 = vpop.f32.mrf.mxu0
    %2162 = vdwg.mxu0
    %v2163 = vadd.f32 %v1547, %v2160
    %s2164 = scalar_lea.vmem %s3, 416
    %v2165 = vld [vmem:[%s2164] sm:$0xff]
    %v2166 = vld [vmem:[%s2164 + $0x8] sm:$0xff]
    %v2167 = vrot.slane %v175, 4
    %v2168 = vsel %vm204, %v2167, 0
    %2170 = vmatprep.subr.mxu0 0.0
    %2171 = vmatpush1.msra.mxu0 0.0
    %2172 = vmatprep.subr.mxu0 0.0
    %2173 = vmatpush1.msra.mxu0 0.0
    %2174 = vmatprep.subr.mxu0 0.0
    %2175 = vmatpush1.msra.mxu0 0.0
    %2176 = vmatprep.subr.mxu0 0.0
    %2177 = vmatpush1.msra.mxu0 0.0
    %2178 = vmatprep.subr.mxu0 0.0
    %2179 = vmatpush1.msra.mxu0 0.0
    %2180 = vmatprep.subr.mxu0 0.0
    %2181 = vmatpush1.msra.mxu0 0.0
    %2182 = vmatprep.subr.mxu0 0.0
    %2183 = vmatpush1.msra.mxu0 0.0
    %2184 = vmatprep.subr.mxu0 0.0
    %2185 = vmatpush1.msra.mxu0 0.0
    %2186 = vmatprep.subr.mxu0 0.0
    %2187 = vmatpush1.msra.mxu0 0.0
    %2188 = vmatprep.subr.mxu0 0.0
    %2189 = vmatpush1.msra.mxu0 0.0
    %2190 = vmatprep.subr.mxu0 0.0
    %2191 = vmatpush1.msra.mxu0 0.0
    %2192 = vmatprep.subr.mxu0 0.0
    %2193 = vmatpush1.msra.mxu0 0.0
    %2194 = vmatprep.subr.mxu0 0.0
    %2195 = vmatpush1.msra.mxu0 0.0
    %2196 = vmatprep.subr.mxu0 0.0
    %2197 = vmatpush1.msra.mxu0 0.0
    %2198 = vmatprep.subr.mxu0 0.0
    %2199 = vmatpush1.msra.mxu0 %v2166
    %2200 = vmatprep.subr.mxu0 0.0
    %2201 = vmatpush1.msra.mxu0 %v2165
    %2202 = vmatprep.subr.mxu0 0.0
    %2203 = vmatpush2.msra.mxu0 0.0
    %2204 = vmatprep.subr.mxu0 0.0
    %2205 = vmatpush2.msra.mxu0 0.0
    %2206 = vmatprep.subr.mxu0 0.0
    %2207 = vmatpush2.msra.mxu0 0.0
    %2208 = vmatprep.subr.mxu0 0.0
    %2209 = vmatpush2.msra.mxu0 0.0
    %2210 = vmatprep.subr.mxu0 0.0
    %2211 = vmatpush2.msra.mxu0 0.0
    %2212 = vmatprep.subr.mxu0 0.0
    %2213 = vmatpush2.msra.mxu0 0.0
    %2214 = vmatprep.subr.mxu0 0.0
    %2215 = vmatpush2.msra.mxu0 0.0
    %2216 = vmatprep.subr.mxu0 0.0
    %2217 = vmatpush2.msra.mxu0 0.0
    %2218 = vmatprep.subr.mxu0 0.0
    %2219 = vmatpush2.msra.mxu0 0.0
    %2220 = vmatprep.subr.mxu0 0.0
    %2221 = vmatpush2.msra.mxu0 0.0
    %2222 = vmatprep.subr.mxu0 0.0
    %2223 = vmatpush2.msra.mxu0 0.0
    %2224 = vmatprep.subr.mxu0 0.0
    %2225 = vmatpush2.msra.mxu0 0.0
    %2226 = vmatprep.subr.mxu0 0.0
    %2227 = vmatpush2.msra.mxu0 0.0
    %2228 = vmatprep.subr.mxu0 0.0
    %2229 = vmatpush2.msra.mxu0 0.0
    %2230 = vmatprep.subr.mxu0 0.0
    %2231 = vmatpush2.msra.mxu0 0.0
    %2232 = vmatprep.subr.mxu0 0.0
    %2233 = vmatpush2.msra.mxu0 0.0
    %2234 = vmatprep.mubr.f32.mxu0 0.0
    %2235 = vmatmul.mubr.f32.gmra.mxu0 %v2168
    %v2236 = vpop.f32.mrf.mxu0
    %v2237 = vadd.f32 0.0, %v2236
    %v2238 = vpop.f32.mrf.mxu0
    %2239 = vdwg.mxu0
    %v2240 = vadd.f32 %v1624, %v2237
    %s2241 = scalar_lea.vmem %s3, 432
    %v2242 = vld [vmem:[%s2241] sm:$0xff]
    %v2243 = vld [vmem:[%s2241 + $0x8] sm:$0xff]
    %v2244 = vrot.slane %v175, 6
    %v2245 = vsel %vm204, %v2244, 0
    %2247 = vmatprep.subr.mxu0 0.0
    %2248 = vmatpush1.msra.mxu0 0.0
    %2249 = vmatprep.subr.mxu0 0.0
    %2250 = vmatpush1.msra.mxu0 0.0
    %2251 = vmatprep.subr.mxu0 0.0
    %2252 = vmatpush1.msra.mxu0 0.0
    %2253 = vmatprep.subr.mxu0 0.0
    %2254 = vmatpush1.msra.mxu0 0.0
    %2255 = vmatprep.subr.mxu0 0.0
    %2256 = vmatpush1.msra.mxu0 0.0
    %2257 = vmatprep.subr.mxu0 0.0
    %2258 = vmatpush1.msra.mxu0 0.0
    %2259 = vmatprep.subr.mxu0 0.0
    %2260 = vmatpush1.msra.mxu0 0.0
    %2261 = vmatprep.subr.mxu0 0.0
    %2262 = vmatpush1.msra.mxu0 0.0
    %2263 = vmatprep.subr.mxu0 0.0
    %2264 = vmatpush1.msra.mxu0 0.0
    %2265 = vmatprep.subr.mxu0 0.0
    %2266 = vmatpush1.msra.mxu0 0.0
    %2267 = vmatprep.subr.mxu0 0.0
    %2268 = vmatpush1.msra.mxu0 0.0
    %2269 = vmatprep.subr.mxu0 0.0
    %2270 = vmatpush1.msra.mxu0 0.0
    %2271 = vmatprep.subr.mxu0 0.0
    %2272 = vmatpush1.msra.mxu0 0.0
    %2273 = vmatprep.subr.mxu0 0.0
    %2274 = vmatpush1.msra.mxu0 0.0
    %2275 = vmatprep.subr.mxu0 0.0
    %2276 = vmatpush1.msra.mxu0 %v2243
    %2277 = vmatprep.subr.mxu0 0.0
    %2278 = vmatpush1.msra.mxu0 %v2242
    %2279 = vmatprep.subr.mxu0 0.0
    %2280 = vmatpush2.msra.mxu0 0.0
    %2281 = vmatprep.subr.mxu0 0.0
    %2282 = vmatpush2.msra.mxu0 0.0
    %2283 = vmatprep.subr.mxu0 0.0
    %2284 = vmatpush2.msra.mxu0 0.0
    %2285 = vmatprep.subr.mxu0 0.0
    %2286 = vmatpush2.msra.mxu0 0.0
    %2287 = vmatprep.subr.mxu0 0.0
    %2288 = vmatpush2.msra.mxu0 0.0
    %2289 = vmatprep.subr.mxu0 0.0
    %2290 = vmatpush2.msra.mxu0 0.0
    %2291 = vmatprep.subr.mxu0 0.0
    %2292 = vmatpush2.msra.mxu0 0.0
    %2293 = vmatprep.subr.mxu0 0.0
    %2294 = vmatpush2.msra.mxu0 0.0
    %2295 = vmatprep.subr.mxu0 0.0
    %2296 = vmatpush2.msra.mxu0 0.0
    %2297 = vmatprep.subr.mxu0 0.0
    %2298 = vmatpush2.msra.mxu0 0.0
    %2299 = vmatprep.subr.mxu0 0.0
    %2300 = vmatpush2.msra.mxu0 0.0
    %2301 = vmatprep.subr.mxu0 0.0
    %2302 = vmatpush2.msra.mxu0 0.0
    %2303 = vmatprep.subr.mxu0 0.0
    %2304 = vmatpush2.msra.mxu0 0.0
    %2305 = vmatprep.subr.mxu0 0.0
    %2306 = vmatpush2.msra.mxu0 0.0
    %2307 = vmatprep.subr.mxu0 0.0
    %2308 = vmatpush2.msra.mxu0 0.0
    %2309 = vmatprep.subr.mxu0 0.0
    %2310 = vmatpush2.msra.mxu0 0.0
    %2311 = vmatprep.mubr.f32.mxu0 0.0
    %2312 = vmatmul.mubr.f32.gmra.mxu0 %v2245
    %v2313 = vpop.f32.mrf.mxu0
    %v2314 = vadd.f32 0.0, %v2313
    %v2315 = vpop.f32.mrf.mxu0
    %2316 = vdwg.mxu0
    %v2317 = vadd.f32 %v1701, %v2314
    %s2318 = scalar_lea.vmem %s3, 448
    %v2319 = vld [vmem:[%s2318] sm:$0xff]
    %v2320 = vld [vmem:[%s2318 + $0x8] sm:$0xff]
    %v2322 = vsel %vm204, %v176, 0
    %2324 = vmatprep.subr.mxu0 0.0
    %2325 = vmatpush1.msra.mxu0 0.0
    %2326 = vmatprep.subr.mxu0 0.0
    %2327 = vmatpush1.msra.mxu0 0.0
    %2328 = vmatprep.subr.mxu0 0.0
    %2329 = vmatpush1.msra.mxu0 0.0
    %2330 = vmatprep.subr.mxu0 0.0
    %2331 = vmatpush1.msra.mxu0 0.0
    %2332 = vmatprep.subr.mxu0 0.0
    %2333 = vmatpush1.msra.mxu0 0.0
    %2334 = vmatprep.subr.mxu0 0.0
    %2335 = vmatpush1.msra.mxu0 0.0
    %2336 = vmatprep.subr.mxu0 0.0
    %2337 = vmatpush1.msra.mxu0 0.0
    %2338 = vmatprep.subr.mxu0 0.0
    %2339 = vmatpush1.msra.mxu0 0.0
    %2340 = vmatprep.subr.mxu0 0.0
    %2341 = vmatpush1.msra.mxu0 0.0
    %2342 = vmatprep.subr.mxu0 0.0
    %2343 = vmatpush1.msra.mxu0 0.0
    %2344 = vmatprep.subr.mxu0 0.0
    %2345 = vmatpush1.msra.mxu0 0.0
    %2346 = vmatprep.subr.mxu0 0.0
    %2347 = vmatpush1.msra.mxu0 0.0
    %2348 = vmatprep.subr.mxu0 0.0
    %2349 = vmatpush1.msra.mxu0 0.0
    %2350 = vmatprep.subr.mxu0 0.0
    %2351 = vmatpush1.msra.mxu0 0.0
    %2352 = vmatprep.subr.mxu0 0.0
    %2353 = vmatpush1.msra.mxu0 %v2320
    %2354 = vmatprep.subr.mxu0 0.0
    %2355 = vmatpush1.msra.mxu0 %v2319
    %2356 = vmatprep.subr.mxu0 0.0
    %2357 = vmatpush2.msra.mxu0 0.0
    %2358 = vmatprep.subr.mxu0 0.0
    %2359 = vmatpush2.msra.mxu0 0.0
    %2360 = vmatprep.subr.mxu0 0.0
    %2361 = vmatpush2.msra.mxu0 0.0
    %2362 = vmatprep.subr.mxu0 0.0
    %2363 = vmatpush2.msra.mxu0 0.0
    %2364 = vmatprep.subr.mxu0 0.0
    %2365 = vmatpush2.msra.mxu0 0.0
    %2366 = vmatprep.subr.mxu0 0.0
    %2367 = vmatpush2.msra.mxu0 0.0
    %2368 = vmatprep.subr.mxu0 0.0
    %2369 = vmatpush2.msra.mxu0 0.0
    %2370 = vmatprep.subr.mxu0 0.0
    %2371 = vmatpush2.msra.mxu0 0.0
    %2372 = vmatprep.subr.mxu0 0.0
    %2373 = vmatpush2.msra.mxu0 0.0
    %2374 = vmatprep.subr.mxu0 0.0
    %2375 = vmatpush2.msra.mxu0 0.0
    %2376 = vmatprep.subr.mxu0 0.0
    %2377 = vmatpush2.msra.mxu0 0.0
    %2378 = vmatprep.subr.mxu0 0.0
    %2379 = vmatpush2.msra.mxu0 0.0
    %2380 = vmatprep.subr.mxu0 0.0
    %2381 = vmatpush2.msra.mxu0 0.0
    %2382 = vmatprep.subr.mxu0 0.0
    %2383 = vmatpush2.msra.mxu0 0.0
    %2384 = vmatprep.subr.mxu0 0.0
    %2385 = vmatpush2.msra.mxu0 0.0
    %2386 = vmatprep.subr.mxu0 0.0
    %2387 = vmatpush2.msra.mxu0 0.0
    %2388 = vmatprep.mubr.f32.mxu0 0.0
    %2389 = vmatmul.mubr.f32.gmra.mxu0 %v2322
    %v2390 = vpop.f32.mrf.mxu0
    %v2391 = vadd.f32 0.0, %v2390
    %v2392 = vpop.f32.mrf.mxu0
    %2393 = vdwg.mxu0
    %v2394 = vadd.f32 %v1778, %v2391
    %s2395 = scalar_lea.vmem %s3, 464
    %v2396 = vld [vmem:[%s2395] sm:$0xff]
    %v2397 = vld [vmem:[%s2395 + $0x8] sm:$0xff]
    %v2398 = vrot.slane %v176, 2
    %v2399 = vsel %vm204, %v2398, 0
    %2401 = vmatprep.subr.mxu0 0.0
    %2402 = vmatpush1.msra.mxu0 0.0
    %2403 = vmatprep.subr.mxu0 0.0
    %2404 = vmatpush1.msra.mxu0 0.0
    %2405 = vmatprep.subr.mxu0 0.0
    %2406 = vmatpush1.msra.mxu0 0.0
    %2407 = vmatprep.subr.mxu0 0.0
    %2408 = vmatpush1.msra.mxu0 0.0
    %2409 = vmatprep.subr.mxu0 0.0
    %2410 = vmatpush1.msra.mxu0 0.0
    %2411 = vmatprep.subr.mxu0 0.0
    %2412 = vmatpush1.msra.mxu0 0.0
    %2413 = vmatprep.subr.mxu0 0.0
    %2414 = vmatpush1.msra.mxu0 0.0
    %2415 = vmatprep.subr.mxu0 0.0
    %2416 = vmatpush1.msra.mxu0 0.0
    %2417 = vmatprep.subr.mxu0 0.0
    %2418 = vmatpush1.msra.mxu0 0.0
    %2419 = vmatprep.subr.mxu0 0.0
    %2420 = vmatpush1.msra.mxu0 0.0
    %2421 = vmatprep.subr.mxu0 0.0
    %2422 = vmatpush1.msra.mxu0 0.0
    %2423 = vmatprep.subr.mxu0 0.0
    %2424 = vmatpush1.msra.mxu0 0.0
    %2425 = vmatprep.subr.mxu0 0.0
    %2426 = vmatpush1.msra.mxu0 0.0
    %2427 = vmatprep.subr.mxu0 0.0
    %2428 = vmatpush1.msra.mxu0 0.0
    %2429 = vmatprep.subr.mxu0 0.0
    %2430 = vmatpush1.msra.mxu0 %v2397
    %2431 = vmatprep.subr.mxu0 0.0
    %2432 = vmatpush1.msra.mxu0 %v2396
    %2433 = vmatprep.subr.mxu0 0.0
    %2434 = vmatpush2.msra.mxu0 0.0
    %2435 = vmatprep.subr.mxu0 0.0
    %2436 = vmatpush2.msra.mxu0 0.0
    %2437 = vmatprep.subr.mxu0 0.0
    %2438 = vmatpush2.msra.mxu0 0.0
    %2439 = vmatprep.subr.mxu0 0.0
    %2440 = vmatpush2.msra.mxu0 0.0
    %2441 = vmatprep.subr.mxu0 0.0
    %2442 = vmatpush2.msra.mxu0 0.0
    %2443 = vmatprep.subr.mxu0 0.0
    %2444 = vmatpush2.msra.mxu0 0.0
    %2445 = vmatprep.subr.mxu0 0.0
    %2446 = vmatpush2.msra.mxu0 0.0
    %2447 = vmatprep.subr.mxu0 0.0
    %2448 = vmatpush2.msra.mxu0 0.0
    %2449 = vmatprep.subr.mxu0 0.0
    %2450 = vmatpush2.msra.mxu0 0.0
    %2451 = vmatprep.subr.mxu0 0.0
    %2452 = vmatpush2.msra.mxu0 0.0
    %2453 = vmatprep.subr.mxu0 0.0
    %2454 = vmatpush2.msra.mxu0 0.0
    %2455 = vmatprep.subr.mxu0 0.0
    %2456 = vmatpush2.msra.mxu0 0.0
    %2457 = vmatprep.subr.mxu0 0.0
    %2458 = vmatpush2.msra.mxu0 0.0
    %2459 = vmatprep.subr.mxu0 0.0
    %2460 = vmatpush2.msra.mxu0 0.0
    %2461 = vmatprep.subr.mxu0 0.0
    %2462 = vmatpush2.msra.mxu0 0.0
    %2463 = vmatprep.subr.mxu0 0.0
    %2464 = vmatpush2.msra.mxu0 0.0
    %2465 = vmatprep.mubr.f32.mxu0 0.0
    %2466 = vmatmul.mubr.f32.gmra.mxu0 %v2399
    %v2467 = vpop.f32.mrf.mxu0
    %v2468 = vadd.f32 0.0, %v2467
    %v2469 = vpop.f32.mrf.mxu0
    %2470 = vdwg.mxu0
    %v2471 = vadd.f32 %v1855, %v2468
    %s2472 = scalar_lea.vmem %s3, 480
    %v2473 = vld [vmem:[%s2472] sm:$0xff]
    %v2474 = vld [vmem:[%s2472 + $0x8] sm:$0xff]
    %v2475 = vrot.slane %v176, 4
    %v2476 = vsel %vm204, %v2475, 0
    %2478 = vmatprep.subr.mxu0 0.0
    %2479 = vmatpush1.msra.mxu0 0.0
    %2480 = vmatprep.subr.mxu0 0.0
    %2481 = vmatpush1.msra.mxu0 0.0
    %2482 = vmatprep.subr.mxu0 0.0
    %2483 = vmatpush1.msra.mxu0 0.0
    %2484 = vmatprep.subr.mxu0 0.0
    %2485 = vmatpush1.msra.mxu0 0.0
    %2486 = vmatprep.subr.mxu0 0.0
    %2487 = vmatpush1.msra.mxu0 0.0
    %2488 = vmatprep.subr.mxu0 0.0
    %2489 = vmatpush1.msra.mxu0 0.0
    %2490 = vmatprep.subr.mxu0 0.0
    %2491 = vmatpush1.msra.mxu0 0.0
    %2492 = vmatprep.subr.mxu0 0.0
    %2493 = vmatpush1.msra.mxu0 0.0
    %2494 = vmatprep.subr.mxu0 0.0
    %2495 = vmatpush1.msra.mxu0 0.0
    %2496 = vmatprep.subr.mxu0 0.0
    %2497 = vmatpush1.msra.mxu0 0.0
    %2498 = vmatprep.subr.mxu0 0.0
    %2499 = vmatpush1.msra.mxu0 0.0
    %2500 = vmatprep.subr.mxu0 0.0
    %2501 = vmatpush1.msra.mxu0 0.0
    %2502 = vmatprep.subr.mxu0 0.0
    %2503 = vmatpush1.msra.mxu0 0.0
    %2504 = vmatprep.subr.mxu0 0.0
    %2505 = vmatpush1.msra.mxu0 0.0
    %2506 = vmatprep.subr.mxu0 0.0
    %2507 = vmatpush1.msra.mxu0 %v2474
    %2508 = vmatprep.subr.mxu0 0.0
    %2509 = vmatpush1.msra.mxu0 %v2473
    %2510 = vmatprep.subr.mxu0 0.0
    %2511 = vmatpush2.msra.mxu0 0.0
    %2512 = vmatprep.subr.mxu0 0.0
    %2513 = vmatpush2.msra.mxu0 0.0
    %2514 = vmatprep.subr.mxu0 0.0
    %2515 = vmatpush2.msra.mxu0 0.0
    %2516 = vmatprep.subr.mxu0 0.0
    %2517 = vmatpush2.msra.mxu0 0.0
    %2518 = vmatprep.subr.mxu0 0.0
    %2519 = vmatpush2.msra.mxu0 0.0
    %2520 = vmatprep.subr.mxu0 0.0
    %2521 = vmatpush2.msra.mxu0 0.0
    %2522 = vmatprep.subr.mxu0 0.0
    %2523 = vmatpush2.msra.mxu0 0.0
    %2524 = vmatprep.subr.mxu0 0.0
    %2525 = vmatpush2.msra.mxu0 0.0
    %2526 = vmatprep.subr.mxu0 0.0
    %2527 = vmatpush2.msra.mxu0 0.0
    %2528 = vmatprep.subr.mxu0 0.0
    %2529 = vmatpush2.msra.mxu0 0.0
    %2530 = vmatprep.subr.mxu0 0.0
    %2531 = vmatpush2.msra.mxu0 0.0
    %2532 = vmatprep.subr.mxu0 0.0
    %2533 = vmatpush2.msra.mxu0 0.0
    %2534 = vmatprep.subr.mxu0 0.0
    %2535 = vmatpush2.msra.mxu0 0.0
    %2536 = vmatprep.subr.mxu0 0.0
    %2537 = vmatpush2.msra.mxu0 0.0
    %2538 = vmatprep.subr.mxu0 0.0
    %2539 = vmatpush2.msra.mxu0 0.0
    %2540 = vmatprep.subr.mxu0 0.0
    %2541 = vmatpush2.msra.mxu0 0.0
    %2542 = vmatprep.mubr.f32.mxu0 0.0
    %2543 = vmatmul.mubr.f32.gmra.mxu0 %v2476
    %v2544 = vpop.f32.mrf.mxu0
    %v2545 = vadd.f32 0.0, %v2544
    %v2546 = vpop.f32.mrf.mxu0
    %2547 = vdwg.mxu0
    %v2548 = vadd.f32 %v1932, %v2545
    %s2549 = scalar_lea.vmem %s3, 496
    %v2550 = vld [vmem:[%s2549] sm:$0xff]
    %v2551 = vld [vmem:[%s2549 + $0x8] sm:$0xff]
    %v2552 = vrot.slane %v176, 6
    %v2553 = vsel %vm204, %v2552, 0
    %2555 = vmatprep.subr.mxu0 0.0
    %2556 = vmatpush1.msra.mxu0 0.0
    %2557 = vmatprep.subr.mxu0 0.0
    %2558 = vmatpush1.msra.mxu0 0.0
    %2559 = vmatprep.subr.mxu0 0.0
    %2560 = vmatpush1.msra.mxu0 0.0
    %2561 = vmatprep.subr.mxu0 0.0
    %2562 = vmatpush1.msra.mxu0 0.0
    %2563 = vmatprep.subr.mxu0 0.0
    %2564 = vmatpush1.msra.mxu0 0.0
    %2565 = vmatprep.subr.mxu0 0.0
    %2566 = vmatpush1.msra.mxu0 0.0
    %2567 = vmatprep.subr.mxu0 0.0
    %2568 = vmatpush1.msra.mxu0 0.0
    %2569 = vmatprep.subr.mxu0 0.0
    %2570 = vmatpush1.msra.mxu0 0.0
    %2571 = vmatprep.subr.mxu0 0.0
    %2572 = vmatpush1.msra.mxu0 0.0
    %2573 = vmatprep.subr.mxu0 0.0
    %2574 = vmatpush1.msra.mxu0 0.0
    %2575 = vmatprep.subr.mxu0 0.0
    %2576 = vmatpush1.msra.mxu0 0.0
    %2577 = vmatprep.subr.mxu0 0.0
    %2578 = vmatpush1.msra.mxu0 0.0
    %2579 = vmatprep.subr.mxu0 0.0
    %2580 = vmatpush1.msra.mxu0 0.0
    %2581 = vmatprep.subr.mxu0 0.0
    %2582 = vmatpush1.msra.mxu0 0.0
    %2583 = vmatprep.subr.mxu0 0.0
    %2584 = vmatpush1.msra.mxu0 %v2551
    %2585 = vmatprep.subr.mxu0 0.0
    %2586 = vmatpush1.msra.mxu0 %v2550
    %2587 = vmatprep.subr.mxu0 0.0
    %2588 = vmatpush2.msra.mxu0 0.0
    %2589 = vmatprep.subr.mxu0 0.0
    %2590 = vmatpush2.msra.mxu0 0.0
    %2591 = vmatprep.subr.mxu0 0.0
    %2592 = vmatpush2.msra.mxu0 0.0
    %2593 = vmatprep.subr.mxu0 0.0
    %2594 = vmatpush2.msra.mxu0 0.0
    %2595 = vmatprep.subr.mxu0 0.0
    %2596 = vmatpush2.msra.mxu0 0.0
    %2597 = vmatprep.subr.mxu0 0.0
    %2598 = vmatpush2.msra.mxu0 0.0
    %2599 = vmatprep.subr.mxu0 0.0
    %2600 = vmatpush2.msra.mxu0 0.0
    %2601 = vmatprep.subr.mxu0 0.0
    %2602 = vmatpush2.msra.mxu0 0.0
    %2603 = vmatprep.subr.mxu0 0.0
    %2604 = vmatpush2.msra.mxu0 0.0
    %2605 = vmatprep.subr.mxu0 0.0
    %2606 = vmatpush2.msra.mxu0 0.0
    %2607 = vmatprep.subr.mxu0 0.0
    %2608 = vmatpush2.msra.mxu0 0.0
    %2609 = vmatprep.subr.mxu0 0.0
    %2610 = vmatpush2.msra.mxu0 0.0
    %2611 = vmatprep.subr.mxu0 0.0
    %2612 = vmatpush2.msra.mxu0 0.0
    %2613 = vmatprep.subr.mxu0 0.0
    %2614 = vmatpush2.msra.mxu0 0.0
    %2615 = vmatprep.subr.mxu0 0.0
    %2616 = vmatpush2.msra.mxu0 0.0
    %2617 = vmatprep.subr.mxu0 0.0
    %2618 = vmatpush2.msra.mxu0 0.0
    %2619 = vmatprep.mubr.f32.mxu0 0.0
    %2620 = vmatmul.mubr.f32.gmra.mxu0 %v2553
    %v2621 = vpop.f32.mrf.mxu0
    %v2622 = vadd.f32 0.0, %v2621
    %v2623 = vpop.f32.mrf.mxu0
    %2624 = vdwg.mxu0
    %v2625 = vadd.f32 %v2009, %v2622
    %s2626 = scalar_lea.vmem %s3, 512
    %v2627 = vld [vmem:[%s2626] sm:$0xff]
    %v2628 = vld [vmem:[%s2626 + $0x8] sm:$0xff]
    %v2630 = vsel %vm204, %v177, 0
    %2632 = vmatprep.subr.mxu0 0.0
    %2633 = vmatpush1.msra.mxu0 0.0
    %2634 = vmatprep.subr.mxu0 0.0
    %2635 = vmatpush1.msra.mxu0 0.0
    %2636 = vmatprep.subr.mxu0 0.0
    %2637 = vmatpush1.msra.mxu0 0.0
    %2638 = vmatprep.subr.mxu0 0.0
    %2639 = vmatpush1.msra.mxu0 0.0
    %2640 = vmatprep.subr.mxu0 0.0
    %2641 = vmatpush1.msra.mxu0 0.0
    %2642 = vmatprep.subr.mxu0 0.0
    %2643 = vmatpush1.msra.mxu0 0.0
    %2644 = vmatprep.subr.mxu0 0.0
    %2645 = vmatpush1.msra.mxu0 0.0
    %2646 = vmatprep.subr.mxu0 0.0
    %2647 = vmatpush1.msra.mxu0 0.0
    %2648 = vmatprep.subr.mxu0 0.0
    %2649 = vmatpush1.msra.mxu0 0.0
    %2650 = vmatprep.subr.mxu0 0.0
    %2651 = vmatpush1.msra.mxu0 0.0
    %2652 = vmatprep.subr.mxu0 0.0
    %2653 = vmatpush1.msra.mxu0 0.0
    %2654 = vmatprep.subr.mxu0 0.0
    %2655 = vmatpush1.msra.mxu0 0.0
    %2656 = vmatprep.subr.mxu0 0.0
    %2657 = vmatpush1.msra.mxu0 0.0
    %2658 = vmatprep.subr.mxu0 0.0
    %2659 = vmatpush1.msra.mxu0 0.0
    %2660 = vmatprep.subr.mxu0 0.0
    %2661 = vmatpush1.msra.mxu0 %v2628
    %2662 = vmatprep.subr.mxu0 0.0
    %2663 = vmatpush1.msra.mxu0 %v2627
    %2664 = vmatprep.subr.mxu0 0.0
    %2665 = vmatpush2.msra.mxu0 0.0
    %2666 = vmatprep.subr.mxu0 0.0
    %2667 = vmatpush2.msra.mxu0 0.0
    %2668 = vmatprep.subr.mxu0 0.0
    %2669 = vmatpush2.msra.mxu0 0.0
    %2670 = vmatprep.subr.mxu0 0.0
    %2671 = vmatpush2.msra.mxu0 0.0
    %2672 = vmatprep.subr.mxu0 0.0
    %2673 = vmatpush2.msra.mxu0 0.0
    %2674 = vmatprep.subr.mxu0 0.0
    %2675 = vmatpush2.msra.mxu0 0.0
    %2676 = vmatprep.subr.mxu0 0.0
    %2677 = vmatpush2.msra.mxu0 0.0
    %2678 = vmatprep.subr.mxu0 0.0
    %2679 = vmatpush2.msra.mxu0 0.0
    %2680 = vmatprep.subr.mxu0 0.0
    %2681 = vmatpush2.msra.mxu0 0.0
    %2682 = vmatprep.subr.mxu0 0.0
    %2683 = vmatpush2.msra.mxu0 0.0
    %2684 = vmatprep.subr.mxu0 0.0
    %2685 = vmatpush2.msra.mxu0 0.0
    %2686 = vmatprep.subr.mxu0 0.0
    %2687 = vmatpush2.msra.mxu0 0.0
    %2688 = vmatprep.subr.mxu0 0.0
    %2689 = vmatpush2.msra.mxu0 0.0
    %2690 = vmatprep.subr.mxu0 0.0
    %2691 = vmatpush2.msra.mxu0 0.0
    %2692 = vmatprep.subr.mxu0 0.0
    %2693 = vmatpush2.msra.mxu0 0.0
    %2694 = vmatprep.subr.mxu0 0.0
    %2695 = vmatpush2.msra.mxu0 0.0
    %2696 = vmatprep.mubr.f32.mxu0 0.0
    %2697 = vmatmul.mubr.f32.gmra.mxu0 %v2630
    %v2698 = vpop.f32.mrf.mxu0
    %v2699 = vadd.f32 0.0, %v2698
    %v2700 = vpop.f32.mrf.mxu0
    %2701 = vdwg.mxu0
    %v2702 = vadd.f32 %v2086, %v2699
    %s2703 = scalar_lea.vmem %s3, 528
    %v2704 = vld [vmem:[%s2703] sm:$0xff]
    %v2705 = vld [vmem:[%s2703 + $0x8] sm:$0xff]
    %v2706 = vrot.slane %v177, 2
    %v2707 = vsel %vm204, %v2706, 0
    %2709 = vmatprep.subr.mxu0 0.0
    %2710 = vmatpush1.msra.mxu0 0.0
    %2711 = vmatprep.subr.mxu0 0.0
    %2712 = vmatpush1.msra.mxu0 0.0
    %2713 = vmatprep.subr.mxu0 0.0
    %2714 = vmatpush1.msra.mxu0 0.0
    %2715 = vmatprep.subr.mxu0 0.0
    %2716 = vmatpush1.msra.mxu0 0.0
    %2717 = vmatprep.subr.mxu0 0.0
    %2718 = vmatpush1.msra.mxu0 0.0
    %2719 = vmatprep.subr.mxu0 0.0
    %2720 = vmatpush1.msra.mxu0 0.0
    %2721 = vmatprep.subr.mxu0 0.0
    %2722 = vmatpush1.msra.mxu0 0.0
    %2723 = vmatprep.subr.mxu0 0.0
    %2724 = vmatpush1.msra.mxu0 0.0
    %2725 = vmatprep.subr.mxu0 0.0
    %2726 = vmatpush1.msra.mxu0 0.0
    %2727 = vmatprep.subr.mxu0 0.0
    %2728 = vmatpush1.msra.mxu0 0.0
    %2729 = vmatprep.subr.mxu0 0.0
    %2730 = vmatpush1.msra.mxu0 0.0
    %2731 = vmatprep.subr.mxu0 0.0
    %2732 = vmatpush1.msra.mxu0 0.0
    %2733 = vmatprep.subr.mxu0 0.0
    %2734 = vmatpush1.msra.mxu0 0.0
    %2735 = vmatprep.subr.mxu0 0.0
    %2736 = vmatpush1.msra.mxu0 0.0
    %2737 = vmatprep.subr.mxu0 0.0
    %2738 = vmatpush1.msra.mxu0 %v2705
    %2739 = vmatprep.subr.mxu0 0.0
    %2740 = vmatpush1.msra.mxu0 %v2704
    %2741 = vmatprep.subr.mxu0 0.0
    %2742 = vmatpush2.msra.mxu0 0.0
    %2743 = vmatprep.subr.mxu0 0.0
    %2744 = vmatpush2.msra.mxu0 0.0
    %2745 = vmatprep.subr.mxu0 0.0
    %2746 = vmatpush2.msra.mxu0 0.0
    %2747 = vmatprep.subr.mxu0 0.0
    %2748 = vmatpush2.msra.mxu0 0.0
    %2749 = vmatprep.subr.mxu0 0.0
    %2750 = vmatpush2.msra.mxu0 0.0
    %2751 = vmatprep.subr.mxu0 0.0
    %2752 = vmatpush2.msra.mxu0 0.0
    %2753 = vmatprep.subr.mxu0 0.0
    %2754 = vmatpush2.msra.mxu0 0.0
    %2755 = vmatprep.subr.mxu0 0.0
    %2756 = vmatpush2.msra.mxu0 0.0
    %2757 = vmatprep.subr.mxu0 0.0
    %2758 = vmatpush2.msra.mxu0 0.0
    %2759 = vmatprep.subr.mxu0 0.0
    %2760 = vmatpush2.msra.mxu0 0.0
    %2761 = vmatprep.subr.mxu0 0.0
    %2762 = vmatpush2.msra.mxu0 0.0
    %2763 = vmatprep.subr.mxu0 0.0
    %2764 = vmatpush2.msra.mxu0 0.0
    %2765 = vmatprep.subr.mxu0 0.0
    %2766 = vmatpush2.msra.mxu0 0.0
    %2767 = vmatprep.subr.mxu0 0.0
    %2768 = vmatpush2.msra.mxu0 0.0
    %2769 = vmatprep.subr.mxu0 0.0
    %2770 = vmatpush2.msra.mxu0 0.0
    %2771 = vmatprep.subr.mxu0 0.0
    %2772 = vmatpush2.msra.mxu0 0.0
    %2773 = vmatprep.mubr.f32.mxu0 0.0
    %2774 = vmatmul.mubr.f32.gmra.mxu0 %v2707
    %v2775 = vpop.f32.mrf.mxu0
    %v2776 = vadd.f32 0.0, %v2775
    %v2777 = vpop.f32.mrf.mxu0
    %2778 = vdwg.mxu0
    %v2779 = vadd.f32 %v2163, %v2776
    %s2780 = scalar_lea.vmem %s3, 544
    %v2781 = vld [vmem:[%s2780] sm:$0xff]
    %v2782 = vld [vmem:[%s2780 + $0x8] sm:$0xff]
    %v2783 = vrot.slane %v177, 4
    %v2784 = vsel %vm204, %v2783, 0
    %2786 = vmatprep.subr.mxu0 0.0
    %2787 = vmatpush1.msra.mxu0 0.0
    %2788 = vmatprep.subr.mxu0 0.0
    %2789 = vmatpush1.msra.mxu0 0.0
    %2790 = vmatprep.subr.mxu0 0.0
    %2791 = vmatpush1.msra.mxu0 0.0
    %2792 = vmatprep.subr.mxu0 0.0
    %2793 = vmatpush1.msra.mxu0 0.0
    %2794 = vmatprep.subr.mxu0 0.0
    %2795 = vmatpush1.msra.mxu0 0.0
    %2796 = vmatprep.subr.mxu0 0.0
    %2797 = vmatpush1.msra.mxu0 0.0
    %2798 = vmatprep.subr.mxu0 0.0
    %2799 = vmatpush1.msra.mxu0 0.0
    %2800 = vmatprep.subr.mxu0 0.0
    %2801 = vmatpush1.msra.mxu0 0.0
    %2802 = vmatprep.subr.mxu0 0.0
    %2803 = vmatpush1.msra.mxu0 0.0
    %2804 = vmatprep.subr.mxu0 0.0
    %2805 = vmatpush1.msra.mxu0 0.0
    %2806 = vmatprep.subr.mxu0 0.0
    %2807 = vmatpush1.msra.mxu0 0.0
    %2808 = vmatprep.subr.mxu0 0.0
    %2809 = vmatpush1.msra.mxu0 0.0
    %2810 = vmatprep.subr.mxu0 0.0
    %2811 = vmatpush1.msra.mxu0 0.0
    %2812 = vmatprep.subr.mxu0 0.0
    %2813 = vmatpush1.msra.mxu0 0.0
    %2814 = vmatprep.subr.mxu0 0.0
    %2815 = vmatpush1.msra.mxu0 %v2782
    %2816 = vmatprep.subr.mxu0 0.0
    %2817 = vmatpush1.msra.mxu0 %v2781
    %2818 = vmatprep.subr.mxu0 0.0
    %2819 = vmatpush2.msra.mxu0 0.0
    %2820 = vmatprep.subr.mxu0 0.0
    %2821 = vmatpush2.msra.mxu0 0.0
    %2822 = vmatprep.subr.mxu0 0.0
    %2823 = vmatpush2.msra.mxu0 0.0
    %2824 = vmatprep.subr.mxu0 0.0
    %2825 = vmatpush2.msra.mxu0 0.0
    %2826 = vmatprep.subr.mxu0 0.0
    %2827 = vmatpush2.msra.mxu0 0.0
    %2828 = vmatprep.subr.mxu0 0.0
    %2829 = vmatpush2.msra.mxu0 0.0
    %2830 = vmatprep.subr.mxu0 0.0
    %2831 = vmatpush2.msra.mxu0 0.0
    %2832 = vmatprep.subr.mxu0 0.0
    %2833 = vmatpush2.msra.mxu0 0.0
    %2834 = vmatprep.subr.mxu0 0.0
    %2835 = vmatpush2.msra.mxu0 0.0
    %2836 = vmatprep.subr.mxu0 0.0
    %2837 = vmatpush2.msra.mxu0 0.0
    %2838 = vmatprep.subr.mxu0 0.0
    %2839 = vmatpush2.msra.mxu0 0.0
    %2840 = vmatprep.subr.mxu0 0.0
    %2841 = vmatpush2.msra.mxu0 0.0
    %2842 = vmatprep.subr.mxu0 0.0
    %2843 = vmatpush2.msra.mxu0 0.0
    %2844 = vmatprep.subr.mxu0 0.0
    %2845 = vmatpush2.msra.mxu0 0.0
    %2846 = vmatprep.subr.mxu0 0.0
    %2847 = vmatpush2.msra.mxu0 0.0
    %2848 = vmatprep.subr.mxu0 0.0
    %2849 = vmatpush2.msra.mxu0 0.0
    %2850 = vmatprep.mubr.f32.mxu0 0.0
    %2851 = vmatmul.mubr.f32.gmra.mxu0 %v2784
    %v2852 = vpop.f32.mrf.mxu0
    %v2853 = vadd.f32 0.0, %v2852
    %v2854 = vpop.f32.mrf.mxu0
    %2855 = vdwg.mxu0
    %v2856 = vadd.f32 %v2240, %v2853
    %s2857 = scalar_lea.vmem %s3, 560
    %v2858 = vld [vmem:[%s2857] sm:$0xff]
    %v2859 = vld [vmem:[%s2857 + $0x8] sm:$0xff]
    %v2860 = vrot.slane %v177, 6
    %v2861 = vsel %vm204, %v2860, 0
    %2863 = vmatprep.subr.mxu0 0.0
    %2864 = vmatpush1.msra.mxu0 0.0
    %2865 = vmatprep.subr.mxu0 0.0
    %2866 = vmatpush1.msra.mxu0 0.0
    %2867 = vmatprep.subr.mxu0 0.0
    %2868 = vmatpush1.msra.mxu0 0.0
    %2869 = vmatprep.subr.mxu0 0.0
    %2870 = vmatpush1.msra.mxu0 0.0
    %2871 = vmatprep.subr.mxu0 0.0
    %2872 = vmatpush1.msra.mxu0 0.0
    %2873 = vmatprep.subr.mxu0 0.0
    %2874 = vmatpush1.msra.mxu0 0.0
    %2875 = vmatprep.subr.mxu0 0.0
    %2876 = vmatpush1.msra.mxu0 0.0
    %2877 = vmatprep.subr.mxu0 0.0
    %2878 = vmatpush1.msra.mxu0 0.0
    %2879 = vmatprep.subr.mxu0 0.0
    %2880 = vmatpush1.msra.mxu0 0.0
    %2881 = vmatprep.subr.mxu0 0.0
    %2882 = vmatpush1.msra.mxu0 0.0
    %2883 = vmatprep.subr.mxu0 0.0
    %2884 = vmatpush1.msra.mxu0 0.0
    %2885 = vmatprep.subr.mxu0 0.0
    %2886 = vmatpush1.msra.mxu0 0.0
    %2887 = vmatprep.subr.mxu0 0.0
    %2888 = vmatpush1.msra.mxu0 0.0
    %2889 = vmatprep.subr.mxu0 0.0
    %2890 = vmatpush1.msra.mxu0 0.0
    %2891 = vmatprep.subr.mxu0 0.0
    %2892 = vmatpush1.msra.mxu0 %v2859
    %2893 = vmatprep.subr.mxu0 0.0
    %2894 = vmatpush1.msra.mxu0 %v2858
    %2895 = vmatprep.subr.mxu0 0.0
    %2896 = vmatpush2.msra.mxu0 0.0
    %2897 = vmatprep.subr.mxu0 0.0
    %2898 = vmatpush2.msra.mxu0 0.0
    %2899 = vmatprep.subr.mxu0 0.0
    %2900 = vmatpush2.msra.mxu0 0.0
    %2901 = vmatprep.subr.mxu0 0.0
    %2902 = vmatpush2.msra.mxu0 0.0
    %2903 = vmatprep.subr.mxu0 0.0
    %2904 = vmatpush2.msra.mxu0 0.0
    %2905 = vmatprep.subr.mxu0 0.0
    %2906 = vmatpush2.msra.mxu0 0.0
    %2907 = vmatprep.subr.mxu0 0.0
    %2908 = vmatpush2.msra.mxu0 0.0
    %2909 = vmatprep.subr.mxu0 0.0
    %2910 = vmatpush2.msra.mxu0 0.0
    %2911 = vmatprep.subr.mxu0 0.0
    %2912 = vmatpush2.msra.mxu0 0.0
    %2913 = vmatprep.subr.mxu0 0.0
    %2914 = vmatpush2.msra.mxu0 0.0
    %2915 = vmatprep.subr.mxu0 0.0
    %2916 = vmatpush2.msra.mxu0 0.0
    %2917 = vmatprep.subr.mxu0 0.0
    %2918 = vmatpush2.msra.mxu0 0.0
    %2919 = vmatprep.subr.mxu0 0.0
    %2920 = vmatpush2.msra.mxu0 0.0
    %2921 = vmatprep.subr.mxu0 0.0
    %2922 = vmatpush2.msra.mxu0 0.0
    %2923 = vmatprep.subr.mxu0 0.0
    %2924 = vmatpush2.msra.mxu0 0.0
    %2925 = vmatprep.subr.mxu0 0.0
    %2926 = vmatpush2.msra.mxu0 0.0
    %2927 = vmatprep.mubr.f32.mxu0 0.0
    %2928 = vmatmul.mubr.f32.gmra.mxu0 %v2861
    %v2929 = vpop.f32.mrf.mxu0
    %v2930 = vadd.f32 0.0, %v2929
    %v2931 = vpop.f32.mrf.mxu0
    %2932 = vdwg.mxu0
    %v2933 = vadd.f32 %v2317, %v2930
    %v2934 = vadd.f32 %v2702, %v2779
    %v2935 = vadd.f32 %v2856, %v2933
    %v2936 = vadd.f32 %v2394, %v2471
    %v2937 = vadd.f32 %v2548, %v2625
    %v2938 = vadd.f32 %v2934, %v2935
    %v2939 = vadd.f32 %v2936, %v2937
    %v2940 = vadd.f32 %v2938, %v2939
    %v2941 = vld [vmem:[%s4] sm:$0x1]
    %v2943 = vlaneseq
    %v2944 = vshrl.u32 %v2943, 7
    %v2945 = vsub.s32 0, %v2944
    %v2946 = vrot.slane %v2941, %v2945
    %v2948 = vadd.f32 %v2940, %v2946
    %v2949 = vmax.f32 %v2948, 0.0
    %v2950 = vld [vmem:[%s5] sm:$0xff]
    %v2951 = vld [vmem:[%s5 + $0x8] sm:$0xff]
    %v2952 = vld [vmem:[%s5 + $0x10] sm:$0xff]
    %v2953 = vld [vmem:[%s5 + $0x18] sm:$0xff]
    %v2954 = vld [vmem:[%s5 + $0x20] sm:$0xff]
    %v2955 = vld [vmem:[%s5 + $0x28] sm:$0xff]
    %v2956 = vld [vmem:[%s5 + $0x30] sm:$0xff]
    %v2957 = vld [vmem:[%s5 + $0x38] sm:$0xff]
    %v2958 = vld [vmem:[%s5 + $0x40] sm:$0xff]
    %v2959 = vld [vmem:[%s5 + $0x48] sm:$0xff]
    %v2960 = vld [vmem:[%s5 + $0x50] sm:$0xff]
    %v2961 = vld [vmem:[%s5 + $0x58] sm:$0xff]
    %v2962 = vld [vmem:[%s5 + $0x60] sm:$0xff]
    %v2963 = vld [vmem:[%s5 + $0x68] sm:$0xff]
    %v2964 = vld [vmem:[%s5 + $0x70] sm:$0xff]
    %v2965 = vld [vmem:[%s5 + $0x78] sm:$0xff]
    %v2966 = vld [vmem:[%s6] sm:$0x1]
    %v2968 = vlaneseq
    %v2969 = vshrl.u32 %v2968, 7
    %v2970 = vsub.s32 0, %v2969
    %v2971 = vrot.slane %v2966, %v2970
    %2973 = vmatprep.subr.mxu0 0.0
    %2974 = vmatpush1.msra.mxu0 %v2965
    %2975 = vmatprep.subr.mxu0 0.0
    %2976 = vmatpush1.msra.mxu0 %v2964
    %2977 = vmatprep.subr.mxu0 0.0
    %2978 = vmatpush1.msra.mxu0 %v2963
    %2979 = vmatprep.subr.mxu0 0.0
    %2980 = vmatpush1.msra.mxu0 %v2962
    %2981 = vmatprep.subr.mxu0 0.0
    %2982 = vmatpush1.msra.mxu0 %v2961
    %2983 = vmatprep.subr.mxu0 0.0
    %2984 = vmatpush1.msra.mxu0 %v2960
    %2985 = vmatprep.subr.mxu0 0.0
    %2986 = vmatpush1.msra.mxu0 %v2959
    %2987 = vmatprep.subr.mxu0 0.0
    %2988 = vmatpush1.msra.mxu0 %v2958
    %2989 = vmatprep.subr.mxu0 0.0
    %2990 = vmatpush1.msra.mxu0 %v2957
    %2991 = vmatprep.subr.mxu0 0.0
    %2992 = vmatpush1.msra.mxu0 %v2956
    %2993 = vmatprep.subr.mxu0 0.0
    %2994 = vmatpush1.msra.mxu0 %v2955
    %2995 = vmatprep.subr.mxu0 0.0
    %2996 = vmatpush1.msra.mxu0 %v2954
    %2997 = vmatprep.subr.mxu0 0.0
    %2998 = vmatpush1.msra.mxu0 %v2953
    %2999 = vmatprep.subr.mxu0 0.0
    %3000 = vmatpush1.msra.mxu0 %v2952
    %3001 = vmatprep.subr.mxu0 0.0
    %3002 = vmatpush1.msra.mxu0 %v2951
    %3003 = vmatprep.subr.mxu0 0.0
    %3004 = vmatpush1.msra.mxu0 %v2950
    %3005 = vmatprep.subr.mxu0 0.0
    %3006 = vmatpush2.msra.mxu0 0.0
    %3007 = vmatprep.subr.mxu0 0.0
    %3008 = vmatpush2.msra.mxu0 0.0
    %3009 = vmatprep.subr.mxu0 0.0
    %3010 = vmatpush2.msra.mxu0 0.0
    %3011 = vmatprep.subr.mxu0 0.0
    %3012 = vmatpush2.msra.mxu0 0.0
    %3013 = vmatprep.subr.mxu0 0.0
    %3014 = vmatpush2.msra.mxu0 0.0
    %3015 = vmatprep.subr.mxu0 0.0
    %3016 = vmatpush2.msra.mxu0 0.0
    %3017 = vmatprep.subr.mxu0 0.0
    %3018 = vmatpush2.msra.mxu0 0.0
    %3019 = vmatprep.subr.mxu0 0.0
    %3020 = vmatpush2.msra.mxu0 0.0
    %3021 = vmatprep.subr.mxu0 0.0
    %3022 = vmatpush2.msra.mxu0 0.0
    %3023 = vmatprep.subr.mxu0 0.0
    %3024 = vmatpush2.msra.mxu0 0.0
    %3025 = vmatprep.subr.mxu0 0.0
    %3026 = vmatpush2.msra.mxu0 0.0
    %3027 = vmatprep.subr.mxu0 0.0
    %3028 = vmatpush2.msra.mxu0 0.0
    %3029 = vmatprep.subr.mxu0 0.0
    %3030 = vmatpush2.msra.mxu0 0.0
    %3031 = vmatprep.subr.mxu0 0.0
    %3032 = vmatpush2.msra.mxu0 0.0
    %3033 = vmatprep.subr.mxu0 0.0
    %3034 = vmatpush2.msra.mxu0 0.0
    %3035 = vmatprep.subr.mxu0 0.0
    %3036 = vmatpush2.msra.mxu0 0.0
    %3037 = vmatprep.mubr.f32.mxu0 0.0
    %3038 = vmatmul.mubr.f32.gmra.mxu0 %v2949
    %v3039 = vpop.f32.mrf.mxu0
    %v3040 = vadd.f32 %v2971, %v3039
    %v3041 = vpop.f32.mrf.mxu0
    %3042 = vdwg.mxu0
    %vm3043 = vcmask 17408
    %3044 = vst.msk [vmem:[#allocation2] sm:$0x3] %vm3043, %v3040
    // Predicated region
    $region30: #{nn_model_forward.1} parent=1 // pred_check
      _
    $region31: #{nn_model_forward.1} parent=1 // pred_check_branch
      %3046 = sbr.rel (0) target = $region33
    $region32: #{nn_model_forward.1} parent=1 // pred_region
      %s3048 = ssub.s32 32, 32
      %3049 = vsyncadd [#allocation3], %s3048
      %s3051 = sshll.u32 [#allocation2], 4
      %s3052 = int_to_ptr.vmem [resolvable:$true] %s3051
      %3054 = dma.vmem_to_hbm [thread:$0]  %s3052, 32, %s7, [#allocation3]
    $region33: #{nn_model_forward.1} parent=1 // pred_fallthru
      _
    // Predicated region
    $region34: #{nn_model_forward.1} parent=1 // pred_check
      _
    $region35: #{nn_model_forward.1} parent=1 // pred_check_branch
      %3056 = sbr.rel (0) target = $region37
    $region36: #{nn_model_forward.1} parent=1 // pred_region
      %3057 = dma.done [#allocation3], 32
    $region37: #{nn_model_forward.1} parent=1 // pred_fallthru
      _
    %3058 = vsyncpa [#allocation3], 1

</llo_original>
